<compile_context>
chip_gen: v5e
topology: v5e:2x2
jax: 0.10.0
libtpu: 0.0.40
codegen_flags: <defaults>
</compile_context>

<pallas_src>
import functools

import jax
import jax.numpy as jnp
from jax import lax
from jax.experimental import pallas as pl
from jax.experimental.pallas import tpu as pltpu

BN_EPS = 1e-5


def _conv_rows(x_ref, w_ref, sel_ref, t):
    """2x2/stride-2 conv for output row `t` of the current tile -> (Cout, Wo) f32.

    x_ref:   (C, 2*tile_h, W) NCHW slab of one sample
    w_ref:   (4, Cout, C)     conv weight, tap index = 2*kh + kw
    sel_ref: (2, W, Wo)       0/1 column-selection matrices (kw taps)
    """
    acc = None
    for kh in range(2):
        xr = x_ref[:, 2 * t + kh, :]                                    # (C, W)
        for kw in range(2):
            # lane deinterleave on the MXU: xr @ S_kw == xr[:, kw::2]   -> (C, Wo)
            xt = jnp.dot(xr, sel_ref[kw], preferred_element_type=jnp.float32)
            # channel contraction                                       -> (Cout, Wo)
            yk = jnp.dot(w_ref[2 * kh + kw], xt,
                         preferred_element_type=jnp.float32)
            acc = yk if acc is None else acc + yk
    return acc


def _stats_kernel(x_ref, w_ref, sel_ref, g_ref, b_ref, scale_ref, shift_ref,
                  s_ref, ss_ref, *, tile_h, inv_m):
    first = jnp.logical_and(pl.program_id(0) == 0, pl.program_id(1) == 0)
    last = jnp.logical_and(pl.program_id(0) == pl.num_programs(0) - 1,
                           pl.program_id(1) == pl.num_programs(1) - 1)

    @pl.when(first)
    def _():
        s_ref[...] = jnp.zeros_like(s_ref)
        ss_ref[...] = jnp.zeros_like(ss_ref)

    # Elementwise partial sums (VPU); the lane reduction happens once, at the end.
    for t in range(tile_h):
        y = _conv_rows(x_ref, w_ref, sel_ref, t)                        # (Cout, Wo)
        s_ref[...] += y
        ss_ref[...] += y * y

    @pl.when(last)
    def _():
        mean = jnp.sum(s_ref[...], axis=1, keepdims=True) * inv_m       # (Cout, 1)
        ex2 = jnp.sum(ss_ref[...], axis=1, keepdims=True) * inv_m
        var = jnp.maximum(ex2 - mean * mean, 0.0)
        scale = g_ref[...] * lax.rsqrt(var + BN_EPS)                    # EUP rsqrt
        scale_ref[...] = scale
        shift_ref[...] = b_ref[...] - scale * mean


def _apply_kernel(x_ref, w_ref, sel_ref, shift_ref, o_ref, *, tile_h):
    # `scale` is already folded into w_ref; only per-channel shift + ReLU remain.
    shift = shift_ref[...]                                              # (Cout, 1)
    for t in range(tile_h):
        y = _conv_rows(x_ref, w_ref, sel_ref, t)
        o_ref[:, t, :] = jnp.maximum(y + shift, 0.0).astype(o_ref.dtype)


def _pick_tile_h(ho, c, w, *, target_bytes=4 * 1024 * 1024, max_th=64):
    """Output rows per grid step: multiple of 8 that divides Ho, x-slab <= ~4 MiB."""
    cands = [t for t in range(8, min(ho, max_th) + 1, 8) if ho % t == 0]
    if not cands:
        return ho                    # tiny / awkward Ho: one row-tile per sample
    fits = [t for t in cands if c * 2 * t * w * 4 <= target_bytes]
    return max(fits) if fits else min(cands)


def shrinker_conv(x, conv_w, conv_b, bn_gamma, bn_beta, *, tile_h=None):
    """x: (N, F, H, W) f32 NCHW.  Returns (N, 2F, H//2, W//2) f32 NCHW."""
    del conv_b  # cancels exactly in training-mode BatchNorm

    N, C, H, W = x.shape
    Cout = conv_w.shape[0]
    Ho, Wo = H // 2, W // 2
    He, We = 2 * Ho, 2 * Wo
    if (He, We) != (H, W):           # odd spatial dims: drop the unused last row/col
        x = x[:, :, :He, :We]

    if tile_h is None:
        tile_h = _pick_tile_h(Ho, C, We)
    assert Ho % tile_h == 0, (Ho, tile_h)
    grid = (N, Ho // tile_h)
    m = N * Ho * Wo

    # Conv weight, tap-major: w4[2*kh+kw] is the (Cout, C) matrix of tap (kh, kw).
    w4 = jnp.transpose(conv_w.astype(jnp.float32), (2, 3, 0, 1)).reshape(4, Cout, C)
    # Column-selection matrices: x_row @ sel[kw] picks columns kw::2.
    col = jnp.arange(We, dtype=jnp.int32)[:, None]
    ocol = jnp.arange(Wo, dtype=jnp.int32)[None, :]
    sel = jnp.stack([(col == 2 * ocol + kw).astype(jnp.float32) for kw in (0, 1)], 0)
    g_col = bn_gamma.astype(jnp.float32).reshape(Cout, 1)
    b_col = bn_beta.astype(jnp.float32).reshape(Cout, 1)

    x_spec = pl.BlockSpec((None, C, 2 * tile_h, We), lambda n, h: (n, 0, h, 0))
    w_spec = pl.BlockSpec((4, Cout, C), lambda n, h: (0, 0, 0))
    sel_spec = pl.BlockSpec((2, We, Wo), lambda n, h: (0, 0, 0))
    vec_spec = pl.BlockSpec((Cout, 1), lambda n, h: (0, 0))

    conv_flops = 2 * m * (4 * C * Cout)             # the real conv
    sel_flops = 2 * (N * Ho) * (4 * C * We * Wo)    # MXU column selection (slack flops)
    x_bytes = 4 * N * C * He * We

    cparams_stats = pltpu.CompilerParams(
        dimension_semantics=("arbitrary", "arbitrary"),  # BN accumulator rides the grid
        vmem_limit_bytes=40 * 1024 * 1024)               # v7x-safe headroom
    cparams_apply = pltpu.CompilerParams(
        dimension_semantics=("parallel", "parallel"),    # disjoint outputs -> megacore
        vmem_limit_bytes=40 * 1024 * 1024)

    # ---- pass 1: global BN statistics -> fused (scale, shift) ----
    scale, shift = pl.pallas_call(
        functools.partial(_stats_kernel, tile_h=tile_h, inv_m=1.0 / float(m)),
        out_shape=(jax.ShapeDtypeStruct((Cout, 1), jnp.float32),
                   jax.ShapeDtypeStruct((Cout, 1), jnp.float32)),
        grid=grid,
        in_specs=[x_spec, w_spec, sel_spec, vec_spec, vec_spec],
        out_specs=(vec_spec, vec_spec),
        scratch_shapes=[pltpu.VMEM((Cout, Wo), jnp.float32),
                        pltpu.VMEM((Cout, Wo), jnp.float32)],
        compiler_params=cparams_stats,
        cost_estimate=pl.CostEstimate(
            flops=conv_flops + sel_flops + 4 * m * Cout,
            transcendentals=Cout,
            bytes_accessed=x_bytes + 8 * Cout),
    )(x, w4, sel, g_col, b_col)

    # ---- pass 2: recompute conv with scale folded into the weights, + shift + ReLU ----
    w_scaled = w4 * scale.reshape(1, Cout, 1)
    out = pl.pallas_call(
        functools.partial(_apply_kernel, tile_h=tile_h),
        out_shape=jax.ShapeDtypeStruct((N, Cout, Ho, Wo), jnp.float32),
        grid=grid,
        in_specs=[x_spec, w_spec, sel_spec, vec_spec],
        out_specs=pl.BlockSpec((None, Cout, tile_h, Wo), lambda n, h: (n, 0, h, 0)),
        compiler_params=cparams_apply,
        cost_estimate=pl.CostEstimate(
            flops=conv_flops + sel_flops + 2 * m * Cout,
            transcendentals=0,
            bytes_accessed=x_bytes + 4 * N * Cout * Ho * Wo),
    )(x, w_scaled, sel, shift)
    return out


def _reference(x, conv_w, conv_b, bn_gamma, bn_beta):
    """Pure-JAX reference mirroring PyTorch semantics (training-mode BN)."""
    y = lax.conv_general_dilated(
        x, conv_w, window_strides=(2, 2), padding="VALID",
        dimension_numbers=("NCHW", "OIHW", "NCHW"))
    y = y + conv_b[None, :, None, None]
    mean = jnp.mean(y, axis=(0, 2, 3), keepdims=True)
    var = jnp.mean((y - mean) ** 2, axis=(0, 2, 3), keepdims=True)
    y = bn_gamma[None, :, None, None] * (y - mean) * lax.rsqrt(var + BN_EPS) \
        + bn_beta[None, :, None, None]
    return jnp.maximum(y, 0.0)


if __name__ == "__main__":
    # batch=2, feature=4, spatial=32 -> output (2, 8, 16, 16); tile_h=8 gives a (2, 2)
    # grid, exercising the multi-step BN accumulator and the output-row tiling.
    N, F, H, W = 2, 4, 32, 32
    key = jax.random.PRNGKey(0)
    kx, kw_, kb, kg, kbt = jax.random.split(key, 5)

    x = jax.random.normal(kx, (N, F, H, W), dtype=jnp.float32)
    conv_w = jax.random.normal(kw_, (2 * F, F, 2, 2), dtype=jnp.float32) * 0.2
    conv_b = jax.random.normal(kb, (2 * F,), dtype=jnp.float32) * 0.1
    bn_gamma = 1.0 + 0.1 * jax.random.normal(kg, (2 * F,), dtype=jnp.float32)
    bn_beta = 0.1 * jax.random.normal(kbt, (2 * F,), dtype=jnp.float32)

    out = jax.block_until_ready(
        shrinker_conv(x, conv_w, conv_b, bn_gamma, bn_beta, tile_h=8))
    ref = jax.block_until_ready(_reference(x, conv_w, conv_b, bn_gamma, bn_beta))

    assert out.shape == (N, 2 * F, H // 2, W // 2), out.shape
    max_err = float(jnp.max(jnp.abs(out - ref)))
    assert jnp.allclose(out, ref, rtol=5e-4, atol=5e-4), max_err
    print("KERNEL_OK")
</pallas_src>

<mosaic_0001>
module attributes {stable_mosaic.version = 11 : i64} {
  func.func @_stats_kernel(%arg0: i32, %arg1: i32, %arg2: memref<1x4x16x32xf32, #tpu.memory_space<vmem>>, %arg3: memref<4x8x4xf32, #tpu.memory_space<vmem>>, %arg4: memref<2x32x16xf32, #tpu.memory_space<vmem>>, %arg5: memref<8x1xf32, #tpu.memory_space<vmem>>, %arg6: memref<8x1xf32, #tpu.memory_space<vmem>>, %arg7: memref<8x1xf32, #tpu.memory_space<vmem>>, %arg8: memref<8x1xf32, #tpu.memory_space<vmem>>, %arg9: memref<8x16xf32, #tpu.memory_space<vmem>>, %arg10: memref<8x16xf32, #tpu.memory_space<vmem>>) attributes {dimension_semantics = [#tpu.dimension_semantics<arbitrary>, #tpu.dimension_semantics<arbitrary>], iteration_bounds = array<i64: 2, 2>, scalar_prefetch = 0 : i64, scratch_operands = 2 : i64, tpu.core_type = #tpu.core_type<tc>, window_params = [{transform_indices = @transform_0, window_bounds = array<i64: 1, 4, 16, 32>}, {pipeline_mode = #tpu.pipeline_mode<synchronous>, transform_indices = @transform_1, window_bounds = array<i64: 4, 8, 4>}, {pipeline_mode = #tpu.pipeline_mode<synchronous>, transform_indices = @transform_2, window_bounds = array<i64: 2, 32, 16>}, {pipeline_mode = #tpu.pipeline_mode<synchronous>, transform_indices = @transform_3, window_bounds = array<i64: 8, 1>}, {pipeline_mode = #tpu.pipeline_mode<synchronous>, transform_indices = @transform_4, window_bounds = array<i64: 8, 1>}, {pipeline_mode = #tpu.pipeline_mode<synchronous>, transform_indices = @transform_5, window_bounds = array<i64: 8, 1>}, {pipeline_mode = #tpu.pipeline_mode<synchronous>, transform_indices = @transform_6, window_bounds = array<i64: 8, 1>}]} {
    %c0_i32 = arith.constant 0 : i32
    %0 = arith.cmpi eq, %arg0, %c0_i32 : i32
    %c0_i32_0 = arith.constant 0 : i32
    %1 = arith.cmpi eq, %arg1, %c0_i32_0 : i32
    %2 = arith.andi %0, %1 : i1
    %c1_i32 = arith.constant 1 : i32
    %3 = arith.cmpi eq, %arg0, %c1_i32 : i32
    %c1_i32_1 = arith.constant 1 : i32
    %4 = arith.cmpi eq, %arg1, %c1_i32_1 : i32
    %5 = arith.andi %3, %4 : i1
    %6 = arith.extui %2 : i1 to i32
    %c0_i32_2 = arith.constant 0 : i32
    %7 = arith.cmpi ne, %6, %c0_i32_2 : i32
    scf.if %7 {
      %cst_371 = arith.constant 0.000000e+00 : f32
      %314 = vector.broadcast %cst_371 : f32 to vector<8x16xf32>
      %c0_372 = arith.constant 0 : index
      %c0_373 = arith.constant 0 : index
      %315 = vector.load %arg9[%c0_372, %c0_373] : memref<8x16xf32, #tpu.memory_space<vmem>>, vector<8x16xf32>
      tpu.vector_store %arg9[%c0_372, %c0_373], %314 {strides = array<i32>} : memref<8x16xf32, #tpu.memory_space<vmem>>, vector<8x16xf32>,
      %cst_374 = arith.constant 0.000000e+00 : f32
      %316 = vector.broadcast %cst_374 : f32 to vector<8x16xf32>
      %c0_375 = arith.constant 0 : index
      %c0_376 = arith.constant 0 : index
      %317 = vector.load %arg10[%c0_375, %c0_376] : memref<8x16xf32, #tpu.memory_space<vmem>>, vector<8x16xf32>
      tpu.vector_store %arg10[%c0_375, %c0_376], %316 {strides = array<i32>} : memref<8x16xf32, #tpu.memory_space<vmem>>, vector<8x16xf32>,
    } else {
    }
    %c0 = arith.constant 0 : index
    %c0_3 = arith.constant 0 : index
    %c0_4 = arith.constant 0 : index
    %c0_5 = arith.constant 0 : index
    %8 = vector.load %arg2[%c0, %c0_3, %c0_4, %c0_5] : memref<1x4x16x32xf32, #tpu.memory_space<vmem>>, vector<1x4x1x32xf32>
    %9 = vector.shape_cast %8 : vector<1x4x1x32xf32> to vector<4x32xf32>
    %c0_6 = arith.constant 0 : index
    %c0_7 = arith.constant 0 : index
    %c0_8 = arith.constant 0 : index
    %10 = vector.load %arg4[%c0_6, %c0_7, %c0_8] : memref<2x32x16xf32, #tpu.memory_space<vmem>>, vector<1x32x16xf32>
    %11 = vector.shape_cast %10 : vector<1x32x16xf32> to vector<32x16xf32>
    %cst = arith.constant dense<0.000000e+00> : vector<4x16xf32>
    %12 = tpu.matmul %9, %11, %cst {dimension_numbers = #tpu.dot_dimension_numbers<[1], [0], [0], [1], [0, 0, 1, 1], [], []>} : vector<4x32xf32>, vector<32x16xf32>, vector<4x16xf32> -> vector<4x16xf32>
    %c0_9 = arith.constant 0 : index
    %c0_10 = arith.constant 0 : index
    %c0_11 = arith.constant 0 : index
    %13 = vector.load %arg3[%c0_9, %c0_10, %c0_11] : memref<4x8x4xf32, #tpu.memory_space<vmem>>, vector<1x8x4xf32>
    %14 = vector.shape_cast %13 : vector<1x8x4xf32> to vector<8x4xf32>
    %cst_12 = arith.constant dense<0.000000e+00> : vector<8x16xf32>
    %15 = tpu.matmul %14, %12, %cst_12 {dimension_numbers = #tpu.dot_dimension_numbers<[1], [0], [0], [1], [0, 0, 1, 1], [], []>} : vector<8x4xf32>, vector<4x16xf32>, vector<8x16xf32> -> vector<8x16xf32>
    %c1 = arith.constant 1 : index
    %c0_13 = arith.constant 0 : index
    %c0_14 = arith.constant 0 : index
    %16 = vector.load %arg4[%c1, %c0_13, %c0_14] : memref<2x32x16xf32, #tpu.memory_space<vmem>>, vector<1x32x16xf32>
    %17 = vector.shape_cast %16 : vector<1x32x16xf32> to vector<32x16xf32>
    %cst_15 = arith.constant dense<0.000000e+00> : vector<4x16xf32>
    %18 = tpu.matmul %9, %17, %cst_15 {dimension_numbers = #tpu.dot_dimension_numbers<[1], [0], [0], [1], [0, 0, 1, 1], [], []>} : vector<4x32xf32>, vector<32x16xf32>, vector<4x16xf32> -> vector<4x16xf32>
    %c1_16 = arith.constant 1 : index
    %c0_17 = arith.constant 0 : index
    %c0_18 = arith.constant 0 : index
    %19 = vector.load %arg3[%c1_16, %c0_17, %c0_18] : memref<4x8x4xf32, #tpu.memory_space<vmem>>, vector<1x8x4xf32>
    %20 = vector.shape_cast %19 : vector<1x8x4xf32> to vector<8x4xf32>
    %cst_19 = arith.constant dense<0.000000e+00> : vector<8x16xf32>
    %21 = tpu.matmul %20, %18, %cst_19 {dimension_numbers = #tpu.dot_dimension_numbers<[1], [0], [0], [1], [0, 0, 1, 1], [], []>} : vector<8x4xf32>, vector<4x16xf32>, vector<8x16xf32> -> vector<8x16xf32>
    %22 = arith.addf %15, %21 : vector<8x16xf32>
    %c0_20 = arith.constant 0 : index
    %c0_21 = arith.constant 0 : index
    %c1_22 = arith.constant 1 : index
    %c0_23 = arith.constant 0 : index
    %23 = vector.load %arg2[%c0_20, %c0_21, %c1_22, %c0_23] : memref<1x4x16x32xf32, #tpu.memory_space<vmem>>, vector<1x4x1x32xf32>
    %24 = vector.shape_cast %23 : vector<1x4x1x32xf32> to vector<4x32xf32>
    %c0_24 = arith.constant 0 : index
    %c0_25 = arith.constant 0 : index
    %c0_26 = arith.constant 0 : index
    %25 = vector.load %arg4[%c0_24, %c0_25, %c0_26] : memref<2x32x16xf32, #tpu.memory_space<vmem>>, vector<1x32x16xf32>
    %26 = vector.shape_cast %25 : vector<1x32x16xf32> to vector<32x16xf32>
    %cst_27 = arith.constant dense<0.000000e+00> : vector<4x16xf32>
    %27 = tpu.matmul %24, %26, %cst_27 {dimension_numbers = #tpu.dot_dimension_numbers<[1], [0], [0], [1], [0, 0, 1, 1], [], []>} : vector<4x32xf32>, vector<32x16xf32>, vector<4x16xf32> -> vector<4x16xf32>
    %c2 = arith.constant 2 : index
    %c0_28 = arith.constant 0 : index
    %c0_29 = arith.constant 0 : index
    %28 = vector.load %arg3[%c2, %c0_28, %c0_29] : memref<4x8x4xf32, #tpu.memory_space<vmem>>, vector<1x8x4xf32>
    %29 = vector.shape_cast %28 : vector<1x8x4xf32> to vector<8x4xf32>
    %cst_30 = arith.constant dense<0.000000e+00> : vector<8x16xf32>
    %30 = tpu.matmul %29, %27, %cst_30 {dimension_numbers = #tpu.dot_dimension_numbers<[1], [0], [0], [1], [0, 0, 1, 1], [], []>} : vector<8x4xf32>, vector<4x16xf32>, vector<8x16xf32> -> vector<8x16xf32>
    %31 = arith.addf %22, %30 : vector<8x16xf32>
    %c1_31 = arith.constant 1 : index
    %c0_32 = arith.constant 0 : index
    %c0_33 = arith.constant 0 : index
    %32 = vector.load %arg4[%c1_31, %c0_32, %c0_33] : memref<2x32x16xf32, #tpu.memory_space<vmem>>, vector<1x32x16xf32>
    %33 = vector.shape_cast %32 : vector<1x32x16xf32> to vector<32x16xf32>
    %cst_34 = arith.constant dense<0.000000e+00> : vector<4x16xf32>
    %34 = tpu.matmul %24, %33, %cst_34 {dimension_numbers = #tpu.dot_dimension_numbers<[1], [0], [0], [1], [0, 0, 1, 1], [], []>} : vector<4x32xf32>, vector<32x16xf32>, vector<4x16xf32> -> vector<4x16xf32>
    %c3 = arith.constant 3 : index
    %c0_35 = arith.constant 0 : index
    %c0_36 = arith.constant 0 : index
    %35 = vector.load %arg3[%c3, %c0_35, %c0_36] : memref<4x8x4xf32, #tpu.memory_space<vmem>>, vector<1x8x4xf32>
    %36 = vector.shape_cast %35 : vector<1x8x4xf32> to vector<8x4xf32>
    %cst_37 = arith.constant dense<0.000000e+00> : vector<8x16xf32>
    %37 = tpu.matmul %36, %34, %cst_37 {dimension_numbers = #tpu.dot_dimension_numbers<[1], [0], [0], [1], [0, 0, 1, 1], [], []>} : vector<8x4xf32>, vector<4x16xf32>, vector<8x16xf32> -> vector<8x16xf32>
    %38 = arith.addf %31, %37 : vector<8x16xf32>
    %c0_38 = arith.constant 0 : index
    %c0_39 = arith.constant 0 : index
    %39 = vector.load %arg9[%c0_38, %c0_39] : memref<8x16xf32, #tpu.memory_space<vmem>>, vector<8x16xf32>
    %40 = arith.addf %39, %38 : vector<8x16xf32>
    %c0_40 = arith.constant 0 : index
    %c0_41 = arith.constant 0 : index
    %41 = vector.load %arg9[%c0_40, %c0_41] : memref<8x16xf32, #tpu.memory_space<vmem>>, vector<8x16xf32>
    tpu.vector_store %arg9[%c0_40, %c0_41], %40 {strides = array<i32>} : memref<8x16xf32, #tpu.memory_space<vmem>>, vector<8x16xf32>,
    %c0_42 = arith.constant 0 : index
    %c0_43 = arith.constant 0 : index
    %42 = vector.load %arg10[%c0_42, %c0_43] : memref<8x16xf32, #tpu.memory_space<vmem>>, vector<8x16xf32>
    %43 = arith.mulf %38, %38 : vector<8x16xf32>
    %44 = arith.addf %42, %43 : vector<8x16xf32>
    %c0_44 = arith.constant 0 : index
    %c0_45 = arith.constant 0 : index
    %45 = vector.load %arg10[%c0_44, %c0_45] : memref<8x16xf32, #tpu.memory_space<vmem>>, vector<8x16xf32>
    tpu.vector_store %arg10[%c0_44, %c0_45], %44 {strides = array<i32>} : memref<8x16xf32, #tpu.memory_space<vmem>>, vector<8x16xf32>,
    %c0_46 = arith.constant 0 : index
    %c0_47 = arith.constant 0 : index
    %c2_48 = arith.constant 2 : index
    %c0_49 = arith.constant 0 : index
    %46 = vector.load %arg2[%c0_46, %c0_47, %c2_48, %c0_49] : memref<1x4x16x32xf32, #tpu.memory_space<vmem>>, vector<1x4x1x32xf32>
    %47 = vector.shape_cast %46 : vector<1x4x1x32xf32> to vector<4x32xf32>
    %c0_50 = arith.constant 0 : index
    %c0_51 = arith.constant 0 : index
    %c0_52 = arith.constant 0 : index
    %48 = vector.load %arg4[%c0_50, %c0_51, %c0_52] : memref<2x32x16xf32, #tpu.memory_space<vmem>>, vector<1x32x16xf32>
    %49 = vector.shape_cast %48 : vector<1x32x16xf32> to vector<32x16xf32>
    %cst_53 = arith.constant dense<0.000000e+00> : vector<4x16xf32>
    %50 = tpu.matmul %47, %49, %cst_53 {dimension_numbers = #tpu.dot_dimension_numbers<[1], [0], [0], [1], [0, 0, 1, 1], [], []>} : vector<4x32xf32>, vector<32x16xf32>, vector<4x16xf32> -> vector<4x16xf32>
    %c0_54 = arith.constant 0 : index
    %c0_55 = arith.constant 0 : index
    %c0_56 = arith.constant 0 : index
    %51 = vector.load %arg3[%c0_54, %c0_55, %c0_56] : memref<4x8x4xf32, #tpu.memory_space<vmem>>, vector<1x8x4xf32>
    %52 = vector.shape_cast %51 : vector<1x8x4xf32> to vector<8x4xf32>
    %cst_57 = arith.constant dense<0.000000e+00> : vector<8x16xf32>
    %53 = tpu.matmul %52, %50, %cst_57 {dimension_numbers = #tpu.dot_dimension_numbers<[1], [0], [0], [1], [0, 0, 1, 1], [], []>} : vector<8x4xf32>, vector<4x16xf32>, vector<8x16xf32> -> vector<8x16xf32>
    %c1_58 = arith.constant 1 : index
    %c0_59 = arith.constant 0 : index
    %c0_60 = arith.constant 0 : index
    %54 = vector.load %arg4[%c1_58, %c0_59, %c0_60] : memref<2x32x16xf32, #tpu.memory_space<vmem>>, vector<1x32x16xf32>
    %55 = vector.shape_cast %54 : vector<1x32x16xf32> to vector<32x16xf32>
    %cst_61 = arith.constant dense<0.000000e+00> : vector<4x16xf32>
    %56 = tpu.matmul %47, %55, %cst_61 {dimension_numbers = #tpu.dot_dimension_numbers<[1], [0], [0], [1], [0, 0, 1, 1], [], []>} : vector<4x32xf32>, vector<32x16xf32>, vector<4x16xf32> -> vector<4x16xf32>
    %c1_62 = arith.constant 1 : index
    %c0_63 = arith.constant 0 : index
    %c0_64 = arith.constant 0 : index
    %57 = vector.load %arg3[%c1_62, %c0_63, %c0_64] : memref<4x8x4xf32, #tpu.memory_space<vmem>>, vector<1x8x4xf32>
    %58 = vector.shape_cast %57 : vector<1x8x4xf32> to vector<8x4xf32>
    %cst_65 = arith.constant dense<0.000000e+00> : vector<8x16xf32>
    %59 = tpu.matmul %58, %56, %cst_65 {dimension_numbers = #tpu.dot_dimension_numbers<[1], [0], [0], [1], [0, 0, 1, 1], [], []>} : vector<8x4xf32>, vector<4x16xf32>, vector<8x16xf32> -> vector<8x16xf32>
    %60 = arith.addf %53, %59 : vector<8x16xf32>
    %c0_66 = arith.constant 0 : index
    %c0_67 = arith.constant 0 : index
    %c3_68 = arith.constant 3 : index
    %c0_69 = arith.constant 0 : index
    %61 = vector.load %arg2[%c0_66, %c0_67, %c3_68, %c0_69] : memref<1x4x16x32xf32, #tpu.memory_space<vmem>>, vector<1x4x1x32xf32>
    %62 = vector.shape_cast %61 : vector<1x4x1x32xf32> to vector<4x32xf32>
    %c0_70 = arith.constant 0 : index
    %c0_71 = arith.constant 0 : index
    %c0_72 = arith.constant 0 : index
    %63 = vector.load %arg4[%c0_70, %c0_71, %c0_72] : memref<2x32x16xf32, #tpu.memory_space<vmem>>, vector<1x32x16xf32>
    %64 = vector.shape_cast %63 : vector<1x32x16xf32> to vector<32x16xf32>
    %cst_73 = arith.constant dense<0.000000e+00> : vector<4x16xf32>
    %65 = tpu.matmul %62, %64, %cst_73 {dimension_numbers = #tpu.dot_dimension_numbers<[1], [0], [0], [1], [0, 0, 1, 1], [], []>} : vector<4x32xf32>, vector<32x16xf32>, vector<4x16xf32> -> vector<4x16xf32>
    %c2_74 = arith.constant 2 : index
    %c0_75 = arith.constant 0 : index
    %c0_76 = arith.constant 0 : index
    %66 = vector.load %arg3[%c2_74, %c0_75, %c0_76] : memref<4x8x4xf32, #tpu.memory_space<vmem>>, vector<1x8x4xf32>
    %67 = vector.shape_cast %66 : vector<1x8x4xf32> to vector<8x4xf32>
    %cst_77 = arith.constant dense<0.000000e+00> : vector<8x16xf32>
    %68 = tpu.matmul %67, %65, %cst_77 {dimension_numbers = #tpu.dot_dimension_numbers<[1], [0], [0], [1], [0, 0, 1, 1], [], []>} : vector<8x4xf32>, vector<4x16xf32>, vector<8x16xf32> -> vector<8x16xf32>
    %69 = arith.addf %60, %68 : vector<8x16xf32>
    %c1_78 = arith.constant 1 : index
    %c0_79 = arith.constant 0 : index
    %c0_80 = arith.constant 0 : index
    %70 = vector.load %arg4[%c1_78, %c0_79, %c0_80] : memref<2x32x16xf32, #tpu.memory_space<vmem>>, vector<1x32x16xf32>
    %71 = vector.shape_cast %70 : vector<1x32x16xf32> to vector<32x16xf32>
    %cst_81 = arith.constant dense<0.000000e+00> : vector<4x16xf32>
    %72 = tpu.matmul %62, %71, %cst_81 {dimension_numbers = #tpu.dot_dimension_numbers<[1], [0], [0], [1], [0, 0, 1, 1], [], []>} : vector<4x32xf32>, vector<32x16xf32>, vector<4x16xf32> -> vector<4x16xf32>
    %c3_82 = arith.constant 3 : index
    %c0_83 = arith.constant 0 : index
    %c0_84 = arith.constant 0 : index
    %73 = vector.load %arg3[%c3_82, %c0_83, %c0_84] : memref<4x8x4xf32, #tpu.memory_space<vmem>>, vector<1x8x4xf32>
    %74 = vector.shape_cast %73 : vector<1x8x4xf32> to vector<8x4xf32>
    %cst_85 = arith.constant dense<0.000000e+00> : vector<8x16xf32>
    %75 = tpu.matmul %74, %72, %cst_85 {dimension_numbers = #tpu.dot_dimension_numbers<[1], [0], [0], [1], [0, 0, 1, 1], [], []>} : vector<8x4xf32>, vector<4x16xf32>, vector<8x16xf32> -> vector<8x16xf32>
    %76 = arith.addf %69, %75 : vector<8x16xf32>
    %c0_86 = arith.constant 0 : index
    %c0_87 = arith.constant 0 : index
    %77 = vector.load %arg9[%c0_86, %c0_87] : memref<8x16xf32, #tpu.memory_space<vmem>>, vector<8x16xf32>
    %78 = arith.addf %77, %76 : vector<8x16xf32>
    %c0_88 = arith.constant 0 : index
    %c0_89 = arith.constant 0 : index
    %79 = vector.load %arg9[%c0_88, %c0_89] : memref<8x16xf32, #tpu.memory_space<vmem>>, vector<8x16xf32>
    tpu.vector_store %arg9[%c0_88, %c0_89], %78 {strides = array<i32>} : memref<8x16xf32, #tpu.memory_space<vmem>>, vector<8x16xf32>,
    %c0_90 = arith.constant 0 : index
    %c0_91 = arith.constant 0 : index
    %80 = vector.load %arg10[%c0_90, %c0_91] : memref<8x16xf32, #tpu.memory_space<vmem>>, vector<8x16xf32>
    %81 = arith.mulf %76, %76 : vector<8x16xf32>
    %82 = arith.addf %80, %81 : vector<8x16xf32>
    %c0_92 = arith.constant 0 : index
    %c0_93 = arith.constant 0 : index
    %83 = vector.load %arg10[%c0_92, %c0_93] : memref<8x16xf32, #tpu.memory_space<vmem>>, vector<8x16xf32>
    tpu.vector_store %arg10[%c0_92, %c0_93], %82 {strides = array<i32>} : memref<8x16xf32, #tpu.memory_space<vmem>>, vector<8x16xf32>,
    %c0_94 = arith.constant 0 : index
    %c0_95 = arith.constant 0 : index
    %c4 = arith.constant 4 : index
    %c0_96 = arith.constant 0 : index
    %84 = vector.load %arg2[%c0_94, %c0_95, %c4, %c0_96] : memref<1x4x16x32xf32, #tpu.memory_space<vmem>>, vector<1x4x1x32xf32>
    %85 = vector.shape_cast %84 : vector<1x4x1x32xf32> to vector<4x32xf32>
    %c0_97 = arith.constant 0 : index
    %c0_98 = arith.constant 0 : index
    %c0_99 = arith.constant 0 : index
    %86 = vector.load %arg4[%c0_97, %c0_98, %c0_99] : memref<2x32x16xf32, #tpu.memory_space<vmem>>, vector<1x32x16xf32>
    %87 = vector.shape_cast %86 : vector<1x32x16xf32> to vector<32x16xf32>
    %cst_100 = arith.constant dense<0.000000e+00> : vector<4x16xf32>
    %88 = tpu.matmul %85, %87, %cst_100 {dimension_numbers = #tpu.dot_dimension_numbers<[1], [0], [0], [1], [0, 0, 1, 1], [], []>} : vector<4x32xf32>, vector<32x16xf32>, vector<4x16xf32> -> vector<4x16xf32>
    %c0_101 = arith.constant 0 : index
    %c0_102 = arith.constant 0 : index
    %c0_103 = arith.constant 0 : index
    %89 = vector.load %arg3[%c0_101, %c0_102, %c0_103] : memref<4x8x4xf32, #tpu.memory_space<vmem>>, vector<1x8x4xf32>
    %90 = vector.shape_cast %89 : vector<1x8x4xf32> to vector<8x4xf32>
    %cst_104 = arith.constant dense<0.000000e+00> : vector<8x16xf32>
    %91 = tpu.matmul %90, %88, %cst_104 {dimension_numbers = #tpu.dot_dimension_numbers<[1], [0], [0], [1], [0, 0, 1, 1], [], []>} : vector<8x4xf32>, vector<4x16xf32>, vector<8x16xf32> -> vector<8x16xf32>
    %c1_105 = arith.constant 1 : index
    %c0_106 = arith.constant 0 : index
    %c0_107 = arith.constant 0 : index
    %92 = vector.load %arg4[%c1_105, %c0_106, %c0_107] : memref<2x32x16xf32, #tpu.memory_space<vmem>>, vector<1x32x16xf32>
    %93 = vector.shape_cast %92 : vector<1x32x16xf32> to vector<32x16xf32>
    %cst_108 = arith.constant dense<0.000000e+00> : vector<4x16xf32>
    %94 = tpu.matmul %85, %93, %cst_108 {dimension_numbers = #tpu.dot_dimension_numbers<[1], [0], [0], [1], [0, 0, 1, 1], [], []>} : vector<4x32xf32>, vector<32x16xf32>, vector<4x16xf32> -> vector<4x16xf32>
    %c1_109 = arith.constant 1 : index
    %c0_110 = arith.constant 0 : index
    %c0_111 = arith.constant 0 : index
    %95 = vector.load %arg3[%c1_109, %c0_110, %c0_111] : memref<4x8x4xf32, #tpu.memory_space<vmem>>, vector<1x8x4xf32>
    %96 = vector.shape_cast %95 : vector<1x8x4xf32> to vector<8x4xf32>
    %cst_112 = arith.constant dense<0.000000e+00> : vector<8x16xf32>
    %97 = tpu.matmul %96, %94, %cst_112 {dimension_numbers = #tpu.dot_dimension_numbers<[1], [0], [0], [1], [0, 0, 1, 1], [], []>} : vector<8x4xf32>, vector<4x16xf32>, vector<8x16xf32> -> vector<8x16xf32>
    %98 = arith.addf %91, %97 : vector<8x16xf32>
    %c0_113 = arith.constant 0 : index
    %c0_114 = arith.constant 0 : index
    %c5 = arith.constant 5 : index
    %c0_115 = arith.constant 0 : index
    %99 = vector.load %arg2[%c0_113, %c0_114, %c5, %c0_115] : memref<1x4x16x32xf32, #tpu.memory_space<vmem>>, vector<1x4x1x32xf32>
    %100 = vector.shape_cast %99 : vector<1x4x1x32xf32> to vector<4x32xf32>
    %c0_116 = arith.constant 0 : index
    %c0_117 = arith.constant 0 : index
    %c0_118 = arith.constant 0 : index
    %101 = vector.load %arg4[%c0_116, %c0_117, %c0_118] : memref<2x32x16xf32, #tpu.memory_space<vmem>>, vector<1x32x16xf32>
    %102 = vector.shape_cast %101 : vector<1x32x16xf32> to vector<32x16xf32>
    %cst_119 = arith.constant dense<0.000000e+00> : vector<4x16xf32>
    %103 = tpu.matmul %100, %102, %cst_119 {dimension_numbers = #tpu.dot_dimension_numbers<[1], [0], [0], [1], [0, 0, 1, 1], [], []>} : vector<4x32xf32>, vector<32x16xf32>, vector<4x16xf32> -> vector<4x16xf32>
    %c2_120 = arith.constant 2 : index
    %c0_121 = arith.constant 0 : index
    %c0_122 = arith.constant 0 : index
    %104 = vector.load %arg3[%c2_120, %c0_121, %c0_122] : memref<4x8x4xf32, #tpu.memory_space<vmem>>, vector<1x8x4xf32>
    %105 = vector.shape_cast %104 : vector<1x8x4xf32> to vector<8x4xf32>
    %cst_123 = arith.constant dense<0.000000e+00> : vector<8x16xf32>
    %106 = tpu.matmul %105, %103, %cst_123 {dimension_numbers = #tpu.dot_dimension_numbers<[1], [0], [0], [1], [0, 0, 1, 1], [], []>} : vector<8x4xf32>, vector<4x16xf32>, vector<8x16xf32> -> vector<8x16xf32>
    %107 = arith.addf %98, %106 : vector<8x16xf32>
    %c1_124 = arith.constant 1 : index
    %c0_125 = arith.constant 0 : index
    %c0_126 = arith.constant 0 : index
    %108 = vector.load %arg4[%c1_124, %c0_125, %c0_126] : memref<2x32x16xf32, #tpu.memory_space<vmem>>, vector<1x32x16xf32>
    %109 = vector.shape_cast %108 : vector<1x32x16xf32> to vector<32x16xf32>
    %cst_127 = arith.constant dense<0.000000e+00> : vector<4x16xf32>
    %110 = tpu.matmul %100, %109, %cst_127 {dimension_numbers = #tpu.dot_dimension_numbers<[1], [0], [0], [1], [0, 0, 1, 1], [], []>} : vector<4x32xf32>, vector<32x16xf32>, vector<4x16xf32> -> vector<4x16xf32>
    %c3_128 = arith.constant 3 : index
    %c0_129 = arith.constant 0 : index
    %c0_130 = arith.constant 0 : index
    %111 = vector.load %arg3[%c3_128, %c0_129, %c0_130] : memref<4x8x4xf32, #tpu.memory_space<vmem>>, vector<1x8x4xf32>
    %112 = vector.shape_cast %111 : vector<1x8x4xf32> to vector<8x4xf32>
    %cst_131 = arith.constant dense<0.000000e+00> : vector<8x16xf32>
    %113 = tpu.matmul %112, %110, %cst_131 {dimension_numbers = #tpu.dot_dimension_numbers<[1], [0], [0], [1], [0, 0, 1, 1], [], []>} : vector<8x4xf32>, vector<4x16xf32>, vector<8x16xf32> -> vector<8x16xf32>
    %114 = arith.addf %107, %113 : vector<8x16xf32>
    %c0_132 = arith.constant 0 : index
    %c0_133 = arith.constant 0 : index
    %115 = vector.load %arg9[%c0_132, %c0_133] : memref<8x16xf32, #tpu.memory_space<vmem>>, vector<8x16xf32>
    %116 = arith.addf %115, %114 : vector<8x16xf32>
    %c0_134 = arith.constant 0 : index
    %c0_135 = arith.constant 0 : index
    %117 = vector.load %arg9[%c0_134, %c0_135] : memref<8x16xf32, #tpu.memory_space<vmem>>, vector<8x16xf32>
    tpu.vector_store %arg9[%c0_134, %c0_135], %116 {strides = array<i32>} : memref<8x16xf32, #tpu.memory_space<vmem>>, vector<8x16xf32>,
    %c0_136 = arith.constant 0 : index
    %c0_137 = arith.constant 0 : index
    %118 = vector.load %arg10[%c0_136, %c0_137] : memref<8x16xf32, #tpu.memory_space<vmem>>, vector<8x16xf32>
    %119 = arith.mulf %114, %114 : vector<8x16xf32>
    %120 = arith.addf %118, %119 : vector<8x16xf32>
    %c0_138 = arith.constant 0 : index
    %c0_139 = arith.constant 0 : index
    %121 = vector.load %arg10[%c0_138, %c0_139] : memref<8x16xf32, #tpu.memory_space<vmem>>, vector<8x16xf32>
    tpu.vector_store %arg10[%c0_138, %c0_139], %120 {strides = array<i32>} : memref<8x16xf32, #tpu.memory_space<vmem>>, vector<8x16xf32>,
    %c0_140 = arith.constant 0 : index
    %c0_141 = arith.constant 0 : index
    %c6 = arith.constant 6 : index
    %c0_142 = arith.constant 0 : index
    %122 = vector.load %arg2[%c0_140, %c0_141, %c6, %c0_142] : memref<1x4x16x32xf32, #tpu.memory_space<vmem>>, vector<1x4x1x32xf32>
    %123 = vector.shape_cast %122 : vector<1x4x1x32xf32> to vector<4x32xf32>
    %c0_143 = arith.constant 0 : index
    %c0_144 = arith.constant 0 : index
    %c0_145 = arith.constant 0 : index
    %124 = vector.load %arg4[%c0_143, %c0_144, %c0_145] : memref<2x32x16xf32, #tpu.memory_space<vmem>>, vector<1x32x16xf32>
    %125 = vector.shape_cast %124 : vector<1x32x16xf32> to vector<32x16xf32>
    %cst_146 = arith.constant dense<0.000000e+00> : vector<4x16xf32>
    %126 = tpu.matmul %123, %125, %cst_146 {dimension_numbers = #tpu.dot_dimension_numbers<[1], [0], [0], [1], [0, 0, 1, 1], [], []>} : vector<4x32xf32>, vector<32x16xf32>, vector<4x16xf32> -> vector<4x16xf32>
    %c0_147 = arith.constant 0 : index
    %c0_148 = arith.constant 0 : index
    %c0_149 = arith.constant 0 : index
    %127 = vector.load %arg3[%c0_147, %c0_148, %c0_149] : memref<4x8x4xf32, #tpu.memory_space<vmem>>, vector<1x8x4xf32>
    %128 = vector.shape_cast %127 : vector<1x8x4xf32> to vector<8x4xf32>
    %cst_150 = arith.constant dense<0.000000e+00> : vector<8x16xf32>
    %129 = tpu.matmul %128, %126, %cst_150 {dimension_numbers = #tpu.dot_dimension_numbers<[1], [0], [0], [1], [0, 0, 1, 1], [], []>} : vector<8x4xf32>, vector<4x16xf32>, vector<8x16xf32> -> vector<8x16xf32>
    %c1_151 = arith.constant 1 : index
    %c0_152 = arith.constant 0 : index
    %c0_153 = arith.constant 0 : index
    %130 = vector.load %arg4[%c1_151, %c0_152, %c0_153] : memref<2x32x16xf32, #tpu.memory_space<vmem>>, vector<1x32x16xf32>
    %131 = vector.shape_cast %130 : vector<1x32x16xf32> to vector<32x16xf32>
    %cst_154 = arith.constant dense<0.000000e+00> : vector<4x16xf32>
    %132 = tpu.matmul %123, %131, %cst_154 {dimension_numbers = #tpu.dot_dimension_numbers<[1], [0], [0], [1], [0, 0, 1, 1], [], []>} : vector<4x32xf32>, vector<32x16xf32>, vector<4x16xf32> -> vector<4x16xf32>
    %c1_155 = arith.constant 1 : index
    %c0_156 = arith.constant 0 : index
    %c0_157 = arith.constant 0 : index
    %133 = vector.load %arg3[%c1_155, %c0_156, %c0_157] : memref<4x8x4xf32, #tpu.memory_space<vmem>>, vector<1x8x4xf32>
    %134 = vector.shape_cast %133 : vector<1x8x4xf32> to vector<8x4xf32>
    %cst_158 = arith.constant dense<0.000000e+00> : vector<8x16xf32>
    %135 = tpu.matmul %134, %132, %cst_158 {dimension_numbers = #tpu.dot_dimension_numbers<[1], [0], [0], [1], [0, 0, 1, 1], [], []>} : vector<8x4xf32>, vector<4x16xf32>, vector<8x16xf32> -> vector<8x16xf32>
    %136 = arith.addf %129, %135 : vector<8x16xf32>
    %c0_159 = arith.constant 0 : index
    %c0_160 = arith.constant 0 : index
    %c7 = arith.constant 7 : index
    %c0_161 = arith.constant 0 : index
    %137 = vector.load %arg2[%c0_159, %c0_160, %c7, %c0_161] : memref<1x4x16x32xf32, #tpu.memory_space<vmem>>, vector<1x4x1x32xf32>
    %138 = vector.shape_cast %137 : vector<1x4x1x32xf32> to vector<4x32xf32>
    %c0_162 = arith.constant 0 : index
    %c0_163 = arith.constant 0 : index
    %c0_164 = arith.constant 0 : index
    %139 = vector.load %arg4[%c0_162, %c0_163, %c0_164] : memref<2x32x16xf32, #tpu.memory_space<vmem>>, vector<1x32x16xf32>
    %140 = vector.shape_cast %139 : vector<1x32x16xf32> to vector<32x16xf32>
    %cst_165 = arith.constant dense<0.000000e+00> : vector<4x16xf32>
    %141 = tpu.matmul %138, %140, %cst_165 {dimension_numbers = #tpu.dot_dimension_numbers<[1], [0], [0], [1], [0, 0, 1, 1], [], []>} : vector<4x32xf32>, vector<32x16xf32>, vector<4x16xf32> -> vector<4x16xf32>
    %c2_166 = arith.constant 2 : index
    %c0_167 = arith.constant 0 : index
    %c0_168 = arith.constant 0 : index
    %142 = vector.load %arg3[%c2_166, %c0_167, %c0_168] : memref<4x8x4xf32, #tpu.memory_space<vmem>>, vector<1x8x4xf32>
    %143 = vector.shape_cast %142 : vector<1x8x4xf32> to vector<8x4xf32>
    %cst_169 = arith.constant dense<0.000000e+00> : vector<8x16xf32>
    %144 = tpu.matmul %143, %141, %cst_169 {dimension_numbers = #tpu.dot_dimension_numbers<[1], [0], [0], [1], [0, 0, 1, 1], [], []>} : vector<8x4xf32>, vector<4x16xf32>, vector<8x16xf32> -> vector<8x16xf32>
    %145 = arith.addf %136, %144 : vector<8x16xf32>
    %c1_170 = arith.constant 1 : index
    %c0_171 = arith.constant 0 : index
    %c0_172 = arith.constant 0 : index
    %146 = vector.load %arg4[%c1_170, %c0_171, %c0_172] : memref<2x32x16xf32, #tpu.memory_space<vmem>>, vector<1x32x16xf32>
    %147 = vector.shape_cast %146 : vector<1x32x16xf32> to vector<32x16xf32>
    %cst_173 = arith.constant dense<0.000000e+00> : vector<4x16xf32>
    %148 = tpu.matmul %138, %147, %cst_173 {dimension_numbers = #tpu.dot_dimension_numbers<[1], [0], [0], [1], [0, 0, 1, 1], [], []>} : vector<4x32xf32>, vector<32x16xf32>, vector<4x16xf32> -> vector<4x16xf32>
    %c3_174 = arith.constant 3 : index
    %c0_175 = arith.constant 0 : index
    %c0_176 = arith.constant 0 : index
    %149 = vector.load %arg3[%c3_174, %c0_175, %c0_176] : memref<4x8x4xf32, #tpu.memory_space<vmem>>, vector<1x8x4xf32>
    %150 = vector.shape_cast %149 : vector<1x8x4xf32> to vector<8x4xf32>
    %cst_177 = arith.constant dense<0.000000e+00> : vector<8x16xf32>
    %151 = tpu.matmul %150, %148, %cst_177 {dimension_numbers = #tpu.dot_dimension_numbers<[1], [0], [0], [1], [0, 0, 1, 1], [], []>} : vector<8x4xf32>, vector<4x16xf32>, vector<8x16xf32> -> vector<8x16xf32>
    %152 = arith.addf %145, %151 : vector<8x16xf32>
    %c0_178 = arith.constant 0 : index
    %c0_179 = arith.constant 0 : index
    %153 = vector.load %arg9[%c0_178, %c0_179] : memref<8x16xf32, #tpu.memory_space<vmem>>, vector<8x16xf32>
    %154 = arith.addf %153, %152 : vector<8x16xf32>
    %c0_180 = arith.constant 0 : index
    %c0_181 = arith.constant 0 : index
    %155 = vector.load %arg9[%c0_180, %c0_181] : memref<8x16xf32, #tpu.memory_space<vmem>>, vector<8x16xf32>
    tpu.vector_store %arg9[%c0_180, %c0_181], %154 {strides = array<i32>} : memref<8x16xf32, #tpu.memory_space<vmem>>, vector<8x16xf32>,
    %c0_182 = arith.constant 0 : index
    %c0_183 = arith.constant 0 : index
    %156 = vector.load %arg10[%c0_182, %c0_183] : memref<8x16xf32, #tpu.memory_space<vmem>>, vector<8x16xf32>
    %157 = arith.mulf %152, %152 : vector<8x16xf32>
    %158 = arith.addf %156, %157 : vector<8x16xf32>
    %c0_184 = arith.constant 0 : index
    %c0_185 = arith.constant 0 : index
    %159 = vector.load %arg10[%c0_184, %c0_185] : memref<8x16xf32, #tpu.memory_space<vmem>>, vector<8x16xf32>
    tpu.vector_store %arg10[%c0_184, %c0_185], %158 {strides = array<i32>} : memref<8x16xf32, #tpu.memory_space<vmem>>, vector<8x16xf32>,
    %c0_186 = arith.constant 0 : index
    %c0_187 = arith.constant 0 : index
    %c8 = arith.constant 8 : index
    %c0_188 = arith.constant 0 : index
    %160 = vector.load %arg2[%c0_186, %c0_187, %c8, %c0_188] : memref<1x4x16x32xf32, #tpu.memory_space<vmem>>, vector<1x4x1x32xf32>
    %161 = vector.shape_cast %160 : vector<1x4x1x32xf32> to vector<4x32xf32>
    %c0_189 = arith.constant 0 : index
    %c0_190 = arith.constant 0 : index
    %c0_191 = arith.constant 0 : index
    %162 = vector.load %arg4[%c0_189, %c0_190, %c0_191] : memref<2x32x16xf32, #tpu.memory_space<vmem>>, vector<1x32x16xf32>
    %163 = vector.shape_cast %162 : vector<1x32x16xf32> to vector<32x16xf32>
    %cst_192 = arith.constant dense<0.000000e+00> : vector<4x16xf32>
    %164 = tpu.matmul %161, %163, %cst_192 {dimension_numbers = #tpu.dot_dimension_numbers<[1], [0], [0], [1], [0, 0, 1, 1], [], []>} : vector<4x32xf32>, vector<32x16xf32>, vector<4x16xf32> -> vector<4x16xf32>
    %c0_193 = arith.constant 0 : index
    %c0_194 = arith.constant 0 : index
    %c0_195 = arith.constant 0 : index
    %165 = vector.load %arg3[%c0_193, %c0_194, %c0_195] : memref<4x8x4xf32, #tpu.memory_space<vmem>>, vector<1x8x4xf32>
    %166 = vector.shape_cast %165 : vector<1x8x4xf32> to vector<8x4xf32>
    %cst_196 = arith.constant dense<0.000000e+00> : vector<8x16xf32>
    %167 = tpu.matmul %166, %164, %cst_196 {dimension_numbers = #tpu.dot_dimension_numbers<[1], [0], [0], [1], [0, 0, 1, 1], [], []>} : vector<8x4xf32>, vector<4x16xf32>, vector<8x16xf32> -> vector<8x16xf32>
    %c1_197 = arith.constant 1 : index
    %c0_198 = arith.constant 0 : index
    %c0_199 = arith.constant 0 : index
    %168 = vector.load %arg4[%c1_197, %c0_198, %c0_199] : memref<2x32x16xf32, #tpu.memory_space<vmem>>, vector<1x32x16xf32>
    %169 = vector.shape_cast %168 : vector<1x32x16xf32> to vector<32x16xf32>
    %cst_200 = arith.constant dense<0.000000e+00> : vector<4x16xf32>
    %170 = tpu.matmul %161, %169, %cst_200 {dimension_numbers = #tpu.dot_dimension_numbers<[1], [0], [0], [1], [0, 0, 1, 1], [], []>} : vector<4x32xf32>, vector<32x16xf32>, vector<4x16xf32> -> vector<4x16xf32>
    %c1_201 = arith.constant 1 : index
    %c0_202 = arith.constant 0 : index
    %c0_203 = arith.constant 0 : index
    %171 = vector.load %arg3[%c1_201, %c0_202, %c0_203] : memref<4x8x4xf32, #tpu.memory_space<vmem>>, vector<1x8x4xf32>
    %172 = vector.shape_cast %171 : vector<1x8x4xf32> to vector<8x4xf32>
    %cst_204 = arith.constant dense<0.000000e+00> : vector<8x16xf32>
    %173 = tpu.matmul %172, %170, %cst_204 {dimension_numbers = #tpu.dot_dimension_numbers<[1], [0], [0], [1], [0, 0, 1, 1], [], []>} : vector<8x4xf32>, vector<4x16xf32>, vector<8x16xf32> -> vector<8x16xf32>
    %174 = arith.addf %167, %173 : vector<8x16xf32>
    %c0_205 = arith.constant 0 : index
    %c0_206 = arith.constant 0 : index
    %c9 = arith.constant 9 : index
    %c0_207 = arith.constant 0 : index
    %175 = vector.load %arg2[%c0_205, %c0_206, %c9, %c0_207] : memref<1x4x16x32xf32, #tpu.memory_space<vmem>>, vector<1x4x1x32xf32>
    %176 = vector.shape_cast %175 : vector<1x4x1x32xf32> to vector<4x32xf32>
    %c0_208 = arith.constant 0 : index
    %c0_209 = arith.constant 0 : index
    %c0_210 = arith.constant 0 : index
    %177 = vector.load %arg4[%c0_208, %c0_209, %c0_210] : memref<2x32x16xf32, #tpu.memory_space<vmem>>, vector<1x32x16xf32>
    %178 = vector.shape_cast %177 : vector<1x32x16xf32> to vector<32x16xf32>
    %cst_211 = arith.constant dense<0.000000e+00> : vector<4x16xf32>
    %179 = tpu.matmul %176, %178, %cst_211 {dimension_numbers = #tpu.dot_dimension_numbers<[1], [0], [0], [1], [0, 0, 1, 1], [], []>} : vector<4x32xf32>, vector<32x16xf32>, vector<4x16xf32> -> vector<4x16xf32>
    %c2_212 = arith.constant 2 : index
    %c0_213 = arith.constant 0 : index
    %c0_214 = arith.constant 0 : index
    %180 = vector.load %arg3[%c2_212, %c0_213, %c0_214] : memref<4x8x4xf32, #tpu.memory_space<vmem>>, vector<1x8x4xf32>
    %181 = vector.shape_cast %180 : vector<1x8x4xf32> to vector<8x4xf32>
    %cst_215 = arith.constant dense<0.000000e+00> : vector<8x16xf32>
    %182 = tpu.matmul %181, %179, %cst_215 {dimension_numbers = #tpu.dot_dimension_numbers<[1], [0], [0], [1], [0, 0, 1, 1], [], []>} : vector<8x4xf32>, vector<4x16xf32>, vector<8x16xf32> -> vector<8x16xf32>
    %183 = arith.addf %174, %182 : vector<8x16xf32>
    %c1_216 = arith.constant 1 : index
    %c0_217 = arith.constant 0 : index
    %c0_218 = arith.constant 0 : index
    %184 = vector.load %arg4[%c1_216, %c0_217, %c0_218] : memref<2x32x16xf32, #tpu.memory_space<vmem>>, vector<1x32x16xf32>
    %185 = vector.shape_cast %184 : vector<1x32x16xf32> to vector<32x16xf32>
    %cst_219 = arith.constant dense<0.000000e+00> : vector<4x16xf32>
    %186 = tpu.matmul %176, %185, %cst_219 {dimension_numbers = #tpu.dot_dimension_numbers<[1], [0], [0], [1], [0, 0, 1, 1], [], []>} : vector<4x32xf32>, vector<32x16xf32>, vector<4x16xf32> -> vector<4x16xf32>
    %c3_220 = arith.constant 3 : index
    %c0_221 = arith.constant 0 : index
    %c0_222 = arith.constant 0 : index
    %187 = vector.load %arg3[%c3_220, %c0_221, %c0_222] : memref<4x8x4xf32, #tpu.memory_space<vmem>>, vector<1x8x4xf32>
    %188 = vector.shape_cast %187 : vector<1x8x4xf32> to vector<8x4xf32>
    %cst_223 = arith.constant dense<0.000000e+00> : vector<8x16xf32>
    %189 = tpu.matmul %188, %186, %cst_223 {dimension_numbers = #tpu.dot_dimension_numbers<[1], [0], [0], [1], [0, 0, 1, 1], [], []>} : vector<8x4xf32>, vector<4x16xf32>, vector<8x16xf32> -> vector<8x16xf32>
    %190 = arith.addf %183, %189 : vector<8x16xf32>
    %c0_224 = arith.constant 0 : index
    %c0_225 = arith.constant 0 : index
    %191 = vector.load %arg9[%c0_224, %c0_225] : memref<8x16xf32, #tpu.memory_space<vmem>>, vector<8x16xf32>
    %192 = arith.addf %191, %190 : vector<8x16xf32>
    %c0_226 = arith.constant 0 : index
    %c0_227 = arith.constant 0 : index
    %193 = vector.load %arg9[%c0_226, %c0_227] : memref<8x16xf32, #tpu.memory_space<vmem>>, vector<8x16xf32>
    tpu.vector_store %arg9[%c0_226, %c0_227], %192 {strides = array<i32>} : memref<8x16xf32, #tpu.memory_space<vmem>>, vector<8x16xf32>,
    %c0_228 = arith.constant 0 : index
    %c0_229 = arith.constant 0 : index
    %194 = vector.load %arg10[%c0_228, %c0_229] : memref<8x16xf32, #tpu.memory_space<vmem>>, vector<8x16xf32>
    %195 = arith.mulf %190, %190 : vector<8x16xf32>
    %196 = arith.addf %194, %195 : vector<8x16xf32>
    %c0_230 = arith.constant 0 : index
    %c0_231 = arith.constant 0 : index
    %197 = vector.load %arg10[%c0_230, %c0_231] : memref<8x16xf32, #tpu.memory_space<vmem>>, vector<8x16xf32>
    tpu.vector_store %arg10[%c0_230, %c0_231], %196 {strides = array<i32>} : memref<8x16xf32, #tpu.memory_space<vmem>>, vector<8x16xf32>,
    %c0_232 = arith.constant 0 : index
    %c0_233 = arith.constant 0 : index
    %c10 = arith.constant 10 : index
    %c0_234 = arith.constant 0 : index
    %198 = vector.load %arg2[%c0_232, %c0_233, %c10, %c0_234] : memref<1x4x16x32xf32, #tpu.memory_space<vmem>>, vector<1x4x1x32xf32>
    %199 = vector.shape_cast %198 : vector<1x4x1x32xf32> to vector<4x32xf32>
    %c0_235 = arith.constant 0 : index
    %c0_236 = arith.constant 0 : index
    %c0_237 = arith.constant 0 : index
    %200 = vector.load %arg4[%c0_235, %c0_236, %c0_237] : memref<2x32x16xf32, #tpu.memory_space<vmem>>, vector<1x32x16xf32>
    %201 = vector.shape_cast %200 : vector<1x32x16xf32> to vector<32x16xf32>
    %cst_238 = arith.constant dense<0.000000e+00> : vector<4x16xf32>
    %202 = tpu.matmul %199, %201, %cst_238 {dimension_numbers = #tpu.dot_dimension_numbers<[1], [0], [0], [1], [0, 0, 1, 1], [], []>} : vector<4x32xf32>, vector<32x16xf32>, vector<4x16xf32> -> vector<4x16xf32>
    %c0_239 = arith.constant 0 : index
    %c0_240 = arith.constant 0 : index
    %c0_241 = arith.constant 0 : index
    %203 = vector.load %arg3[%c0_239, %c0_240, %c0_241] : memref<4x8x4xf32, #tpu.memory_space<vmem>>, vector<1x8x4xf32>
    %204 = vector.shape_cast %203 : vector<1x8x4xf32> to vector<8x4xf32>
    %cst_242 = arith.constant dense<0.000000e+00> : vector<8x16xf32>
    %205 = tpu.matmul %204, %202, %cst_242 {dimension_numbers = #tpu.dot_dimension_numbers<[1], [0], [0], [1], [0, 0, 1, 1], [], []>} : vector<8x4xf32>, vector<4x16xf32>, vector<8x16xf32> -> vector<8x16xf32>
    %c1_243 = arith.constant 1 : index
    %c0_244 = arith.constant 0 : index
    %c0_245 = arith.constant 0 : index
    %206 = vector.load %arg4[%c1_243, %c0_244, %c0_245] : memref<2x32x16xf32, #tpu.memory_space<vmem>>, vector<1x32x16xf32>
    %207 = vector.shape_cast %206 : vector<1x32x16xf32> to vector<32x16xf32>
    %cst_246 = arith.constant dense<0.000000e+00> : vector<4x16xf32>
    %208 = tpu.matmul %199, %207, %cst_246 {dimension_numbers = #tpu.dot_dimension_numbers<[1], [0], [0], [1], [0, 0, 1, 1], [], []>} : vector<4x32xf32>, vector<32x16xf32>, vector<4x16xf32> -> vector<4x16xf32>
    %c1_247 = arith.constant 1 : index
    %c0_248 = arith.constant 0 : index
    %c0_249 = arith.constant 0 : index
    %209 = vector.load %arg3[%c1_247, %c0_248, %c0_249] : memref<4x8x4xf32, #tpu.memory_space<vmem>>, vector<1x8x4xf32>
    %210 = vector.shape_cast %209 : vector<1x8x4xf32> to vector<8x4xf32>
    %cst_250 = arith.constant dense<0.000000e+00> : vector<8x16xf32>
    %211 = tpu.matmul %210, %208, %cst_250 {dimension_numbers = #tpu.dot_dimension_numbers<[1], [0], [0], [1], [0, 0, 1, 1], [], []>} : vector<8x4xf32>, vector<4x16xf32>, vector<8x16xf32> -> vector<8x16xf32>
    %212 = arith.addf %205, %211 : vector<8x16xf32>
    %c0_251 = arith.constant 0 : index
    %c0_252 = arith.constant 0 : index
    %c11 = arith.constant 11 : index
    %c0_253 = arith.constant 0 : index
    %213 = vector.load %arg2[%c0_251, %c0_252, %c11, %c0_253] : memref<1x4x16x32xf32, #tpu.memory_space<vmem>>, vector<1x4x1x32xf32>
    %214 = vector.shape_cast %213 : vector<1x4x1x32xf32> to vector<4x32xf32>
    %c0_254 = arith.constant 0 : index
    %c0_255 = arith.constant 0 : index
    %c0_256 = arith.constant 0 : index
    %215 = vector.load %arg4[%c0_254, %c0_255, %c0_256] : memref<2x32x16xf32, #tpu.memory_space<vmem>>, vector<1x32x16xf32>
    %216 = vector.shape_cast %215 : vector<1x32x16xf32> to vector<32x16xf32>
    %cst_257 = arith.constant dense<0.000000e+00> : vector<4x16xf32>
    %217 = tpu.matmul %214, %216, %cst_257 {dimension_numbers = #tpu.dot_dimension_numbers<[1], [0], [0], [1], [0, 0, 1, 1], [], []>} : vector<4x32xf32>, vector<32x16xf32>, vector<4x16xf32> -> vector<4x16xf32>
    %c2_258 = arith.constant 2 : index
    %c0_259 = arith.constant 0 : index
    %c0_260 = arith.constant 0 : index
    %218 = vector.load %arg3[%c2_258, %c0_259, %c0_260] : memref<4x8x4xf32, #tpu.memory_space<vmem>>, vector<1x8x4xf32>
    %219 = vector.shape_cast %218 : vector<1x8x4xf32> to vector<8x4xf32>
    %cst_261 = arith.constant dense<0.000000e+00> : vector<8x16xf32>
    %220 = tpu.matmul %219, %217, %cst_261 {dimension_numbers = #tpu.dot_dimension_numbers<[1], [0], [0], [1], [0, 0, 1, 1], [], []>} : vector<8x4xf32>, vector<4x16xf32>, vector<8x16xf32> -> vector<8x16xf32>
    %221 = arith.addf %212, %220 : vector<8x16xf32>
    %c1_262 = arith.constant 1 : index
    %c0_263 = arith.constant 0 : index
    %c0_264 = arith.constant 0 : index
    %222 = vector.load %arg4[%c1_262, %c0_263, %c0_264] : memref<2x32x16xf32, #tpu.memory_space<vmem>>, vector<1x32x16xf32>
    %223 = vector.shape_cast %222 : vector<1x32x16xf32> to vector<32x16xf32>
    %cst_265 = arith.constant dense<0.000000e+00> : vector<4x16xf32>
    %224 = tpu.matmul %214, %223, %cst_265 {dimension_numbers = #tpu.dot_dimension_numbers<[1], [0], [0], [1], [0, 0, 1, 1], [], []>} : vector<4x32xf32>, vector<32x16xf32>, vector<4x16xf32> -> vector<4x16xf32>
    %c3_266 = arith.constant 3 : index
    %c0_267 = arith.constant 0 : index
    %c0_268 = arith.constant 0 : index
    %225 = vector.load %arg3[%c3_266, %c0_267, %c0_268] : memref<4x8x4xf32, #tpu.memory_space<vmem>>, vector<1x8x4xf32>
    %226 = vector.shape_cast %225 : vector<1x8x4xf32> to vector<8x4xf32>
    %cst_269 = arith.constant dense<0.000000e+00> : vector<8x16xf32>
    %227 = tpu.matmul %226, %224, %cst_269 {dimension_numbers = #tpu.dot_dimension_numbers<[1], [0], [0], [1], [0, 0, 1, 1], [], []>} : vector<8x4xf32>, vector<4x16xf32>, vector<8x16xf32> -> vector<8x16xf32>
    %228 = arith.addf %221, %227 : vector<8x16xf32>
    %c0_270 = arith.constant 0 : index
    %c0_271 = arith.constant 0 : index
    %229 = vector.load %arg9[%c0_270, %c0_271] : memref<8x16xf32, #tpu.memory_space<vmem>>, vector<8x16xf32>
    %230 = arith.addf %229, %228 : vector<8x16xf32>
    %c0_272 = arith.constant 0 : index
    %c0_273 = arith.constant 0 : index
    %231 = vector.load %arg9[%c0_272, %c0_273] : memref<8x16xf32, #tpu.memory_space<vmem>>, vector<8x16xf32>
    tpu.vector_store %arg9[%c0_272, %c0_273], %230 {strides = array<i32>} : memref<8x16xf32, #tpu.memory_space<vmem>>, vector<8x16xf32>,
    %c0_274 = arith.constant 0 : index
    %c0_275 = arith.constant 0 : index
    %232 = vector.load %arg10[%c0_274, %c0_275] : memref<8x16xf32, #tpu.memory_space<vmem>>, vector<8x16xf32>
    %233 = arith.mulf %228, %228 : vector<8x16xf32>
    %234 = arith.addf %232, %233 : vector<8x16xf32>
    %c0_276 = arith.constant 0 : index
    %c0_277 = arith.constant 0 : index
    %235 = vector.load %arg10[%c0_276, %c0_277] : memref<8x16xf32, #tpu.memory_space<vmem>>, vector<8x16xf32>
    tpu.vector_store %arg10[%c0_276, %c0_277], %234 {strides = array<i32>} : memref<8x16xf32, #tpu.memory_space<vmem>>, vector<8x16xf32>,
    %c0_278 = arith.constant 0 : index
    %c0_279 = arith.constant 0 : index
    %c12 = arith.constant 12 : index
    %c0_280 = arith.constant 0 : index
    %236 = vector.load %arg2[%c0_278, %c0_279, %c12, %c0_280] : memref<1x4x16x32xf32, #tpu.memory_space<vmem>>, vector<1x4x1x32xf32>
    %237 = vector.shape_cast %236 : vector<1x4x1x32xf32> to vector<4x32xf32>
    %c0_281 = arith.constant 0 : index
    %c0_282 = arith.constant 0 : index
    %c0_283 = arith.constant 0 : index
    %238 = vector.load %arg4[%c0_281, %c0_282, %c0_283] : memref<2x32x16xf32, #tpu.memory_space<vmem>>, vector<1x32x16xf32>
    %239 = vector.shape_cast %238 : vector<1x32x16xf32> to vector<32x16xf32>
    %cst_284 = arith.constant dense<0.000000e+00> : vector<4x16xf32>
    %240 = tpu.matmul %237, %239, %cst_284 {dimension_numbers = #tpu.dot_dimension_numbers<[1], [0], [0], [1], [0, 0, 1, 1], [], []>} : vector<4x32xf32>, vector<32x16xf32>, vector<4x16xf32> -> vector<4x16xf32>
    %c0_285 = arith.constant 0 : index
    %c0_286 = arith.constant 0 : index
    %c0_287 = arith.constant 0 : index
    %241 = vector.load %arg3[%c0_285, %c0_286, %c0_287] : memref<4x8x4xf32, #tpu.memory_space<vmem>>, vector<1x8x4xf32>
    %242 = vector.shape_cast %241 : vector<1x8x4xf32> to vector<8x4xf32>
    %cst_288 = arith.constant dense<0.000000e+00> : vector<8x16xf32>
    %243 = tpu.matmul %242, %240, %cst_288 {dimension_numbers = #tpu.dot_dimension_numbers<[1], [0], [0], [1], [0, 0, 1, 1], [], []>} : vector<8x4xf32>, vector<4x16xf32>, vector<8x16xf32> -> vector<8x16xf32>
    %c1_289 = arith.constant 1 : index
    %c0_290 = arith.constant 0 : index
    %c0_291 = arith.constant 0 : index
    %244 = vector.load %arg4[%c1_289, %c0_290, %c0_291] : memref<2x32x16xf32, #tpu.memory_space<vmem>>, vector<1x32x16xf32>
    %245 = vector.shape_cast %244 : vector<1x32x16xf32> to vector<32x16xf32>
    %cst_292 = arith.constant dense<0.000000e+00> : vector<4x16xf32>
    %246 = tpu.matmul %237, %245, %cst_292 {dimension_numbers = #tpu.dot_dimension_numbers<[1], [0], [0], [1], [0, 0, 1, 1], [], []>} : vector<4x32xf32>, vector<32x16xf32>, vector<4x16xf32> -> vector<4x16xf32>
    %c1_293 = arith.constant 1 : index
    %c0_294 = arith.constant 0 : index
    %c0_295 = arith.constant 0 : index
    %247 = vector.load %arg3[%c1_293, %c0_294, %c0_295] : memref<4x8x4xf32, #tpu.memory_space<vmem>>, vector<1x8x4xf32>
    %248 = vector.shape_cast %247 : vector<1x8x4xf32> to vector<8x4xf32>
    %cst_296 = arith.constant dense<0.000000e+00> : vector<8x16xf32>
    %249 = tpu.matmul %248, %246, %cst_296 {dimension_numbers = #tpu.dot_dimension_numbers<[1], [0], [0], [1], [0, 0, 1, 1], [], []>} : vector<8x4xf32>, vector<4x16xf32>, vector<8x16xf32> -> vector<8x16xf32>
    %250 = arith.addf %243, %249 : vector<8x16xf32>
    %c0_297 = arith.constant 0 : index
    %c0_298 = arith.constant 0 : index
    %c13 = arith.constant 13 : index
    %c0_299 = arith.constant 0 : index
    %251 = vector.load %arg2[%c0_297, %c0_298, %c13, %c0_299] : memref<1x4x16x32xf32, #tpu.memory_space<vmem>>, vector<1x4x1x32xf32>
    %252 = vector.shape_cast %251 : vector<1x4x1x32xf32> to vector<4x32xf32>
    %c0_300 = arith.constant 0 : index
    %c0_301 = arith.constant 0 : index
    %c0_302 = arith.constant 0 : index
    %253 = vector.load %arg4[%c0_300, %c0_301, %c0_302] : memref<2x32x16xf32, #tpu.memory_space<vmem>>, vector<1x32x16xf32>
    %254 = vector.shape_cast %253 : vector<1x32x16xf32> to vector<32x16xf32>
    %cst_303 = arith.constant dense<0.000000e+00> : vector<4x16xf32>
    %255 = tpu.matmul %252, %254, %cst_303 {dimension_numbers = #tpu.dot_dimension_numbers<[1], [0], [0], [1], [0, 0, 1, 1], [], []>} : vector<4x32xf32>, vector<32x16xf32>, vector<4x16xf32> -> vector<4x16xf32>
    %c2_304 = arith.constant 2 : index
    %c0_305 = arith.constant 0 : index
    %c0_306 = arith.constant 0 : index
    %256 = vector.load %arg3[%c2_304, %c0_305, %c0_306] : memref<4x8x4xf32, #tpu.memory_space<vmem>>, vector<1x8x4xf32>
    %257 = vector.shape_cast %256 : vector<1x8x4xf32> to vector<8x4xf32>
    %cst_307 = arith.constant dense<0.000000e+00> : vector<8x16xf32>
    %258 = tpu.matmul %257, %255, %cst_307 {dimension_numbers = #tpu.dot_dimension_numbers<[1], [0], [0], [1], [0, 0, 1, 1], [], []>} : vector<8x4xf32>, vector<4x16xf32>, vector<8x16xf32> -> vector<8x16xf32>
    %259 = arith.addf %250, %258 : vector<8x16xf32>
    %c1_308 = arith.constant 1 : index
    %c0_309 = arith.constant 0 : index
    %c0_310 = arith.constant 0 : index
    %260 = vector.load %arg4[%c1_308, %c0_309, %c0_310] : memref<2x32x16xf32, #tpu.memory_space<vmem>>, vector<1x32x16xf32>
    %261 = vector.shape_cast %260 : vector<1x32x16xf32> to vector<32x16xf32>
    %cst_311 = arith.constant dense<0.000000e+00> : vector<4x16xf32>
    %262 = tpu.matmul %252, %261, %cst_311 {dimension_numbers = #tpu.dot_dimension_numbers<[1], [0], [0], [1], [0, 0, 1, 1], [], []>} : vector<4x32xf32>, vector<32x16xf32>, vector<4x16xf32> -> vector<4x16xf32>
    %c3_312 = arith.constant 3 : index
    %c0_313 = arith.constant 0 : index
    %c0_314 = arith.constant 0 : index
    %263 = vector.load %arg3[%c3_312, %c0_313, %c0_314] : memref<4x8x4xf32, #tpu.memory_space<vmem>>, vector<1x8x4xf32>
    %264 = vector.shape_cast %263 : vector<1x8x4xf32> to vector<8x4xf32>
    %cst_315 = arith.constant dense<0.000000e+00> : vector<8x16xf32>
    %265 = tpu.matmul %264, %262, %cst_315 {dimension_numbers = #tpu.dot_dimension_numbers<[1], [0], [0], [1], [0, 0, 1, 1], [], []>} : vector<8x4xf32>, vector<4x16xf32>, vector<8x16xf32> -> vector<8x16xf32>
    %266 = arith.addf %259, %265 : vector<8x16xf32>
    %c0_316 = arith.constant 0 : index
    %c0_317 = arith.constant 0 : index
    %267 = vector.load %arg9[%c0_316, %c0_317] : memref<8x16xf32, #tpu.memory_space<vmem>>, vector<8x16xf32>
    %268 = arith.addf %267, %266 : vector<8x16xf32>
    %c0_318 = arith.constant 0 : index
    %c0_319 = arith.constant 0 : index
    %269 = vector.load %arg9[%c0_318, %c0_319] : memref<8x16xf32, #tpu.memory_space<vmem>>, vector<8x16xf32>
    tpu.vector_store %arg9[%c0_318, %c0_319], %268 {strides = array<i32>} : memref<8x16xf32, #tpu.memory_space<vmem>>, vector<8x16xf32>,
    %c0_320 = arith.constant 0 : index
    %c0_321 = arith.constant 0 : index
    %270 = vector.load %arg10[%c0_320, %c0_321] : memref<8x16xf32, #tpu.memory_space<vmem>>, vector<8x16xf32>
    %271 = arith.mulf %266, %266 : vector<8x16xf32>
    %272 = arith.addf %270, %271 : vector<8x16xf32>
    %c0_322 = arith.constant 0 : index
    %c0_323 = arith.constant 0 : index
    %273 = vector.load %arg10[%c0_322, %c0_323] : memref<8x16xf32, #tpu.memory_space<vmem>>, vector<8x16xf32>
    tpu.vector_store %arg10[%c0_322, %c0_323], %272 {strides = array<i32>} : memref<8x16xf32, #tpu.memory_space<vmem>>, vector<8x16xf32>,
    %c0_324 = arith.constant 0 : index
    %c0_325 = arith.constant 0 : index
    %c14 = arith.constant 14 : index
    %c0_326 = arith.constant 0 : index
    %274 = vector.load %arg2[%c0_324, %c0_325, %c14, %c0_326] : memref<1x4x16x32xf32, #tpu.memory_space<vmem>>, vector<1x4x1x32xf32>
    %275 = vector.shape_cast %274 : vector<1x4x1x32xf32> to vector<4x32xf32>
    %c0_327 = arith.constant 0 : index
    %c0_328 = arith.constant 0 : index
    %c0_329 = arith.constant 0 : index
    %276 = vector.load %arg4[%c0_327, %c0_328, %c0_329] : memref<2x32x16xf32, #tpu.memory_space<vmem>>, vector<1x32x16xf32>
    %277 = vector.shape_cast %276 : vector<1x32x16xf32> to vector<32x16xf32>
    %cst_330 = arith.constant dense<0.000000e+00> : vector<4x16xf32>
    %278 = tpu.matmul %275, %277, %cst_330 {dimension_numbers = #tpu.dot_dimension_numbers<[1], [0], [0], [1], [0, 0, 1, 1], [], []>} : vector<4x32xf32>, vector<32x16xf32>, vector<4x16xf32> -> vector<4x16xf32>
    %c0_331 = arith.constant 0 : index
    %c0_332 = arith.constant 0 : index
    %c0_333 = arith.constant 0 : index
    %279 = vector.load %arg3[%c0_331, %c0_332, %c0_333] : memref<4x8x4xf32, #tpu.memory_space<vmem>>, vector<1x8x4xf32>
    %280 = vector.shape_cast %279 : vector<1x8x4xf32> to vector<8x4xf32>
    %cst_334 = arith.constant dense<0.000000e+00> : vector<8x16xf32>
    %281 = tpu.matmul %280, %278, %cst_334 {dimension_numbers = #tpu.dot_dimension_numbers<[1], [0], [0], [1], [0, 0, 1, 1], [], []>} : vector<8x4xf32>, vector<4x16xf32>, vector<8x16xf32> -> vector<8x16xf32>
    %c1_335 = arith.constant 1 : index
    %c0_336 = arith.constant 0 : index
    %c0_337 = arith.constant 0 : index
    %282 = vector.load %arg4[%c1_335, %c0_336, %c0_337] : memref<2x32x16xf32, #tpu.memory_space<vmem>>, vector<1x32x16xf32>
    %283 = vector.shape_cast %282 : vector<1x32x16xf32> to vector<32x16xf32>
    %cst_338 = arith.constant dense<0.000000e+00> : vector<4x16xf32>
    %284 = tpu.matmul %275, %283, %cst_338 {dimension_numbers = #tpu.dot_dimension_numbers<[1], [0], [0], [1], [0, 0, 1, 1], [], []>} : vector<4x32xf32>, vector<32x16xf32>, vector<4x16xf32> -> vector<4x16xf32>
    %c1_339 = arith.constant 1 : index
    %c0_340 = arith.constant 0 : index
    %c0_341 = arith.constant 0 : index
    %285 = vector.load %arg3[%c1_339, %c0_340, %c0_341] : memref<4x8x4xf32, #tpu.memory_space<vmem>>, vector<1x8x4xf32>
    %286 = vector.shape_cast %285 : vector<1x8x4xf32> to vector<8x4xf32>
    %cst_342 = arith.constant dense<0.000000e+00> : vector<8x16xf32>
    %287 = tpu.matmul %286, %284, %cst_342 {dimension_numbers = #tpu.dot_dimension_numbers<[1], [0], [0], [1], [0, 0, 1, 1], [], []>} : vector<8x4xf32>, vector<4x16xf32>, vector<8x16xf32> -> vector<8x16xf32>
    %288 = arith.addf %281, %287 : vector<8x16xf32>
    %c0_343 = arith.constant 0 : index
    %c0_344 = arith.constant 0 : index
    %c15 = arith.constant 15 : index
    %c0_345 = arith.constant 0 : index
    %289 = vector.load %arg2[%c0_343, %c0_344, %c15, %c0_345] : memref<1x4x16x32xf32, #tpu.memory_space<vmem>>, vector<1x4x1x32xf32>
    %290 = vector.shape_cast %289 : vector<1x4x1x32xf32> to vector<4x32xf32>
    %c0_346 = arith.constant 0 : index
    %c0_347 = arith.constant 0 : index
    %c0_348 = arith.constant 0 : index
    %291 = vector.load %arg4[%c0_346, %c0_347, %c0_348] : memref<2x32x16xf32, #tpu.memory_space<vmem>>, vector<1x32x16xf32>
    %292 = vector.shape_cast %291 : vector<1x32x16xf32> to vector<32x16xf32>
    %cst_349 = arith.constant dense<0.000000e+00> : vector<4x16xf32>
    %293 = tpu.matmul %290, %292, %cst_349 {dimension_numbers = #tpu.dot_dimension_numbers<[1], [0], [0], [1], [0, 0, 1, 1], [], []>} : vector<4x32xf32>, vector<32x16xf32>, vector<4x16xf32> -> vector<4x16xf32>
    %c2_350 = arith.constant 2 : index
    %c0_351 = arith.constant 0 : index
    %c0_352 = arith.constant 0 : index
    %294 = vector.load %arg3[%c2_350, %c0_351, %c0_352] : memref<4x8x4xf32, #tpu.memory_space<vmem>>, vector<1x8x4xf32>
    %295 = vector.shape_cast %294 : vector<1x8x4xf32> to vector<8x4xf32>
    %cst_353 = arith.constant dense<0.000000e+00> : vector<8x16xf32>
    %296 = tpu.matmul %295, %293, %cst_353 {dimension_numbers = #tpu.dot_dimension_numbers<[1], [0], [0], [1], [0, 0, 1, 1], [], []>} : vector<8x4xf32>, vector<4x16xf32>, vector<8x16xf32> -> vector<8x16xf32>
    %297 = arith.addf %288, %296 : vector<8x16xf32>
    %c1_354 = arith.constant 1 : index
    %c0_355 = arith.constant 0 : index
    %c0_356 = arith.constant 0 : index
    %298 = vector.load %arg4[%c1_354, %c0_355, %c0_356] : memref<2x32x16xf32, #tpu.memory_space<vmem>>, vector<1x32x16xf32>
    %299 = vector.shape_cast %298 : vector<1x32x16xf32> to vector<32x16xf32>
    %cst_357 = arith.constant dense<0.000000e+00> : vector<4x16xf32>
    %300 = tpu.matmul %290, %299, %cst_357 {dimension_numbers = #tpu.dot_dimension_numbers<[1], [0], [0], [1], [0, 0, 1, 1], [], []>} : vector<4x32xf32>, vector<32x16xf32>, vector<4x16xf32> -> vector<4x16xf32>
    %c3_358 = arith.constant 3 : index
    %c0_359 = arith.constant 0 : index
    %c0_360 = arith.constant 0 : index
    %301 = vector.load %arg3[%c3_358, %c0_359, %c0_360] : memref<4x8x4xf32, #tpu.memory_space<vmem>>, vector<1x8x4xf32>
    %302 = vector.shape_cast %301 : vector<1x8x4xf32> to vector<8x4xf32>
    %cst_361 = arith.constant dense<0.000000e+00> : vector<8x16xf32>
    %303 = tpu.matmul %302, %300, %cst_361 {dimension_numbers = #tpu.dot_dimension_numbers<[1], [0], [0], [1], [0, 0, 1, 1], [], []>} : vector<8x4xf32>, vector<4x16xf32>, vector<8x16xf32> -> vector<8x16xf32>
    %304 = arith.addf %297, %303 : vector<8x16xf32>
    %c0_362 = arith.constant 0 : index
    %c0_363 = arith.constant 0 : index
    %305 = vector.load %arg9[%c0_362, %c0_363] : memref<8x16xf32, #tpu.memory_space<vmem>>, vector<8x16xf32>
    %306 = arith.addf %305, %304 : vector<8x16xf32>
    %c0_364 = arith.constant 0 : index
    %c0_365 = arith.constant 0 : index
    %307 = vector.load %arg9[%c0_364, %c0_365] : memref<8x16xf32, #tpu.memory_space<vmem>>, vector<8x16xf32>
    tpu.vector_store %arg9[%c0_364, %c0_365], %306 {strides = array<i32>} : memref<8x16xf32, #tpu.memory_space<vmem>>, vector<8x16xf32>,
    %c0_366 = arith.constant 0 : index
    %c0_367 = arith.constant 0 : index
    %308 = vector.load %arg10[%c0_366, %c0_367] : memref<8x16xf32, #tpu.memory_space<vmem>>, vector<8x16xf32>
    %309 = arith.mulf %304, %304 : vector<8x16xf32>
    %310 = arith.addf %308, %309 : vector<8x16xf32>
    %c0_368 = arith.constant 0 : index
    %c0_369 = arith.constant 0 : index
    %311 = vector.load %arg10[%c0_368, %c0_369] : memref<8x16xf32, #tpu.memory_space<vmem>>, vector<8x16xf32>
    tpu.vector_store %arg10[%c0_368, %c0_369], %310 {strides = array<i32>} : memref<8x16xf32, #tpu.memory_space<vmem>>, vector<8x16xf32>,
    %312 = arith.extui %5 : i1 to i32
    %c0_i32_370 = arith.constant 0 : i32
    %313 = arith.cmpi ne, %312, %c0_i32_370 : i32
    scf.if %313 {
      %c0_371 = arith.constant 0 : index
      %c0_372 = arith.constant 0 : index
      %314 = vector.load %arg9[%c0_371, %c0_372] : memref<8x16xf32, #tpu.memory_space<vmem>>, vector<8x16xf32>
      %cst_373 = arith.constant dense<0.000000e+00> : vector<8xf32>
      %315 = vector.multi_reduction <add>, %314, %cst_373 [1] : vector<8x16xf32> to vector<8xf32>
      %316 = vector.shape_cast %315 : vector<8xf32> to vector<8x1xf32>
      %cst_374 = arith.constant 0.001953125 : f32
      %317 = vector.broadcast %cst_374 : f32 to vector<8x1xf32>
      %318 = arith.mulf %316, %317 : vector<8x1xf32>
      %c0_375 = arith.constant 0 : index
      %c0_376 = arith.constant 0 : index
      %319 = vector.load %arg10[%c0_375, %c0_376] : memref<8x16xf32, #tpu.memory_space<vmem>>, vector<8x16xf32>
      %cst_377 = arith.constant dense<0.000000e+00> : vector<8xf32>
      %320 = vector.multi_reduction <add>, %319, %cst_377 [1] : vector<8x16xf32> to vector<8xf32>
      %321 = vector.shape_cast %320 : vector<8xf32> to vector<8x1xf32>
      %cst_378 = arith.constant 0.001953125 : f32
      %322 = vector.broadcast %cst_378 : f32 to vector<8x1xf32>
      %323 = arith.mulf %321, %322 : vector<8x1xf32>
      %324 = arith.mulf %318, %318 : vector<8x1xf32>
      %325 = arith.subf %323, %324 : vector<8x1xf32>
      %cst_379 = arith.constant 0.000000e+00 : f32
      %326 = vector.broadcast %cst_379 : f32 to vector<8x1xf32>
      %327 = arith.maximumf %325, %326 : vector<8x1xf32>
      %c0_380 = arith.constant 0 : index
      %c0_381 = arith.constant 0 : index
      %328 = vector.load %arg5[%c0_380, %c0_381] : memref<8x1xf32, #tpu.memory_space<vmem>>, vector<8x1xf32>
      %cst_382 = arith.constant 9.99999974E-6 : f32
      %329 = vector.broadcast %cst_382 : f32 to vector<8x1xf32>
      %330 = arith.addf %327, %329 : vector<8x1xf32>
      %331 = math.rsqrt %330 : vector<8x1xf32>
      %332 = arith.mulf %328, %331 : vector<8x1xf32>
      %c0_383 = arith.constant 0 : index
      %c0_384 = arith.constant 0 : index
      %333 = vector.load %arg7[%c0_383, %c0_384] : memref<8x1xf32, #tpu.memory_space<vmem>>, vector<8x1xf32>
      tpu.vector_store %arg7[%c0_383, %c0_384], %332 {strides = array<i32>} : memref<8x1xf32, #tpu.memory_space<vmem>>, vector<8x1xf32>,
      %c0_385 = arith.constant 0 : index
      %c0_386 = arith.constant 0 : index
      %334 = vector.load %arg6[%c0_385, %c0_386] : memref<8x1xf32, #tpu.memory_space<vmem>>, vector<8x1xf32>
      %335 = arith.mulf %332, %318 : vector<8x1xf32>
      %336 = arith.subf %334, %335 : vector<8x1xf32>
      %c0_387 = arith.constant 0 : index
      %c0_388 = arith.constant 0 : index
      %337 = vector.load %arg8[%c0_387, %c0_388] : memref<8x1xf32, #tpu.memory_space<vmem>>, vector<8x1xf32>
      tpu.vector_store %arg8[%c0_387, %c0_388], %336 {strides = array<i32>} : memref<8x1xf32, #tpu.memory_space<vmem>>, vector<8x1xf32>,
    } else {
    }
    return
  }
  func.func @transform_0(%arg0: i32, %arg1: i32) -> (i32, i32, i32, i32) {
    %c0_i32 = arith.constant 0 : i32
    %c0_i32_0 = arith.constant 0 : i32
    %c0_i32_1 = arith.constant 0 : i32
    return %arg0, %c0_i32, %arg1, %c0_i32_0 : i32, i32, i32, i32
  }
  func.func @transform_1(%arg0: i32, %arg1: i32) -> (i32, i32, i32) {
    %c0_i32 = arith.constant 0 : i32
    %c0_i32_0 = arith.constant 0 : i32
    %c0_i32_1 = arith.constant 0 : i32
    %c0_i32_2 = arith.constant 0 : i32
    return %c0_i32, %c0_i32_0, %c0_i32_1 : i32, i32, i32
  }
  func.func @transform_2(%arg0: i32, %arg1: i32) -> (i32, i32, i32) {
    %c0_i32 = arith.constant 0 : i32
    %c0_i32_0 = arith.constant 0 : i32
    %c0_i32_1 = arith.constant 0 : i32
    %c0_i32_2 = arith.constant 0 : i32
    return %c0_i32, %c0_i32_0, %c0_i32_1 : i32, i32, i32
  }
  func.func @transform_3(%arg0: i32, %arg1: i32) -> (i32, i32) {
    %c0_i32 = arith.constant 0 : i32
    %c0_i32_0 = arith.constant 0 : i32
    %c0_i32_1 = arith.constant 0 : i32
    return %c0_i32, %c0_i32_0 : i32, i32
  }
  func.func @transform_4(%arg0: i32, %arg1: i32) -> (i32, i32) {
    %c0_i32 = arith.constant 0 : i32
    %c0_i32_0 = arith.constant 0 : i32
    %c0_i32_1 = arith.constant 0 : i32
    return %c0_i32, %c0_i32_0 : i32, i32
  }
  func.func @transform_5(%arg0: i32, %arg1: i32) -> (i32, i32) {
    %c0_i32 = arith.constant 0 : i32
    %c0_i32_0 = arith.constant 0 : i32
    %c0_i32_1 = arith.constant 0 : i32
    return %c0_i32, %c0_i32_0 : i32, i32
  }
  func.func @transform_6(%arg0: i32, %arg1: i32) -> (i32, i32) {
    %c0_i32 = arith.constant 0 : i32
    %c0_i32_0 = arith.constant 0 : i32
    %c0_i32_1 = arith.constant 0 : i32
    return %c0_i32, %c0_i32_0 : i32, i32
  }
}

</mosaic_0001>

<llo_original>
// kernel: tpu_custom_call.1
$region0: #{tpu_custom_call.1}
  #allocation0 [shape = 'u32[]', space=smem, size = 0x4, offset = 0x4, fixed_abs, tag = 'smem constant byte address 0x4 - core index']
  #allocation1 [shape = 'u32[72,128]{1,0:T(1,128)}', space=vmem, size = 0x9000, scoped, tag = 'internal scratch']
  #allocation2 [shape = 'f32[8,16]{1,0:T(8,128)}', space=vmem, size = 0x1000, scoped, tag = 'scratch operand']
  #allocation3 [shape = 'f32[8,16]{1,0:T(8,128)}', space=vmem, size = 0x1000, scoped, tag = 'scratch operand']
  #allocation6 [shape = 's32[]', space=sflag, size = 0x4, offset = 0, fixed_abs, tag = 'sflag constant byte address 0x0 - dummy sync flag']
  %s0 = inlined_call_operand.hbm [shape: f32[2,4,32,32], index: 0, kind: input, shape index: {}]
  %s1 = inlined_call_operand.vmem [shape: f32[4,8,4], index: 1, kind: input, shape index: {}]
  %s2 = inlined_call_operand.vmem [shape: f32[2,32,16], index: 2, kind: input, shape index: {}]
  %s3 = inlined_call_operand.vmem [shape: f32[8,1], index: 3, kind: input, shape index: {}]
  %s4 = inlined_call_operand.vmem [shape: f32[8,1], index: 4, kind: input, shape index: {}]
  %s5 = inlined_call_operand.vmem [shape: f32[8,1], index: 5, kind: output, shape index: {0}]
  %s6 = inlined_call_operand.vmem [shape: f32[8,1], index: 6, kind: output, shape index: {1}]
  %7 = xla_tuple %s5, %s6
  %s8 = sld [smem:[#allocation0]]
  $region73: #{tpu_custom_call.1} parent=0
    _
  %s10 = ssub.s32 1, %s8
  %s11 = scalar_select 0, %s10, %s8
  $region1: #{tpu_custom_call.1} parent=0
    #allocation4 [shape = 'u8[65536]{0}', space=vmem, size = 0x10000, scoped, tag = 'input window, operand 0']
    #allocation5 [shape = 's32[2]{0}', space=sflag, size = 0x8, scoped, tag = 'scoped memory for tpu_custom_call.1']
    %12 = vsyncpa [#allocation5], 0
    %s13 = scalar_lea.sflag [#allocation5], 1
    %14 = vsyncpa %s13, 0
    loop: start=0, step=1, limit=6
    $region2: #{tpu_custom_call.1} parent=1 // loop_pre_header
      _
    $region3: #{tpu_custom_call.1} parent=1 // loop_header
      %s16 = sphi 0, %s20
      %p17 = scmp.ge.s32.totalorder %s16, 6
      %s23 = sphi 0, %s35
      %s24 = sphi 0, %s31
      %s25 = sphi 0, %s23
      %s26 = sphi 0, %s24
      %s27 = sphi 0, %s25
      %s28 = sphi 0, %s26
      %s40 = sphi 0, %s42
      %s43 = sphi 0, %s40
      %s44 = sphi 0, %s43
      %s60 = sphi 0, %s44
      %s64 = sphi 0, %s64
      %s66 = sphi 0, %s64
      %s67 = sphi 0, %s66
      %s81 = sphi 0, %s67
      %s85 = sphi 0, %s85
      %s87 = sphi 0, %s85
      %s88 = sphi 0, %s87
      %s102 = sphi 0, %s88
      %s106 = sphi 0, %s106
      %s108 = sphi 0, %s106
      %s109 = sphi 0, %s108
      %s123 = sphi 0, %s109
      %s127 = sphi 0, %s127
      %s129 = sphi 0, %s127
      %s130 = sphi 0, %s129
      %s144 = sphi 0, %s130
      %s148 = sphi 0, %s148
      %s150 = sphi 0, %s148
      %s151 = sphi 0, %s150
      %s165 = sphi 0, %s151
      %s169 = sphi 0, %s169
      %s171 = sphi 0, %s169
      %s172 = sphi 0, %s171
      %s186 = sphi 0, %s172
    $region4: #{tpu_custom_call.1} parent=1 // loop_header_branch
      %19 = sbr.rel (%p17) target = $region8
    $region5: #{tpu_custom_call.1} parent=1 // loop_body
      %s21 = ssub.s32 %s16, 1
      %s22 = ssub.s32 %s16, 2
      %s29 = sadd.s32 1, %s24
      %p30 = scmp.ge.s32.totalorder %s29, 2
      %s31 = scalar_select %p30, 0, %s29
      %s32 = sadd.s32 1, %s23
      %s33 = scalar_select %p30, %s32, %s23
      %p34 = scmp.ge.s32.totalorder %s33, 2
      %s35 = scalar_select %p34, 0, %s33
      %s36 = ssub.s32 %s23, %s35
      %s37 = ssub.s32 %s24, %s31
      %s38 = sor.u32 %s36, %s37
      %p39 = scmp.eq.s32.totalorder %s38, 0
      %s41 = sadd.s32 %s40, 1
      %s42 = scalar_select %p39, %s40, %s41
      %p45 = pneg %p39
      %p46 = scmp.eq.s32.totalorder %s16, 3
      %p47 = por %p45, %p46
      %p48 = scmp.ne.s32.totalorder %s40, %s43
      %p49 = scmp.eq.s32.totalorder %s16, 0
      %p50 = por %p48, %p49
      %p51 = scmp.ne.s32.totalorder %s40, %s43
      %p52 = scmp.eq.s32.totalorder %s21, 3
      %p53 = por %p51, %p52
      %p54 = scmp.ne.s32.totalorder %s43, %s44
      %p55 = scmp.eq.s32.totalorder %s21, 0
      %p56 = por %p54, %p55
      %p57 = scmp.ne.s32.totalorder %s43, %s44
      %p58 = scmp.eq.s32.totalorder %s22, 3
      %p59 = por %p57, %p58
      %p61 = scmp.ne.s32.totalorder %s44, %s60
      %p62 = scmp.eq.s32.totalorder %s22, 0
      %p63 = por %p61, %p62
      %s65 = sadd.s32 %s64, 1
      %p68 = scmp.eq.s32.totalorder %s16, 3
      %p69 = scmp.ne.s32.totalorder %s64, %s66
      %p70 = scmp.eq.s32.totalorder %s16, 0
      %p71 = por %p69, %p70
      %p72 = scmp.ne.s32.totalorder %s64, %s66
      %p73 = scmp.eq.s32.totalorder %s21, 3
      %p74 = por %p72, %p73
      %p75 = scmp.ne.s32.totalorder %s66, %s67
      %p76 = scmp.eq.s32.totalorder %s21, 0
      %p77 = por %p75, %p76
      %p78 = scmp.ne.s32.totalorder %s66, %s67
      %p79 = scmp.eq.s32.totalorder %s22, 3
      %p80 = por %p78, %p79
      %p82 = scmp.ne.s32.totalorder %s67, %s81
      %p83 = scmp.eq.s32.totalorder %s22, 0
      %p84 = por %p82, %p83
      %s86 = sadd.s32 %s85, 1
      %p89 = scmp.eq.s32.totalorder %s16, 3
      %p90 = scmp.ne.s32.totalorder %s85, %s87
      %p91 = scmp.eq.s32.totalorder %s16, 0
      %p92 = por %p90, %p91
      %p93 = scmp.ne.s32.totalorder %s85, %s87
      %p94 = scmp.eq.s32.totalorder %s21, 3
      %p95 = por %p93, %p94
      %p96 = scmp.ne.s32.totalorder %s87, %s88
      %p97 = scmp.eq.s32.totalorder %s21, 0
      %p98 = por %p96, %p97
      %p99 = scmp.ne.s32.totalorder %s87, %s88
      %p100 = scmp.eq.s32.totalorder %s22, 3
      %p101 = por %p99, %p100
      %p103 = scmp.ne.s32.totalorder %s88, %s102
      %p104 = scmp.eq.s32.totalorder %s22, 0
      %p105 = por %p103, %p104
      %s107 = sadd.s32 %s106, 1
      %p110 = scmp.eq.s32.totalorder %s16, 3
      %p111 = scmp.ne.s32.totalorder %s106, %s108
      %p112 = scmp.eq.s32.totalorder %s16, 0
      %p113 = por %p111, %p112
      %p114 = scmp.ne.s32.totalorder %s106, %s108
      %p115 = scmp.eq.s32.totalorder %s21, 3
      %p116 = por %p114, %p115
      %p117 = scmp.ne.s32.totalorder %s108, %s109
      %p118 = scmp.eq.s32.totalorder %s21, 0
      %p119 = por %p117, %p118
      %p120 = scmp.ne.s32.totalorder %s108, %s109
      %p121 = scmp.eq.s32.totalorder %s22, 3
      %p122 = por %p120, %p121
      %p124 = scmp.ne.s32.totalorder %s109, %s123
      %p125 = scmp.eq.s32.totalorder %s22, 0
      %p126 = por %p124, %p125
      %s128 = sadd.s32 %s127, 1
      %p131 = scmp.eq.s32.totalorder %s16, 3
      %p132 = scmp.ne.s32.totalorder %s127, %s129
      %p133 = scmp.eq.s32.totalorder %s16, 0
      %p134 = por %p132, %p133
      %p135 = scmp.ne.s32.totalorder %s127, %s129
      %p136 = scmp.eq.s32.totalorder %s21, 3
      %p137 = por %p135, %p136
      %p138 = scmp.ne.s32.totalorder %s129, %s130
      %p139 = scmp.eq.s32.totalorder %s21, 0
      %p140 = por %p138, %p139
      %p141 = scmp.ne.s32.totalorder %s129, %s130
      %p142 = scmp.eq.s32.totalorder %s22, 3
      %p143 = por %p141, %p142
      %p145 = scmp.ne.s32.totalorder %s130, %s144
      %p146 = scmp.eq.s32.totalorder %s22, 0
      %p147 = por %p145, %p146
      %s149 = sadd.s32 %s148, 1
      %p152 = scmp.eq.s32.totalorder %s16, 3
      %p153 = scmp.ne.s32.totalorder %s148, %s150
      %p154 = scmp.eq.s32.totalorder %s16, 0
      %p155 = por %p153, %p154
      %p156 = scmp.ne.s32.totalorder %s148, %s150
      %p157 = scmp.eq.s32.totalorder %s21, 3
      %p158 = por %p156, %p157
      %p159 = scmp.ne.s32.totalorder %s150, %s151
      %p160 = scmp.eq.s32.totalorder %s21, 0
      %p161 = por %p159, %p160
      %p162 = scmp.ne.s32.totalorder %s150, %s151
      %p163 = scmp.eq.s32.totalorder %s22, 3
      %p164 = por %p162, %p163
      %p166 = scmp.ne.s32.totalorder %s151, %s165
      %p167 = scmp.eq.s32.totalorder %s22, 0
      %p168 = por %p166, %p167
      %s170 = sadd.s32 %s169, 1
      %p173 = scmp.eq.s32.totalorder %s16, 3
      %p174 = scmp.ne.s32.totalorder %s169, %s171
      %p175 = scmp.eq.s32.totalorder %s16, 0
      %p176 = por %p174, %p175
      %p177 = scmp.ne.s32.totalorder %s169, %s171
      %p178 = scmp.eq.s32.totalorder %s21, 3
      %p179 = por %p177, %p178
      %p180 = scmp.ne.s32.totalorder %s171, %s172
      %p181 = scmp.eq.s32.totalorder %s21, 0
      %p182 = por %p180, %p181
      %p183 = scmp.ne.s32.totalorder %s171, %s172
      %p184 = scmp.eq.s32.totalorder %s22, 3
      %p185 = por %p183, %p184
      %p187 = scmp.ne.s32.totalorder %s172, %s186
      %p188 = scmp.eq.s32.totalorder %s22, 0
      %p189 = por %p187, %p188
      %p190 = scmp.le.s32.totalorder 1, %s16
      %p191 = scmp.lt.s32.totalorder %s16, 5
      %p192 = pnand %p190, %p191
      %p193 = pneg %p192
      // Predicated region
      $region9: #{tpu_custom_call.1} parent=5 // pred_check
        _
      $region10: #{tpu_custom_call.1} parent=5 // pred_check_branch
        %195 = sbr.rel (%p192) target = $region12
      $region11: #{tpu_custom_call.1} parent=5 // pred_region
        %s196 = ssub.s32 %s16, 1
        // Predicated region
        $region13: #{tpu_custom_call.1} parent=11 // pred_check
          %p197 = pneg %p77
        $region14: #{tpu_custom_call.1} parent=11 // pred_check_branch
          %199 = sbr.rel (%p197) target = $region16
        $region15: #{tpu_custom_call.1} parent=11 // pred_region
          _
        $region16: #{tpu_custom_call.1} parent=11 // pred_fallthru
          _
        // Predicated region
        $region17: #{tpu_custom_call.1} parent=11 // pred_check
          %p200 = pneg %p98
        $region18: #{tpu_custom_call.1} parent=11 // pred_check_branch
          %202 = sbr.rel (%p200) target = $region20
        $region19: #{tpu_custom_call.1} parent=11 // pred_region
          _
        $region20: #{tpu_custom_call.1} parent=11 // pred_fallthru
          _
        // Predicated region
        $region21: #{tpu_custom_call.1} parent=11 // pred_check
          %p203 = pneg %p119
        $region22: #{tpu_custom_call.1} parent=11 // pred_check_branch
          %205 = sbr.rel (%p203) target = $region24
        $region23: #{tpu_custom_call.1} parent=11 // pred_region
          _
        $region24: #{tpu_custom_call.1} parent=11 // pred_fallthru
          _
        // Predicated region
        $region25: #{tpu_custom_call.1} parent=11 // pred_check
          %p206 = pneg %p140
        $region26: #{tpu_custom_call.1} parent=11 // pred_check_branch
          %208 = sbr.rel (%p206) target = $region28
        $region27: #{tpu_custom_call.1} parent=11 // pred_region
          _
        $region28: #{tpu_custom_call.1} parent=11 // pred_fallthru
          _
      $region12: #{tpu_custom_call.1} parent=5 // pred_fallthru
        _
      %p209 = scmp.lt.s32.totalorder %s16, 4
      // Predicated region
      $region29: #{tpu_custom_call.1} parent=5 // pred_check
        %p210 = pneg %p209
      $region30: #{tpu_custom_call.1} parent=5 // pred_check_branch
        %212 = sbr.rel (%p210) target = $region32
      $region31: #{tpu_custom_call.1} parent=5 // pred_region
        // Predicated region
        $region33: #{tpu_custom_call.1} parent=31 // pred_check
          %p213 = pneg %p50
        $region34: #{tpu_custom_call.1} parent=31 // pred_check_branch
          %215 = sbr.rel (%p213) target = $region36
        $region35: #{tpu_custom_call.1} parent=31 // pred_region
          #allocation7 [shape = 'u32[6]{0}', space=smem, size = 0x18, scoped, tag = 'DMA stride descriptor']
          %s216 = sand.u32 %s40, 1
          %s217 = scalar_lea.sflag [#allocation5], %s216
          %s218 = sand.u32 %s40, 1
          %s219 = smul.addr %s218, 64
          %s220 = scalar_lea.vmem [#allocation4], %s219
          %s221 = smul.u32 2, %s24
          %223 = vsyncadd %s217, 0
          %s224 = smul.addr %s23, 16
          %s225 = sadd.s32 %s221, %s224
          %s226 = smul.addr %s225, 8
          %s227 = scalar_lea.hbm %s0, %s226
          %s229 = sshll.u32 1, 14
          %s230 = sxor.u32 4294967295, %s229
          %s232 = sld [smem:[#allocation0]]
          %s233 = sadd.s32 2, %s232
          %s235 = sshll.u32 7, 26
          %s236 = sxor.u32 4294967295, %s235
          %s237 = sand.u32 0, %s236
          %s238 = sshll.u32 %s233, 26
          %s239 = sor.u32 %s237, %s238
          %s240 = sshll.u32 %s227, 4
          %s241 = int_to_ptr.hbm [resolvable:$true] %s240
          %s242 = sshll.u32 %s220, 4
          %s243 = int_to_ptr.vmem [resolvable:$true] %s242
          %249 = sst [smem:[#allocation7]] 512
          %s250 = scalar_lea.smem [#allocation7], 1
          %251 = sst [smem:[%s250]] 256
          %s252 = scalar_lea.smem [#allocation7], 2
          %253 = sst [smem:[%s252]] 2
          %s254 = scalar_lea.smem [#allocation7], 3
          %255 = sst [smem:[%s254]] 128
          %s256 = scalar_lea.smem [#allocation7], 4
          %257 = sst [smem:[%s256]] 128
          %s258 = scalar_lea.smem [#allocation7], 5
          %259 = sst [smem:[%s258]] 8
          %261 = dma.general %s241, 1024, %s243, %s217, [#allocation6], [#allocation7], %s239, 0
        $region36: #{tpu_custom_call.1} parent=31 // pred_fallthru
          _
      $region32: #{tpu_custom_call.1} parent=5 // pred_fallthru
        _
      %p262 = scmp.le.s32.totalorder 1, %s16
      %p263 = scmp.lt.s32.totalorder %s16, 5
      %p264 = pnand %p262, %p263
      %p265 = pneg %p264
      // Predicated region
      $region37: #{tpu_custom_call.1} parent=5 // pred_check
        _
      $region38: #{tpu_custom_call.1} parent=5 // pred_check_branch
        %267 = sbr.rel (%p264) target = $region40
      $region39: #{tpu_custom_call.1} parent=5 // pred_region
        %s268 = ssub.s32 %s16, 1
        %s269 = sand.u32 %s43, 1
        %s270 = scalar_lea.sflag [#allocation5], %s269
        %s271 = sand.u32 %s43, 1
        %s272 = smul.addr %s271, 64
        %s273 = scalar_lea.vmem [#allocation4], %s272
        // Predicated region
        $region41: #{tpu_custom_call.1} parent=39 // pred_check
          %p274 = pneg %p56
        $region42: #{tpu_custom_call.1} parent=39 // pred_check_branch
          %276 = sbr.rel (%p274) target = $region44
        $region43: #{tpu_custom_call.1} parent=39 // pred_region
          %278 = dma.done %s270, 1024
        $region44: #{tpu_custom_call.1} parent=39 // pred_fallthru
          _
        %s279 = sand.u32 %s43, 1
        %s280 = scalar_lea.sflag [#allocation5], %s279
        %s281 = sand.u32 %s43, 1
        %s282 = smul.addr %s281, 64
        %s283 = scalar_lea.vmem [#allocation4], %s282
        %p284 = pneg %p56
        %p285 = pneg %p53
        %p286 = pneg %p77
        %p287 = pneg %p74
        %p288 = pneg %p98
        %p289 = pneg %p95
        %p290 = pneg %p119
        %p291 = pneg %p116
        %p292 = pneg %p140
        %p293 = pneg %p137
        %p294 = pneg %p161
        %p295 = pneg %p158
        %p296 = pneg %p182
        %p297 = pneg %p179
        %s298 = smul.u32 2, %s26
        %p299 = scmp.eq.s32.totalorder %s25, 0
        %p300 = scmp.eq.s32.totalorder %s26, 0
        %p301 = pnand %p299, %p300
        %p302 = pneg %p301
        %p303 = scmp.eq.s32.totalorder %s25, 1
        %p304 = scmp.eq.s32.totalorder %s26, 1
        %p305 = pnand %p303, %p304
        %p306 = pneg %p305
        // Predicated region
        $region45: #{tpu_custom_call.1} parent=39 // pred_check
          _
        $region46: #{tpu_custom_call.1} parent=39 // pred_check_branch
          %308 = sbr.rel (%p301) target = $region48
        $region47: #{tpu_custom_call.1} parent=39 // pred_region
          %vm309 = vcmask 130048
          %310 = vst.msk [vmem:[#allocation2] sm:$0xff] %vm309, 0.0
          %311 = vst.msk [vmem:[#allocation3] sm:$0xff] %vm309, 0.0
        $region48: #{tpu_custom_call.1} parent=39 // pred_fallthru
          _
        %v312 = vld [vmem:[%s273] sm:$0x1]
        %v313 = vld [vmem:[%s273 + $0x10] sm:$0x1]
        %v314 = vld [vmem:[%s273 + $0x20] sm:$0x1]
        %v315 = vld [vmem:[%s273 + $0x30] sm:$0x1]
        %v316 = vld [vmem:[%s2] sm:$0xff]
        %v317 = vld [vmem:[%s2 + $0x8] sm:$0xff]
        %v318 = vld [vmem:[%s2 + $0x10] sm:$0xff]
        %v319 = vld [vmem:[%s2 + $0x18] sm:$0xff]
        %v324 = vrot.slane %v313, 7
        %vm325 = vcmask 1041409
        %v326 = vsel %vm325, %v324, %v312
        %v327 = vrot.slane %v314, 6
        %vm328 = vcmask 1042434
        %v329 = vsel %vm328, %v327, %v326
        %v330 = vrot.slane %v315, 5
        %vm331 = vcmask 1043459
        %v332 = vsel %vm331, %v330, %v329
        %vm333 = vcmask 261120
        %v334 = vsel %vm333, %v332, 0
        %336 = vmatpush.msra.mxu0 0.0
        %337 = vmatpush.msra.mxu0 0.0
        %338 = vmatpush.msra.mxu0 0.0
        %339 = vmatpush.msra.mxu0 0.0
        %340 = vmatpush.msra.mxu0 0.0
        %341 = vmatpush.msra.mxu0 0.0
        %342 = vmatpush.msra.mxu0 0.0
        %343 = vmatpush.msra.mxu0 0.0
        %344 = vmatpush.msra.mxu0 0.0
        %345 = vmatpush.msra.mxu0 0.0
        %346 = vmatpush.msra.mxu0 0.0
        %347 = vmatpush.msra.mxu0 0.0
        %348 = vmatpush.msra.mxu0 %v319
        %349 = vmatpush.msra.mxu0 %v318
        %350 = vmatpush.msra.mxu0 %v317
        %351 = vmatpush.msra.mxu0 %v316
        %352 = vmatmul.f32.gmra.mxu0 %v334
        %v353 = vpop.f32.mrf.mxu0
        %v354 = vadd.f32 0.0, %v353
        %355 = vdwg.mxu0
        %v356 = vld [vmem:[%s1] sm:$0xff]
        %s357 = scalar_lea.vmem %s2, 32
        %v358 = vld [vmem:[%s357] sm:$0xff]
        %v359 = vld [vmem:[%s357 + $0x8] sm:$0xff]
        %v360 = vld [vmem:[%s357 + $0x10] sm:$0xff]
        %v361 = vld [vmem:[%s357 + $0x18] sm:$0xff]
        %362 = vmatpush.msra.mxu0 0.0
        %363 = vmatpush.msra.mxu0 0.0
        %364 = vmatpush.msra.mxu0 0.0
        %365 = vmatpush.msra.mxu0 0.0
        %366 = vmatpush.msra.mxu0 0.0
        %367 = vmatpush.msra.mxu0 0.0
        %368 = vmatpush.msra.mxu0 0.0
        %369 = vmatpush.msra.mxu0 0.0
        %370 = vmatpush.msra.mxu0 0.0
        %371 = vmatpush.msra.mxu0 0.0
        %372 = vmatpush.msra.mxu0 0.0
        %373 = vmatpush.msra.mxu0 0.0
        %374 = vmatpush.msra.mxu0 %v361
        %375 = vmatpush.msra.mxu0 %v360
        %376 = vmatpush.msra.mxu0 %v359
        %377 = vmatpush.msra.mxu0 %v358
        %378 = vmatmul.f32.gmra.mxu0 %v334
        %v379 = vpop.f32.mrf.mxu0
        %v380 = vadd.f32 0.0, %v379
        %381 = vdwg.mxu0
        %s382 = scalar_lea.vmem %s1, 8
        %v383 = vld [vmem:[%s382] sm:$0xff]
        %vm384 = vcmask 31744
        %v386 = vsel %vm384, %v383, 0
        %vm388 = vcmask 1043456
        %v390 = vsel %vm388, %v380, 0
        %392 = vmatpush.msra.mxu0 0.0
        %393 = vmatpush.msra.mxu0 0.0
        %394 = vmatpush.msra.mxu0 0.0
        %395 = vmatpush.msra.mxu0 0.0
        %396 = vmatpush.msra.mxu0 0.0
        %397 = vmatpush.msra.mxu0 0.0
        %398 = vmatpush.msra.mxu0 0.0
        %399 = vmatpush.msra.mxu0 0.0
        %400 = vmatpush.msra.mxu0 0.0
        %401 = vmatpush.msra.mxu0 0.0
        %402 = vmatpush.msra.mxu0 0.0
        %403 = vmatpush.msra.mxu0 0.0
        %404 = vmatpush.msra.mxu0 0.0
        %405 = vmatpush.msra.mxu0 0.0
        %406 = vmatpush.msra.mxu0 0.0
        %407 = vmatpush.msra.mxu0 %v390
        %408 = vmatmul.f32.gmra.mxu0 %v386
        %v409 = vpop.f32.mrf.mxu0
        %v410 = vadd.f32 0.0, %v409
        %411 = vdwg.mxu0
        %v413 = vsel %vm384, %v356, 0
        %v416 = vsel %vm388, %v354, 0
        %418 = vmatpush.msra.mxu0 0.0
        %419 = vmatpush.msra.mxu0 0.0
        %420 = vmatpush.msra.mxu0 0.0
        %421 = vmatpush.msra.mxu0 0.0
        %422 = vmatpush.msra.mxu0 0.0
        %423 = vmatpush.msra.mxu0 0.0
        %424 = vmatpush.msra.mxu0 0.0
        %425 = vmatpush.msra.mxu0 0.0
        %426 = vmatpush.msra.mxu0 0.0
        %427 = vmatpush.msra.mxu0 0.0
        %428 = vmatpush.msra.mxu0 0.0
        %429 = vmatpush.msra.mxu0 0.0
        %430 = vmatpush.msra.mxu0 0.0
        %431 = vmatpush.msra.mxu0 0.0
        %432 = vmatpush.msra.mxu0 0.0
        %433 = vmatpush.msra.mxu0 %v416
        %434 = vmatmul.f32.gmra.mxu0 %v413
        %v435 = vpop.f32.mrf.mxu0
        %v436 = vadd.f32 %v410, %v435
        %437 = vdwg.mxu0
        %v438 = vld [vmem:[%s273 + $0x1] sm:$0x1]
        %v439 = vld [vmem:[%s273 + $0x11] sm:$0x1]
        %v440 = vld [vmem:[%s273 + $0x21] sm:$0x1]
        %v441 = vld [vmem:[%s273 + $0x31] sm:$0x1]
        %v446 = vrot.slane %v439, 7
        %v447 = vsel %vm325, %v446, %v438
        %v448 = vrot.slane %v440, 6
        %v449 = vsel %vm328, %v448, %v447
        %v450 = vrot.slane %v441, 5
        %v451 = vsel %vm331, %v450, %v449
        %v452 = vsel %vm333, %v451, 0
        %454 = vmatpush.msra.mxu0 0.0
        %455 = vmatpush.msra.mxu0 0.0
        %456 = vmatpush.msra.mxu0 0.0
        %457 = vmatpush.msra.mxu0 0.0
        %458 = vmatpush.msra.mxu0 0.0
        %459 = vmatpush.msra.mxu0 0.0
        %460 = vmatpush.msra.mxu0 0.0
        %461 = vmatpush.msra.mxu0 0.0
        %462 = vmatpush.msra.mxu0 0.0
        %463 = vmatpush.msra.mxu0 0.0
        %464 = vmatpush.msra.mxu0 0.0
        %465 = vmatpush.msra.mxu0 0.0
        %466 = vmatpush.msra.mxu0 %v319
        %467 = vmatpush.msra.mxu0 %v318
        %468 = vmatpush.msra.mxu0 %v317
        %469 = vmatpush.msra.mxu0 %v316
        %470 = vmatmul.f32.gmra.mxu0 %v452
        %v471 = vpop.f32.mrf.mxu0
        %v472 = vadd.f32 0.0, %v471
        %473 = vdwg.mxu0
        %s474 = scalar_lea.vmem %s1, 16
        %v475 = vld [vmem:[%s474] sm:$0xff]
        %v477 = vsel %vm384, %v475, 0
        %v480 = vsel %vm388, %v472, 0
        %482 = vmatpush.msra.mxu0 0.0
        %483 = vmatpush.msra.mxu0 0.0
        %484 = vmatpush.msra.mxu0 0.0
        %485 = vmatpush.msra.mxu0 0.0
        %486 = vmatpush.msra.mxu0 0.0
        %487 = vmatpush.msra.mxu0 0.0
        %488 = vmatpush.msra.mxu0 0.0
        %489 = vmatpush.msra.mxu0 0.0
        %490 = vmatpush.msra.mxu0 0.0
        %491 = vmatpush.msra.mxu0 0.0
        %492 = vmatpush.msra.mxu0 0.0
        %493 = vmatpush.msra.mxu0 0.0
        %494 = vmatpush.msra.mxu0 0.0
        %495 = vmatpush.msra.mxu0 0.0
        %496 = vmatpush.msra.mxu0 0.0
        %497 = vmatpush.msra.mxu0 %v480
        %498 = vmatmul.f32.gmra.mxu0 %v477
        %v499 = vpop.f32.mrf.mxu0
        %v500 = vadd.f32 0.0, %v499
        %501 = vdwg.mxu0
        %v502 = vadd.f32 %v436, %v500
        %503 = vmatpush.msra.mxu0 0.0
        %504 = vmatpush.msra.mxu0 0.0
        %505 = vmatpush.msra.mxu0 0.0
        %506 = vmatpush.msra.mxu0 0.0
        %507 = vmatpush.msra.mxu0 0.0
        %508 = vmatpush.msra.mxu0 0.0
        %509 = vmatpush.msra.mxu0 0.0
        %510 = vmatpush.msra.mxu0 0.0
        %511 = vmatpush.msra.mxu0 0.0
        %512 = vmatpush.msra.mxu0 0.0
        %513 = vmatpush.msra.mxu0 0.0
        %514 = vmatpush.msra.mxu0 0.0
        %515 = vmatpush.msra.mxu0 %v361
        %516 = vmatpush.msra.mxu0 %v360
        %517 = vmatpush.msra.mxu0 %v359
        %518 = vmatpush.msra.mxu0 %v358
        %519 = vmatmul.f32.gmra.mxu0 %v452
        %v520 = vpop.f32.mrf.mxu0
        %v521 = vadd.f32 0.0, %v520
        %522 = vdwg.mxu0
        %s523 = scalar_lea.vmem %s1, 24
        %v524 = vld [vmem:[%s523] sm:$0xff]
        %v526 = vsel %vm384, %v524, 0
        %v529 = vsel %vm388, %v521, 0
        %531 = vmatpush.msra.mxu0 0.0
        %532 = vmatpush.msra.mxu0 0.0
        %533 = vmatpush.msra.mxu0 0.0
        %534 = vmatpush.msra.mxu0 0.0
        %535 = vmatpush.msra.mxu0 0.0
        %536 = vmatpush.msra.mxu0 0.0
        %537 = vmatpush.msra.mxu0 0.0
        %538 = vmatpush.msra.mxu0 0.0
        %539 = vmatpush.msra.mxu0 0.0
        %540 = vmatpush.msra.mxu0 0.0
        %541 = vmatpush.msra.mxu0 0.0
        %542 = vmatpush.msra.mxu0 0.0
        %543 = vmatpush.msra.mxu0 0.0
        %544 = vmatpush.msra.mxu0 0.0
        %545 = vmatpush.msra.mxu0 0.0
        %546 = vmatpush.msra.mxu0 %v529
        %547 = vmatmul.f32.gmra.mxu0 %v526
        %v548 = vpop.f32.mrf.mxu0
        %v549 = vadd.f32 0.0, %v548
        %550 = vdwg.mxu0
        %v551 = vadd.f32 %v502, %v549
        %v552 = vld [vmem:[#allocation2] sm:$0xff]
        %v553 = vadd.f32 %v552, %v551
        %vm554 = vcmask 130048
        %555 = vst.msk [vmem:[#allocation2] sm:$0xff] %vm554, %v553
        %v556 = vld [vmem:[#allocation3] sm:$0xff]
        %v557 = vmul.f32 %v551, %v551
        %v558 = vadd.f32 %v556, %v557
        %559 = vst.msk [vmem:[#allocation3] sm:$0xff] %vm554, %v558
        %v560 = vld [vmem:[%s273 + $0x2] sm:$0x1]
        %v561 = vld [vmem:[%s273 + $0x12] sm:$0x1]
        %v562 = vld [vmem:[%s273 + $0x22] sm:$0x1]
        %v563 = vld [vmem:[%s273 + $0x32] sm:$0x1]
        %v564 = vld [vmem:[%s2] sm:$0xff]
        %v565 = vld [vmem:[%s2 + $0x8] sm:$0xff]
        %v566 = vld [vmem:[%s2 + $0x10] sm:$0xff]
        %v567 = vld [vmem:[%s2 + $0x18] sm:$0xff]
        %v572 = vrot.slane %v561, 7
        %v573 = vsel %vm325, %v572, %v560
        %v574 = vrot.slane %v562, 6
        %v575 = vsel %vm328, %v574, %v573
        %v576 = vrot.slane %v563, 5
        %v577 = vsel %vm331, %v576, %v575
        %v578 = vsel %vm333, %v577, 0
        %580 = vmatpush.msra.mxu0 0.0
        %581 = vmatpush.msra.mxu0 0.0
        %582 = vmatpush.msra.mxu0 0.0
        %583 = vmatpush.msra.mxu0 0.0
        %584 = vmatpush.msra.mxu0 0.0
        %585 = vmatpush.msra.mxu0 0.0
        %586 = vmatpush.msra.mxu0 0.0
        %587 = vmatpush.msra.mxu0 0.0
        %588 = vmatpush.msra.mxu0 0.0
        %589 = vmatpush.msra.mxu0 0.0
        %590 = vmatpush.msra.mxu0 0.0
        %591 = vmatpush.msra.mxu0 0.0
        %592 = vmatpush.msra.mxu0 %v567
        %593 = vmatpush.msra.mxu0 %v566
        %594 = vmatpush.msra.mxu0 %v565
        %595 = vmatpush.msra.mxu0 %v564
        %596 = vmatmul.f32.gmra.mxu0 %v578
        %v597 = vpop.f32.mrf.mxu0
        %v598 = vadd.f32 0.0, %v597
        %599 = vdwg.mxu0
        %v600 = vld [vmem:[%s1] sm:$0xff]
        %v601 = vld [vmem:[%s357] sm:$0xff]
        %v602 = vld [vmem:[%s357 + $0x8] sm:$0xff]
        %v603 = vld [vmem:[%s357 + $0x10] sm:$0xff]
        %v604 = vld [vmem:[%s357 + $0x18] sm:$0xff]
        %605 = vmatpush.msra.mxu0 0.0
        %606 = vmatpush.msra.mxu0 0.0
        %607 = vmatpush.msra.mxu0 0.0
        %608 = vmatpush.msra.mxu0 0.0
        %609 = vmatpush.msra.mxu0 0.0
        %610 = vmatpush.msra.mxu0 0.0
        %611 = vmatpush.msra.mxu0 0.0
        %612 = vmatpush.msra.mxu0 0.0
        %613 = vmatpush.msra.mxu0 0.0
        %614 = vmatpush.msra.mxu0 0.0
        %615 = vmatpush.msra.mxu0 0.0
        %616 = vmatpush.msra.mxu0 0.0
        %617 = vmatpush.msra.mxu0 %v604
        %618 = vmatpush.msra.mxu0 %v603
        %619 = vmatpush.msra.mxu0 %v602
        %620 = vmatpush.msra.mxu0 %v601
        %621 = vmatmul.f32.gmra.mxu0 %v578
        %v622 = vpop.f32.mrf.mxu0
        %v623 = vadd.f32 0.0, %v622
        %624 = vdwg.mxu0
        %v625 = vld [vmem:[%s382] sm:$0xff]
        %v627 = vsel %vm384, %v625, 0
        %v630 = vsel %vm388, %v623, 0
        %632 = vmatpush.msra.mxu0 0.0
        %633 = vmatpush.msra.mxu0 0.0
        %634 = vmatpush.msra.mxu0 0.0
        %635 = vmatpush.msra.mxu0 0.0
        %636 = vmatpush.msra.mxu0 0.0
        %637 = vmatpush.msra.mxu0 0.0
        %638 = vmatpush.msra.mxu0 0.0
        %639 = vmatpush.msra.mxu0 0.0
        %640 = vmatpush.msra.mxu0 0.0
        %641 = vmatpush.msra.mxu0 0.0
        %642 = vmatpush.msra.mxu0 0.0
        %643 = vmatpush.msra.mxu0 0.0
        %644 = vmatpush.msra.mxu0 0.0
        %645 = vmatpush.msra.mxu0 0.0
        %646 = vmatpush.msra.mxu0 0.0
        %647 = vmatpush.msra.mxu0 %v630
        %648 = vmatmul.f32.gmra.mxu0 %v627
        %v649 = vpop.f32.mrf.mxu0
        %v650 = vadd.f32 0.0, %v649
        %651 = vdwg.mxu0
        %v653 = vsel %vm384, %v600, 0
        %v656 = vsel %vm388, %v598, 0
        %658 = vmatpush.msra.mxu0 0.0
        %659 = vmatpush.msra.mxu0 0.0
        %660 = vmatpush.msra.mxu0 0.0
        %661 = vmatpush.msra.mxu0 0.0
        %662 = vmatpush.msra.mxu0 0.0
        %663 = vmatpush.msra.mxu0 0.0
        %664 = vmatpush.msra.mxu0 0.0
        %665 = vmatpush.msra.mxu0 0.0
        %666 = vmatpush.msra.mxu0 0.0
        %667 = vmatpush.msra.mxu0 0.0
        %668 = vmatpush.msra.mxu0 0.0
        %669 = vmatpush.msra.mxu0 0.0
        %670 = vmatpush.msra.mxu0 0.0
        %671 = vmatpush.msra.mxu0 0.0
        %672 = vmatpush.msra.mxu0 0.0
        %673 = vmatpush.msra.mxu0 %v656
        %674 = vmatmul.f32.gmra.mxu0 %v653
        %v675 = vpop.f32.mrf.mxu0
        %v676 = vadd.f32 %v650, %v675
        %677 = vdwg.mxu0
        %v678 = vld [vmem:[%s273 + $0x3] sm:$0x1]
        %v679 = vld [vmem:[%s273 + $0x13] sm:$0x1]
        %v680 = vld [vmem:[%s273 + $0x23] sm:$0x1]
        %v681 = vld [vmem:[%s273 + $0x33] sm:$0x1]
        %v686 = vrot.slane %v679, 7
        %v687 = vsel %vm325, %v686, %v678
        %v688 = vrot.slane %v680, 6
        %v689 = vsel %vm328, %v688, %v687
        %v690 = vrot.slane %v681, 5
        %v691 = vsel %vm331, %v690, %v689
        %v692 = vsel %vm333, %v691, 0
        %694 = vmatpush.msra.mxu0 0.0
        %695 = vmatpush.msra.mxu0 0.0
        %696 = vmatpush.msra.mxu0 0.0
        %697 = vmatpush.msra.mxu0 0.0
        %698 = vmatpush.msra.mxu0 0.0
        %699 = vmatpush.msra.mxu0 0.0
        %700 = vmatpush.msra.mxu0 0.0
        %701 = vmatpush.msra.mxu0 0.0
        %702 = vmatpush.msra.mxu0 0.0
        %703 = vmatpush.msra.mxu0 0.0
        %704 = vmatpush.msra.mxu0 0.0
        %705 = vmatpush.msra.mxu0 0.0
        %706 = vmatpush.msra.mxu0 %v567
        %707 = vmatpush.msra.mxu0 %v566
        %708 = vmatpush.msra.mxu0 %v565
        %709 = vmatpush.msra.mxu0 %v564
        %710 = vmatmul.f32.gmra.mxu0 %v692
        %v711 = vpop.f32.mrf.mxu0
        %v712 = vadd.f32 0.0, %v711
        %713 = vdwg.mxu0
        %v714 = vld [vmem:[%s474] sm:$0xff]
        %v716 = vsel %vm384, %v714, 0
        %v719 = vsel %vm388, %v712, 0
        %721 = vmatpush.msra.mxu0 0.0
        %722 = vmatpush.msra.mxu0 0.0
        %723 = vmatpush.msra.mxu0 0.0
        %724 = vmatpush.msra.mxu0 0.0
        %725 = vmatpush.msra.mxu0 0.0
        %726 = vmatpush.msra.mxu0 0.0
        %727 = vmatpush.msra.mxu0 0.0
        %728 = vmatpush.msra.mxu0 0.0
        %729 = vmatpush.msra.mxu0 0.0
        %730 = vmatpush.msra.mxu0 0.0
        %731 = vmatpush.msra.mxu0 0.0
        %732 = vmatpush.msra.mxu0 0.0
        %733 = vmatpush.msra.mxu0 0.0
        %734 = vmatpush.msra.mxu0 0.0
        %735 = vmatpush.msra.mxu0 0.0
        %736 = vmatpush.msra.mxu0 %v719
        %737 = vmatmul.f32.gmra.mxu0 %v716
        %v738 = vpop.f32.mrf.mxu0
        %v739 = vadd.f32 0.0, %v738
        %740 = vdwg.mxu0
        %v741 = vadd.f32 %v676, %v739
        %742 = vmatpush.msra.mxu0 0.0
        %743 = vmatpush.msra.mxu0 0.0
        %744 = vmatpush.msra.mxu0 0.0
        %745 = vmatpush.msra.mxu0 0.0
        %746 = vmatpush.msra.mxu0 0.0
        %747 = vmatpush.msra.mxu0 0.0
        %748 = vmatpush.msra.mxu0 0.0
        %749 = vmatpush.msra.mxu0 0.0
        %750 = vmatpush.msra.mxu0 0.0
        %751 = vmatpush.msra.mxu0 0.0
        %752 = vmatpush.msra.mxu0 0.0
        %753 = vmatpush.msra.mxu0 0.0
        %754 = vmatpush.msra.mxu0 %v604
        %755 = vmatpush.msra.mxu0 %v603
        %756 = vmatpush.msra.mxu0 %v602
        %757 = vmatpush.msra.mxu0 %v601
        %758 = vmatmul.f32.gmra.mxu0 %v692
        %v759 = vpop.f32.mrf.mxu0
        %v760 = vadd.f32 0.0, %v759
        %761 = vdwg.mxu0
        %v762 = vld [vmem:[%s523] sm:$0xff]
        %v764 = vsel %vm384, %v762, 0
        %v767 = vsel %vm388, %v760, 0
        %769 = vmatpush.msra.mxu0 0.0
        %770 = vmatpush.msra.mxu0 0.0
        %771 = vmatpush.msra.mxu0 0.0
        %772 = vmatpush.msra.mxu0 0.0
        %773 = vmatpush.msra.mxu0 0.0
        %774 = vmatpush.msra.mxu0 0.0
        %775 = vmatpush.msra.mxu0 0.0
        %776 = vmatpush.msra.mxu0 0.0
        %777 = vmatpush.msra.mxu0 0.0
        %778 = vmatpush.msra.mxu0 0.0
        %779 = vmatpush.msra.mxu0 0.0
        %780 = vmatpush.msra.mxu0 0.0
        %781 = vmatpush.msra.mxu0 0.0
        %782 = vmatpush.msra.mxu0 0.0
        %783 = vmatpush.msra.mxu0 0.0
        %784 = vmatpush.msra.mxu0 %v767
        %785 = vmatmul.f32.gmra.mxu0 %v764
        %v786 = vpop.f32.mrf.mxu0
        %v787 = vadd.f32 0.0, %v786
        %788 = vdwg.mxu0
        %v789 = vadd.f32 %v741, %v787
        %v790 = vld [vmem:[#allocation2] sm:$0xff]
        %v791 = vadd.f32 %v790, %v789
        %792 = vst.msk [vmem:[#allocation2] sm:$0xff] %vm554, %v791
        %v793 = vld [vmem:[#allocation3] sm:$0xff]
        %v794 = vmul.f32 %v789, %v789
        %v795 = vadd.f32 %v793, %v794
        %796 = vst.msk [vmem:[#allocation3] sm:$0xff] %vm554, %v795
        %v797 = vld [vmem:[%s273 + $0x4] sm:$0x1]
        %v798 = vld [vmem:[%s273 + $0x14] sm:$0x1]
        %v799 = vld [vmem:[%s273 + $0x24] sm:$0x1]
        %v800 = vld [vmem:[%s273 + $0x34] sm:$0x1]
        %v801 = vld [vmem:[%s2] sm:$0xff]
        %v802 = vld [vmem:[%s2 + $0x8] sm:$0xff]
        %v803 = vld [vmem:[%s2 + $0x10] sm:$0xff]
        %v804 = vld [vmem:[%s2 + $0x18] sm:$0xff]
        %v809 = vrot.slane %v798, 7
        %v810 = vsel %vm325, %v809, %v797
        %v811 = vrot.slane %v799, 6
        %v812 = vsel %vm328, %v811, %v810
        %v813 = vrot.slane %v800, 5
        %v814 = vsel %vm331, %v813, %v812
        %v815 = vsel %vm333, %v814, 0
        %817 = vmatpush.msra.mxu0 0.0
        %818 = vmatpush.msra.mxu0 0.0
        %819 = vmatpush.msra.mxu0 0.0
        %820 = vmatpush.msra.mxu0 0.0
        %821 = vmatpush.msra.mxu0 0.0
        %822 = vmatpush.msra.mxu0 0.0
        %823 = vmatpush.msra.mxu0 0.0
        %824 = vmatpush.msra.mxu0 0.0
        %825 = vmatpush.msra.mxu0 0.0
        %826 = vmatpush.msra.mxu0 0.0
        %827 = vmatpush.msra.mxu0 0.0
        %828 = vmatpush.msra.mxu0 0.0
        %829 = vmatpush.msra.mxu0 %v804
        %830 = vmatpush.msra.mxu0 %v803
        %831 = vmatpush.msra.mxu0 %v802
        %832 = vmatpush.msra.mxu0 %v801
        %833 = vmatmul.f32.gmra.mxu0 %v815
        %v834 = vpop.f32.mrf.mxu0
        %v835 = vadd.f32 0.0, %v834
        %836 = vdwg.mxu0
        %v837 = vld [vmem:[%s1] sm:$0xff]
        %v838 = vld [vmem:[%s357] sm:$0xff]
        %v839 = vld [vmem:[%s357 + $0x8] sm:$0xff]
        %v840 = vld [vmem:[%s357 + $0x10] sm:$0xff]
        %v841 = vld [vmem:[%s357 + $0x18] sm:$0xff]
        %842 = vmatpush.msra.mxu0 0.0
        %843 = vmatpush.msra.mxu0 0.0
        %844 = vmatpush.msra.mxu0 0.0
        %845 = vmatpush.msra.mxu0 0.0
        %846 = vmatpush.msra.mxu0 0.0
        %847 = vmatpush.msra.mxu0 0.0
        %848 = vmatpush.msra.mxu0 0.0
        %849 = vmatpush.msra.mxu0 0.0
        %850 = vmatpush.msra.mxu0 0.0
        %851 = vmatpush.msra.mxu0 0.0
        %852 = vmatpush.msra.mxu0 0.0
        %853 = vmatpush.msra.mxu0 0.0
        %854 = vmatpush.msra.mxu0 %v841
        %855 = vmatpush.msra.mxu0 %v840
        %856 = vmatpush.msra.mxu0 %v839
        %857 = vmatpush.msra.mxu0 %v838
        %858 = vmatmul.f32.gmra.mxu0 %v815
        %v859 = vpop.f32.mrf.mxu0
        %v860 = vadd.f32 0.0, %v859
        %861 = vdwg.mxu0
        %v862 = vld [vmem:[%s382] sm:$0xff]
        %v864 = vsel %vm384, %v862, 0
        %v867 = vsel %vm388, %v860, 0
        %869 = vmatpush.msra.mxu0 0.0
        %870 = vmatpush.msra.mxu0 0.0
        %871 = vmatpush.msra.mxu0 0.0
        %872 = vmatpush.msra.mxu0 0.0
        %873 = vmatpush.msra.mxu0 0.0
        %874 = vmatpush.msra.mxu0 0.0
        %875 = vmatpush.msra.mxu0 0.0
        %876 = vmatpush.msra.mxu0 0.0
        %877 = vmatpush.msra.mxu0 0.0
        %878 = vmatpush.msra.mxu0 0.0
        %879 = vmatpush.msra.mxu0 0.0
        %880 = vmatpush.msra.mxu0 0.0
        %881 = vmatpush.msra.mxu0 0.0
        %882 = vmatpush.msra.mxu0 0.0
        %883 = vmatpush.msra.mxu0 0.0
        %884 = vmatpush.msra.mxu0 %v867
        %885 = vmatmul.f32.gmra.mxu0 %v864
        %v886 = vpop.f32.mrf.mxu0
        %v887 = vadd.f32 0.0, %v886
        %888 = vdwg.mxu0
        %v890 = vsel %vm384, %v837, 0
        %v893 = vsel %vm388, %v835, 0
        %895 = vmatpush.msra.mxu0 0.0
        %896 = vmatpush.msra.mxu0 0.0
        %897 = vmatpush.msra.mxu0 0.0
        %898 = vmatpush.msra.mxu0 0.0
        %899 = vmatpush.msra.mxu0 0.0
        %900 = vmatpush.msra.mxu0 0.0
        %901 = vmatpush.msra.mxu0 0.0
        %902 = vmatpush.msra.mxu0 0.0
        %903 = vmatpush.msra.mxu0 0.0
        %904 = vmatpush.msra.mxu0 0.0
        %905 = vmatpush.msra.mxu0 0.0
        %906 = vmatpush.msra.mxu0 0.0
        %907 = vmatpush.msra.mxu0 0.0
        %908 = vmatpush.msra.mxu0 0.0
        %909 = vmatpush.msra.mxu0 0.0
        %910 = vmatpush.msra.mxu0 %v893
        %911 = vmatmul.f32.gmra.mxu0 %v890
        %v912 = vpop.f32.mrf.mxu0
        %v913 = vadd.f32 %v887, %v912
        %914 = vdwg.mxu0
        %v915 = vld [vmem:[%s273 + $0x5] sm:$0x1]
        %v916 = vld [vmem:[%s273 + $0x15] sm:$0x1]
        %v917 = vld [vmem:[%s273 + $0x25] sm:$0x1]
        %v918 = vld [vmem:[%s273 + $0x35] sm:$0x1]
        %v923 = vrot.slane %v916, 7
        %v924 = vsel %vm325, %v923, %v915
        %v925 = vrot.slane %v917, 6
        %v926 = vsel %vm328, %v925, %v924
        %v927 = vrot.slane %v918, 5
        %v928 = vsel %vm331, %v927, %v926
        %v929 = vsel %vm333, %v928, 0
        %931 = vmatpush.msra.mxu0 0.0
        %932 = vmatpush.msra.mxu0 0.0
        %933 = vmatpush.msra.mxu0 0.0
        %934 = vmatpush.msra.mxu0 0.0
        %935 = vmatpush.msra.mxu0 0.0
        %936 = vmatpush.msra.mxu0 0.0
        %937 = vmatpush.msra.mxu0 0.0
        %938 = vmatpush.msra.mxu0 0.0
        %939 = vmatpush.msra.mxu0 0.0
        %940 = vmatpush.msra.mxu0 0.0
        %941 = vmatpush.msra.mxu0 0.0
        %942 = vmatpush.msra.mxu0 0.0
        %943 = vmatpush.msra.mxu0 %v804
        %944 = vmatpush.msra.mxu0 %v803
        %945 = vmatpush.msra.mxu0 %v802
        %946 = vmatpush.msra.mxu0 %v801
        %947 = vmatmul.f32.gmra.mxu0 %v929
        %v948 = vpop.f32.mrf.mxu0
        %v949 = vadd.f32 0.0, %v948
        %950 = vdwg.mxu0
        %v951 = vld [vmem:[%s474] sm:$0xff]
        %v953 = vsel %vm384, %v951, 0
        %v956 = vsel %vm388, %v949, 0
        %958 = vmatpush.msra.mxu0 0.0
        %959 = vmatpush.msra.mxu0 0.0
        %960 = vmatpush.msra.mxu0 0.0
        %961 = vmatpush.msra.mxu0 0.0
        %962 = vmatpush.msra.mxu0 0.0
        %963 = vmatpush.msra.mxu0 0.0
        %964 = vmatpush.msra.mxu0 0.0
        %965 = vmatpush.msra.mxu0 0.0
        %966 = vmatpush.msra.mxu0 0.0
        %967 = vmatpush.msra.mxu0 0.0
        %968 = vmatpush.msra.mxu0 0.0
        %969 = vmatpush.msra.mxu0 0.0
        %970 = vmatpush.msra.mxu0 0.0
        %971 = vmatpush.msra.mxu0 0.0
        %972 = vmatpush.msra.mxu0 0.0
        %973 = vmatpush.msra.mxu0 %v956
        %974 = vmatmul.f32.gmra.mxu0 %v953
        %v975 = vpop.f32.mrf.mxu0
        %v976 = vadd.f32 0.0, %v975
        %977 = vdwg.mxu0
        %v978 = vadd.f32 %v913, %v976
        %979 = vmatpush.msra.mxu0 0.0
        %980 = vmatpush.msra.mxu0 0.0
        %981 = vmatpush.msra.mxu0 0.0
        %982 = vmatpush.msra.mxu0 0.0
        %983 = vmatpush.msra.mxu0 0.0
        %984 = vmatpush.msra.mxu0 0.0
        %985 = vmatpush.msra.mxu0 0.0
        %986 = vmatpush.msra.mxu0 0.0
        %987 = vmatpush.msra.mxu0 0.0
        %988 = vmatpush.msra.mxu0 0.0
        %989 = vmatpush.msra.mxu0 0.0
        %990 = vmatpush.msra.mxu0 0.0
        %991 = vmatpush.msra.mxu0 %v841
        %992 = vmatpush.msra.mxu0 %v840
        %993 = vmatpush.msra.mxu0 %v839
        %994 = vmatpush.msra.mxu0 %v838
        %995 = vmatmul.f32.gmra.mxu0 %v929
        %v996 = vpop.f32.mrf.mxu0
        %v997 = vadd.f32 0.0, %v996
        %998 = vdwg.mxu0
        %v999 = vld [vmem:[%s523] sm:$0xff]
        %v1001 = vsel %vm384, %v999, 0
        %v1004 = vsel %vm388, %v997, 0
        %1006 = vmatpush.msra.mxu0 0.0
        %1007 = vmatpush.msra.mxu0 0.0
        %1008 = vmatpush.msra.mxu0 0.0
        %1009 = vmatpush.msra.mxu0 0.0
        %1010 = vmatpush.msra.mxu0 0.0
        %1011 = vmatpush.msra.mxu0 0.0
        %1012 = vmatpush.msra.mxu0 0.0
        %1013 = vmatpush.msra.mxu0 0.0
        %1014 = vmatpush.msra.mxu0 0.0
        %1015 = vmatpush.msra.mxu0 0.0
        %1016 = vmatpush.msra.mxu0 0.0
        %1017 = vmatpush.msra.mxu0 0.0
        %1018 = vmatpush.msra.mxu0 0.0
        %1019 = vmatpush.msra.mxu0 0.0
        %1020 = vmatpush.msra.mxu0 0.0
        %1021 = vmatpush.msra.mxu0 %v1004
        %1022 = vmatmul.f32.gmra.mxu0 %v1001
        %v1023 = vpop.f32.mrf.mxu0
        %v1024 = vadd.f32 0.0, %v1023
        %1025 = vdwg.mxu0
        %v1026 = vadd.f32 %v978, %v1024
        %v1027 = vld [vmem:[#allocation2] sm:$0xff]
        %v1028 = vadd.f32 %v1027, %v1026
        %1029 = vst.msk [vmem:[#allocation2] sm:$0xff] %vm554, %v1028
        %v1030 = vld [vmem:[#allocation3] sm:$0xff]
        %v1031 = vmul.f32 %v1026, %v1026
        %v1032 = vadd.f32 %v1030, %v1031
        %1033 = vst.msk [vmem:[#allocation3] sm:$0xff] %vm554, %v1032
        %v1034 = vld [vmem:[%s273 + $0x6] sm:$0x1]
        %v1035 = vld [vmem:[%s273 + $0x16] sm:$0x1]
        %v1036 = vld [vmem:[%s273 + $0x26] sm:$0x1]
        %v1037 = vld [vmem:[%s273 + $0x36] sm:$0x1]
        %v1038 = vld [vmem:[%s2] sm:$0xff]
        %v1039 = vld [vmem:[%s2 + $0x8] sm:$0xff]
        %v1040 = vld [vmem:[%s2 + $0x10] sm:$0xff]
        %v1041 = vld [vmem:[%s2 + $0x18] sm:$0xff]
        %v1046 = vrot.slane %v1035, 7
        %v1047 = vsel %vm325, %v1046, %v1034
        %v1048 = vrot.slane %v1036, 6
        %v1049 = vsel %vm328, %v1048, %v1047
        %v1050 = vrot.slane %v1037, 5
        %v1051 = vsel %vm331, %v1050, %v1049
        %v1052 = vsel %vm333, %v1051, 0
        %1054 = vmatpush.msra.mxu0 0.0
        %1055 = vmatpush.msra.mxu0 0.0
        %1056 = vmatpush.msra.mxu0 0.0
        %1057 = vmatpush.msra.mxu0 0.0
        %1058 = vmatpush.msra.mxu0 0.0
        %1059 = vmatpush.msra.mxu0 0.0
        %1060 = vmatpush.msra.mxu0 0.0
        %1061 = vmatpush.msra.mxu0 0.0
        %1062 = vmatpush.msra.mxu0 0.0
        %1063 = vmatpush.msra.mxu0 0.0
        %1064 = vmatpush.msra.mxu0 0.0
        %1065 = vmatpush.msra.mxu0 0.0
        %1066 = vmatpush.msra.mxu0 %v1041
        %1067 = vmatpush.msra.mxu0 %v1040
        %1068 = vmatpush.msra.mxu0 %v1039
        %1069 = vmatpush.msra.mxu0 %v1038
        %1070 = vmatmul.f32.gmra.mxu0 %v1052
        %v1071 = vpop.f32.mrf.mxu0
        %v1072 = vadd.f32 0.0, %v1071
        %1073 = vdwg.mxu0
        %v1074 = vld [vmem:[%s1] sm:$0xff]
        %v1075 = vld [vmem:[%s357] sm:$0xff]
        %v1076 = vld [vmem:[%s357 + $0x8] sm:$0xff]
        %v1077 = vld [vmem:[%s357 + $0x10] sm:$0xff]
        %v1078 = vld [vmem:[%s357 + $0x18] sm:$0xff]
        %1079 = vmatpush.msra.mxu0 0.0
        %1080 = vmatpush.msra.mxu0 0.0
        %1081 = vmatpush.msra.mxu0 0.0
        %1082 = vmatpush.msra.mxu0 0.0
        %1083 = vmatpush.msra.mxu0 0.0
        %1084 = vmatpush.msra.mxu0 0.0
        %1085 = vmatpush.msra.mxu0 0.0
        %1086 = vmatpush.msra.mxu0 0.0
        %1087 = vmatpush.msra.mxu0 0.0
        %1088 = vmatpush.msra.mxu0 0.0
        %1089 = vmatpush.msra.mxu0 0.0
        %1090 = vmatpush.msra.mxu0 0.0
        %1091 = vmatpush.msra.mxu0 %v1078
        %1092 = vmatpush.msra.mxu0 %v1077
        %1093 = vmatpush.msra.mxu0 %v1076
        %1094 = vmatpush.msra.mxu0 %v1075
        %1095 = vmatmul.f32.gmra.mxu0 %v1052
        %v1096 = vpop.f32.mrf.mxu0
        %v1097 = vadd.f32 0.0, %v1096
        %1098 = vdwg.mxu0
        %v1099 = vld [vmem:[%s382] sm:$0xff]
        %v1101 = vsel %vm384, %v1099, 0
        %v1104 = vsel %vm388, %v1097, 0
        %1106 = vmatpush.msra.mxu0 0.0
        %1107 = vmatpush.msra.mxu0 0.0
        %1108 = vmatpush.msra.mxu0 0.0
        %1109 = vmatpush.msra.mxu0 0.0
        %1110 = vmatpush.msra.mxu0 0.0
        %1111 = vmatpush.msra.mxu0 0.0
        %1112 = vmatpush.msra.mxu0 0.0
        %1113 = vmatpush.msra.mxu0 0.0
        %1114 = vmatpush.msra.mxu0 0.0
        %1115 = vmatpush.msra.mxu0 0.0
        %1116 = vmatpush.msra.mxu0 0.0
        %1117 = vmatpush.msra.mxu0 0.0
        %1118 = vmatpush.msra.mxu0 0.0
        %1119 = vmatpush.msra.mxu0 0.0
        %1120 = vmatpush.msra.mxu0 0.0
        %1121 = vmatpush.msra.mxu0 %v1104
        %1122 = vmatmul.f32.gmra.mxu0 %v1101
        %v1123 = vpop.f32.mrf.mxu0
        %v1124 = vadd.f32 0.0, %v1123
        %1125 = vdwg.mxu0
        %v1127 = vsel %vm384, %v1074, 0
        %v1130 = vsel %vm388, %v1072, 0
        %1132 = vmatpush.msra.mxu0 0.0
        %1133 = vmatpush.msra.mxu0 0.0
        %1134 = vmatpush.msra.mxu0 0.0
        %1135 = vmatpush.msra.mxu0 0.0
        %1136 = vmatpush.msra.mxu0 0.0
        %1137 = vmatpush.msra.mxu0 0.0
        %1138 = vmatpush.msra.mxu0 0.0
        %1139 = vmatpush.msra.mxu0 0.0
        %1140 = vmatpush.msra.mxu0 0.0
        %1141 = vmatpush.msra.mxu0 0.0
        %1142 = vmatpush.msra.mxu0 0.0
        %1143 = vmatpush.msra.mxu0 0.0
        %1144 = vmatpush.msra.mxu0 0.0
        %1145 = vmatpush.msra.mxu0 0.0
        %1146 = vmatpush.msra.mxu0 0.0
        %1147 = vmatpush.msra.mxu0 %v1130
        %1148 = vmatmul.f32.gmra.mxu0 %v1127
        %v1149 = vpop.f32.mrf.mxu0
        %v1150 = vadd.f32 %v1124, %v1149
        %1151 = vdwg.mxu0
        %v1152 = vld [vmem:[%s273 + $0x7] sm:$0x1]
        %v1153 = vld [vmem:[%s273 + $0x17] sm:$0x1]
        %v1154 = vld [vmem:[%s273 + $0x27] sm:$0x1]
        %v1155 = vld [vmem:[%s273 + $0x37] sm:$0x1]
        %v1160 = vrot.slane %v1153, 7
        %v1161 = vsel %vm325, %v1160, %v1152
        %v1162 = vrot.slane %v1154, 6
        %v1163 = vsel %vm328, %v1162, %v1161
        %v1164 = vrot.slane %v1155, 5
        %v1165 = vsel %vm331, %v1164, %v1163
        %v1166 = vsel %vm333, %v1165, 0
        %1168 = vmatpush.msra.mxu0 0.0
        %1169 = vmatpush.msra.mxu0 0.0
        %1170 = vmatpush.msra.mxu0 0.0
        %1171 = vmatpush.msra.mxu0 0.0
        %1172 = vmatpush.msra.mxu0 0.0
        %1173 = vmatpush.msra.mxu0 0.0
        %1174 = vmatpush.msra.mxu0 0.0
        %1175 = vmatpush.msra.mxu0 0.0
        %1176 = vmatpush.msra.mxu0 0.0
        %1177 = vmatpush.msra.mxu0 0.0
        %1178 = vmatpush.msra.mxu0 0.0
        %1179 = vmatpush.msra.mxu0 0.0
        %1180 = vmatpush.msra.mxu0 %v1041
        %1181 = vmatpush.msra.mxu0 %v1040
        %1182 = vmatpush.msra.mxu0 %v1039
        %1183 = vmatpush.msra.mxu0 %v1038
        %1184 = vmatmul.f32.gmra.mxu0 %v1166
        %v1185 = vpop.f32.mrf.mxu0
        %v1186 = vadd.f32 0.0, %v1185
        %1187 = vdwg.mxu0
        %v1188 = vld [vmem:[%s474] sm:$0xff]
        %v1190 = vsel %vm384, %v1188, 0
        %v1193 = vsel %vm388, %v1186, 0
        %1195 = vmatpush.msra.mxu0 0.0
        %1196 = vmatpush.msra.mxu0 0.0
        %1197 = vmatpush.msra.mxu0 0.0
        %1198 = vmatpush.msra.mxu0 0.0
        %1199 = vmatpush.msra.mxu0 0.0
        %1200 = vmatpush.msra.mxu0 0.0
        %1201 = vmatpush.msra.mxu0 0.0
        %1202 = vmatpush.msra.mxu0 0.0
        %1203 = vmatpush.msra.mxu0 0.0
        %1204 = vmatpush.msra.mxu0 0.0
        %1205 = vmatpush.msra.mxu0 0.0
        %1206 = vmatpush.msra.mxu0 0.0
        %1207 = vmatpush.msra.mxu0 0.0
        %1208 = vmatpush.msra.mxu0 0.0
        %1209 = vmatpush.msra.mxu0 0.0
        %1210 = vmatpush.msra.mxu0 %v1193
        %1211 = vmatmul.f32.gmra.mxu0 %v1190
        %v1212 = vpop.f32.mrf.mxu0
        %v1213 = vadd.f32 0.0, %v1212
        %1214 = vdwg.mxu0
        %v1215 = vadd.f32 %v1150, %v1213
        %1216 = vmatpush.msra.mxu0 0.0
        %1217 = vmatpush.msra.mxu0 0.0
        %1218 = vmatpush.msra.mxu0 0.0
        %1219 = vmatpush.msra.mxu0 0.0
        %1220 = vmatpush.msra.mxu0 0.0
        %1221 = vmatpush.msra.mxu0 0.0
        %1222 = vmatpush.msra.mxu0 0.0
        %1223 = vmatpush.msra.mxu0 0.0
        %1224 = vmatpush.msra.mxu0 0.0
        %1225 = vmatpush.msra.mxu0 0.0
        %1226 = vmatpush.msra.mxu0 0.0
        %1227 = vmatpush.msra.mxu0 0.0
        %1228 = vmatpush.msra.mxu0 %v1078
        %1229 = vmatpush.msra.mxu0 %v1077
        %1230 = vmatpush.msra.mxu0 %v1076
        %1231 = vmatpush.msra.mxu0 %v1075
        %1232 = vmatmul.f32.gmra.mxu0 %v1166
        %v1233 = vpop.f32.mrf.mxu0
        %v1234 = vadd.f32 0.0, %v1233
        %1235 = vdwg.mxu0
        %v1236 = vld [vmem:[%s523] sm:$0xff]
        %v1238 = vsel %vm384, %v1236, 0
        %v1241 = vsel %vm388, %v1234, 0
        %1243 = vmatpush.msra.mxu0 0.0
        %1244 = vmatpush.msra.mxu0 0.0
        %1245 = vmatpush.msra.mxu0 0.0
        %1246 = vmatpush.msra.mxu0 0.0
        %1247 = vmatpush.msra.mxu0 0.0
        %1248 = vmatpush.msra.mxu0 0.0
        %1249 = vmatpush.msra.mxu0 0.0
        %1250 = vmatpush.msra.mxu0 0.0
        %1251 = vmatpush.msra.mxu0 0.0
        %1252 = vmatpush.msra.mxu0 0.0
        %1253 = vmatpush.msra.mxu0 0.0
        %1254 = vmatpush.msra.mxu0 0.0
        %1255 = vmatpush.msra.mxu0 0.0
        %1256 = vmatpush.msra.mxu0 0.0
        %1257 = vmatpush.msra.mxu0 0.0
        %1258 = vmatpush.msra.mxu0 %v1241
        %1259 = vmatmul.f32.gmra.mxu0 %v1238
        %v1260 = vpop.f32.mrf.mxu0
        %v1261 = vadd.f32 0.0, %v1260
        %1262 = vdwg.mxu0
        %v1263 = vadd.f32 %v1215, %v1261
        %v1264 = vld [vmem:[#allocation2] sm:$0xff]
        %v1265 = vadd.f32 %v1264, %v1263
        %1266 = vst.msk [vmem:[#allocation2] sm:$0xff] %vm554, %v1265
        %v1267 = vld [vmem:[#allocation3] sm:$0xff]
        %v1268 = vmul.f32 %v1263, %v1263
        %v1269 = vadd.f32 %v1267, %v1268
        %1270 = vst.msk [vmem:[#allocation3] sm:$0xff] %vm554, %v1269
        %v1271 = vld [vmem:[%s273 + $0x8] sm:$0x1]
        %v1272 = vld [vmem:[%s273 + $0x18] sm:$0x1]
        %v1273 = vld [vmem:[%s273 + $0x28] sm:$0x1]
        %v1274 = vld [vmem:[%s273 + $0x38] sm:$0x1]
        %v1275 = vld [vmem:[%s2] sm:$0xff]
        %v1276 = vld [vmem:[%s2 + $0x8] sm:$0xff]
        %v1277 = vld [vmem:[%s2 + $0x10] sm:$0xff]
        %v1278 = vld [vmem:[%s2 + $0x18] sm:$0xff]
        %v1283 = vrot.slane %v1272, 7
        %v1284 = vsel %vm325, %v1283, %v1271
        %v1285 = vrot.slane %v1273, 6
        %v1286 = vsel %vm328, %v1285, %v1284
        %v1287 = vrot.slane %v1274, 5
        %v1288 = vsel %vm331, %v1287, %v1286
        %v1289 = vsel %vm333, %v1288, 0
        %1291 = vmatpush.msra.mxu0 0.0
        %1292 = vmatpush.msra.mxu0 0.0
        %1293 = vmatpush.msra.mxu0 0.0
        %1294 = vmatpush.msra.mxu0 0.0
        %1295 = vmatpush.msra.mxu0 0.0
        %1296 = vmatpush.msra.mxu0 0.0
        %1297 = vmatpush.msra.mxu0 0.0
        %1298 = vmatpush.msra.mxu0 0.0
        %1299 = vmatpush.msra.mxu0 0.0
        %1300 = vmatpush.msra.mxu0 0.0
        %1301 = vmatpush.msra.mxu0 0.0
        %1302 = vmatpush.msra.mxu0 0.0
        %1303 = vmatpush.msra.mxu0 %v1278
        %1304 = vmatpush.msra.mxu0 %v1277
        %1305 = vmatpush.msra.mxu0 %v1276
        %1306 = vmatpush.msra.mxu0 %v1275
        %1307 = vmatmul.f32.gmra.mxu0 %v1289
        %v1308 = vpop.f32.mrf.mxu0
        %v1309 = vadd.f32 0.0, %v1308
        %1310 = vdwg.mxu0
        %v1311 = vld [vmem:[%s1] sm:$0xff]
        %v1312 = vld [vmem:[%s357] sm:$0xff]
        %v1313 = vld [vmem:[%s357 + $0x8] sm:$0xff]
        %v1314 = vld [vmem:[%s357 + $0x10] sm:$0xff]
        %v1315 = vld [vmem:[%s357 + $0x18] sm:$0xff]
        %1316 = vmatpush.msra.mxu0 0.0
        %1317 = vmatpush.msra.mxu0 0.0
        %1318 = vmatpush.msra.mxu0 0.0
        %1319 = vmatpush.msra.mxu0 0.0
        %1320 = vmatpush.msra.mxu0 0.0
        %1321 = vmatpush.msra.mxu0 0.0
        %1322 = vmatpush.msra.mxu0 0.0
        %1323 = vmatpush.msra.mxu0 0.0
        %1324 = vmatpush.msra.mxu0 0.0
        %1325 = vmatpush.msra.mxu0 0.0
        %1326 = vmatpush.msra.mxu0 0.0
        %1327 = vmatpush.msra.mxu0 0.0
        %1328 = vmatpush.msra.mxu0 %v1315
        %1329 = vmatpush.msra.mxu0 %v1314
        %1330 = vmatpush.msra.mxu0 %v1313
        %1331 = vmatpush.msra.mxu0 %v1312
        %1332 = vmatmul.f32.gmra.mxu0 %v1289
        %v1333 = vpop.f32.mrf.mxu0
        %v1334 = vadd.f32 0.0, %v1333
        %1335 = vdwg.mxu0
        %v1336 = vld [vmem:[%s382] sm:$0xff]
        %v1338 = vsel %vm384, %v1336, 0
        %v1341 = vsel %vm388, %v1334, 0
        %1343 = vmatpush.msra.mxu0 0.0
        %1344 = vmatpush.msra.mxu0 0.0
        %1345 = vmatpush.msra.mxu0 0.0
        %1346 = vmatpush.msra.mxu0 0.0
        %1347 = vmatpush.msra.mxu0 0.0
        %1348 = vmatpush.msra.mxu0 0.0
        %1349 = vmatpush.msra.mxu0 0.0
        %1350 = vmatpush.msra.mxu0 0.0
        %1351 = vmatpush.msra.mxu0 0.0
        %1352 = vmatpush.msra.mxu0 0.0
        %1353 = vmatpush.msra.mxu0 0.0
        %1354 = vmatpush.msra.mxu0 0.0
        %1355 = vmatpush.msra.mxu0 0.0
        %1356 = vmatpush.msra.mxu0 0.0
        %1357 = vmatpush.msra.mxu0 0.0
        %1358 = vmatpush.msra.mxu0 %v1341
        %1359 = vmatmul.f32.gmra.mxu0 %v1338
        %v1360 = vpop.f32.mrf.mxu0
        %v1361 = vadd.f32 0.0, %v1360
        %1362 = vdwg.mxu0
        %v1364 = vsel %vm384, %v1311, 0
        %v1367 = vsel %vm388, %v1309, 0
        %1369 = vmatpush.msra.mxu0 0.0
        %1370 = vmatpush.msra.mxu0 0.0
        %1371 = vmatpush.msra.mxu0 0.0
        %1372 = vmatpush.msra.mxu0 0.0
        %1373 = vmatpush.msra.mxu0 0.0
        %1374 = vmatpush.msra.mxu0 0.0
        %1375 = vmatpush.msra.mxu0 0.0
        %1376 = vmatpush.msra.mxu0 0.0
        %1377 = vmatpush.msra.mxu0 0.0
        %1378 = vmatpush.msra.mxu0 0.0
        %1379 = vmatpush.msra.mxu0 0.0
        %1380 = vmatpush.msra.mxu0 0.0
        %1381 = vmatpush.msra.mxu0 0.0
        %1382 = vmatpush.msra.mxu0 0.0
        %1383 = vmatpush.msra.mxu0 0.0
        %1384 = vmatpush.msra.mxu0 %v1367
        %1385 = vmatmul.f32.gmra.mxu0 %v1364
        %v1386 = vpop.f32.mrf.mxu0
        %v1387 = vadd.f32 %v1361, %v1386
        %1388 = vdwg.mxu0
        %v1389 = vld [vmem:[%s273 + $0x9] sm:$0x1]
        %v1390 = vld [vmem:[%s273 + $0x19] sm:$0x1]
        %v1391 = vld [vmem:[%s273 + $0x29] sm:$0x1]
        %v1392 = vld [vmem:[%s273 + $0x39] sm:$0x1]
        %v1397 = vrot.slane %v1390, 7
        %v1398 = vsel %vm325, %v1397, %v1389
        %v1399 = vrot.slane %v1391, 6
        %v1400 = vsel %vm328, %v1399, %v1398
        %v1401 = vrot.slane %v1392, 5
        %v1402 = vsel %vm331, %v1401, %v1400
        %v1403 = vsel %vm333, %v1402, 0
        %1405 = vmatpush.msra.mxu0 0.0
        %1406 = vmatpush.msra.mxu0 0.0
        %1407 = vmatpush.msra.mxu0 0.0
        %1408 = vmatpush.msra.mxu0 0.0
        %1409 = vmatpush.msra.mxu0 0.0
        %1410 = vmatpush.msra.mxu0 0.0
        %1411 = vmatpush.msra.mxu0 0.0
        %1412 = vmatpush.msra.mxu0 0.0
        %1413 = vmatpush.msra.mxu0 0.0
        %1414 = vmatpush.msra.mxu0 0.0
        %1415 = vmatpush.msra.mxu0 0.0
        %1416 = vmatpush.msra.mxu0 0.0
        %1417 = vmatpush.msra.mxu0 %v1278
        %1418 = vmatpush.msra.mxu0 %v1277
        %1419 = vmatpush.msra.mxu0 %v1276
        %1420 = vmatpush.msra.mxu0 %v1275
        %1421 = vmatmul.f32.gmra.mxu0 %v1403
        %v1422 = vpop.f32.mrf.mxu0
        %v1423 = vadd.f32 0.0, %v1422
        %1424 = vdwg.mxu0
        %v1425 = vld [vmem:[%s474] sm:$0xff]
        %v1427 = vsel %vm384, %v1425, 0
        %v1430 = vsel %vm388, %v1423, 0
        %1432 = vmatpush.msra.mxu0 0.0
        %1433 = vmatpush.msra.mxu0 0.0
        %1434 = vmatpush.msra.mxu0 0.0
        %1435 = vmatpush.msra.mxu0 0.0
        %1436 = vmatpush.msra.mxu0 0.0
        %1437 = vmatpush.msra.mxu0 0.0
        %1438 = vmatpush.msra.mxu0 0.0
        %1439 = vmatpush.msra.mxu0 0.0
        %1440 = vmatpush.msra.mxu0 0.0
        %1441 = vmatpush.msra.mxu0 0.0
        %1442 = vmatpush.msra.mxu0 0.0
        %1443 = vmatpush.msra.mxu0 0.0
        %1444 = vmatpush.msra.mxu0 0.0
        %1445 = vmatpush.msra.mxu0 0.0
        %1446 = vmatpush.msra.mxu0 0.0
        %1447 = vmatpush.msra.mxu0 %v1430
        %1448 = vmatmul.f32.gmra.mxu0 %v1427
        %v1449 = vpop.f32.mrf.mxu0
        %v1450 = vadd.f32 0.0, %v1449
        %1451 = vdwg.mxu0
        %v1452 = vadd.f32 %v1387, %v1450
        %1453 = vmatpush.msra.mxu0 0.0
        %1454 = vmatpush.msra.mxu0 0.0
        %1455 = vmatpush.msra.mxu0 0.0
        %1456 = vmatpush.msra.mxu0 0.0
        %1457 = vmatpush.msra.mxu0 0.0
        %1458 = vmatpush.msra.mxu0 0.0
        %1459 = vmatpush.msra.mxu0 0.0
        %1460 = vmatpush.msra.mxu0 0.0
        %1461 = vmatpush.msra.mxu0 0.0
        %1462 = vmatpush.msra.mxu0 0.0
        %1463 = vmatpush.msra.mxu0 0.0
        %1464 = vmatpush.msra.mxu0 0.0
        %1465 = vmatpush.msra.mxu0 %v1315
        %1466 = vmatpush.msra.mxu0 %v1314
        %1467 = vmatpush.msra.mxu0 %v1313
        %1468 = vmatpush.msra.mxu0 %v1312
        %1469 = vmatmul.f32.gmra.mxu0 %v1403
        %v1470 = vpop.f32.mrf.mxu0
        %v1471 = vadd.f32 0.0, %v1470
        %1472 = vdwg.mxu0
        %v1473 = vld [vmem:[%s523] sm:$0xff]
        %v1475 = vsel %vm384, %v1473, 0
        %v1478 = vsel %vm388, %v1471, 0
        %1480 = vmatpush.msra.mxu0 0.0
        %1481 = vmatpush.msra.mxu0 0.0
        %1482 = vmatpush.msra.mxu0 0.0
        %1483 = vmatpush.msra.mxu0 0.0
        %1484 = vmatpush.msra.mxu0 0.0
        %1485 = vmatpush.msra.mxu0 0.0
        %1486 = vmatpush.msra.mxu0 0.0
        %1487 = vmatpush.msra.mxu0 0.0
        %1488 = vmatpush.msra.mxu0 0.0
        %1489 = vmatpush.msra.mxu0 0.0
        %1490 = vmatpush.msra.mxu0 0.0
        %1491 = vmatpush.msra.mxu0 0.0
        %1492 = vmatpush.msra.mxu0 0.0
        %1493 = vmatpush.msra.mxu0 0.0
        %1494 = vmatpush.msra.mxu0 0.0
        %1495 = vmatpush.msra.mxu0 %v1478
        %1496 = vmatmul.f32.gmra.mxu0 %v1475
        %v1497 = vpop.f32.mrf.mxu0
        %v1498 = vadd.f32 0.0, %v1497
        %1499 = vdwg.mxu0
        %v1500 = vadd.f32 %v1452, %v1498
        %v1501 = vld [vmem:[#allocation2] sm:$0xff]
        %v1502 = vadd.f32 %v1501, %v1500
        %1503 = vst.msk [vmem:[#allocation2] sm:$0xff] %vm554, %v1502
        %v1504 = vld [vmem:[#allocation3] sm:$0xff]
        %v1505 = vmul.f32 %v1500, %v1500
        %v1506 = vadd.f32 %v1504, %v1505
        %1507 = vst.msk [vmem:[#allocation3] sm:$0xff] %vm554, %v1506
        %v1508 = vld [vmem:[%s273 + $0xa] sm:$0x1]
        %v1509 = vld [vmem:[%s273 + $0x1a] sm:$0x1]
        %v1510 = vld [vmem:[%s273 + $0x2a] sm:$0x1]
        %v1511 = vld [vmem:[%s273 + $0x3a] sm:$0x1]
        %v1512 = vld [vmem:[%s2] sm:$0xff]
        %v1513 = vld [vmem:[%s2 + $0x8] sm:$0xff]
        %v1514 = vld [vmem:[%s2 + $0x10] sm:$0xff]
        %v1515 = vld [vmem:[%s2 + $0x18] sm:$0xff]
        %v1520 = vrot.slane %v1509, 7
        %v1521 = vsel %vm325, %v1520, %v1508
        %v1522 = vrot.slane %v1510, 6
        %v1523 = vsel %vm328, %v1522, %v1521
        %v1524 = vrot.slane %v1511, 5
        %v1525 = vsel %vm331, %v1524, %v1523
        %v1526 = vsel %vm333, %v1525, 0
        %1528 = vmatpush.msra.mxu0 0.0
        %1529 = vmatpush.msra.mxu0 0.0
        %1530 = vmatpush.msra.mxu0 0.0
        %1531 = vmatpush.msra.mxu0 0.0
        %1532 = vmatpush.msra.mxu0 0.0
        %1533 = vmatpush.msra.mxu0 0.0
        %1534 = vmatpush.msra.mxu0 0.0
        %1535 = vmatpush.msra.mxu0 0.0
        %1536 = vmatpush.msra.mxu0 0.0
        %1537 = vmatpush.msra.mxu0 0.0
        %1538 = vmatpush.msra.mxu0 0.0
        %1539 = vmatpush.msra.mxu0 0.0
        %1540 = vmatpush.msra.mxu0 %v1515
        %1541 = vmatpush.msra.mxu0 %v1514
        %1542 = vmatpush.msra.mxu0 %v1513
        %1543 = vmatpush.msra.mxu0 %v1512
        %1544 = vmatmul.f32.gmra.mxu0 %v1526
        %v1545 = vpop.f32.mrf.mxu0
        %v1546 = vadd.f32 0.0, %v1545
        %1547 = vdwg.mxu0
        %v1548 = vld [vmem:[%s1] sm:$0xff]
        %v1549 = vld [vmem:[%s357] sm:$0xff]
        %v1550 = vld [vmem:[%s357 + $0x8] sm:$0xff]
        %v1551 = vld [vmem:[%s357 + $0x10] sm:$0xff]
        %v1552 = vld [vmem:[%s357 + $0x18] sm:$0xff]
        %1553 = vmatpush.msra.mxu0 0.0
        %1554 = vmatpush.msra.mxu0 0.0
        %1555 = vmatpush.msra.mxu0 0.0
        %1556 = vmatpush.msra.mxu0 0.0
        %1557 = vmatpush.msra.mxu0 0.0
        %1558 = vmatpush.msra.mxu0 0.0
        %1559 = vmatpush.msra.mxu0 0.0
        %1560 = vmatpush.msra.mxu0 0.0
        %1561 = vmatpush.msra.mxu0 0.0
        %1562 = vmatpush.msra.mxu0 0.0
        %1563 = vmatpush.msra.mxu0 0.0
        %1564 = vmatpush.msra.mxu0 0.0
        %1565 = vmatpush.msra.mxu0 %v1552
        %1566 = vmatpush.msra.mxu0 %v1551
        %1567 = vmatpush.msra.mxu0 %v1550
        %1568 = vmatpush.msra.mxu0 %v1549
        %1569 = vmatmul.f32.gmra.mxu0 %v1526
        %v1570 = vpop.f32.mrf.mxu0
        %v1571 = vadd.f32 0.0, %v1570
        %1572 = vdwg.mxu0
        %v1573 = vld [vmem:[%s382] sm:$0xff]
        %v1575 = vsel %vm384, %v1573, 0
        %v1578 = vsel %vm388, %v1571, 0
        %1580 = vmatpush.msra.mxu0 0.0
        %1581 = vmatpush.msra.mxu0 0.0
        %1582 = vmatpush.msra.mxu0 0.0
        %1583 = vmatpush.msra.mxu0 0.0
        %1584 = vmatpush.msra.mxu0 0.0
        %1585 = vmatpush.msra.mxu0 0.0
        %1586 = vmatpush.msra.mxu0 0.0
        %1587 = vmatpush.msra.mxu0 0.0
        %1588 = vmatpush.msra.mxu0 0.0
        %1589 = vmatpush.msra.mxu0 0.0
        %1590 = vmatpush.msra.mxu0 0.0
        %1591 = vmatpush.msra.mxu0 0.0
        %1592 = vmatpush.msra.mxu0 0.0
        %1593 = vmatpush.msra.mxu0 0.0
        %1594 = vmatpush.msra.mxu0 0.0
        %1595 = vmatpush.msra.mxu0 %v1578
        %1596 = vmatmul.f32.gmra.mxu0 %v1575
        %v1597 = vpop.f32.mrf.mxu0
        %v1598 = vadd.f32 0.0, %v1597
        %1599 = vdwg.mxu0
        %v1601 = vsel %vm384, %v1548, 0
        %v1604 = vsel %vm388, %v1546, 0
        %1606 = vmatpush.msra.mxu0 0.0
        %1607 = vmatpush.msra.mxu0 0.0
        %1608 = vmatpush.msra.mxu0 0.0
        %1609 = vmatpush.msra.mxu0 0.0
        %1610 = vmatpush.msra.mxu0 0.0
        %1611 = vmatpush.msra.mxu0 0.0
        %1612 = vmatpush.msra.mxu0 0.0
        %1613 = vmatpush.msra.mxu0 0.0
        %1614 = vmatpush.msra.mxu0 0.0
        %1615 = vmatpush.msra.mxu0 0.0
        %1616 = vmatpush.msra.mxu0 0.0
        %1617 = vmatpush.msra.mxu0 0.0
        %1618 = vmatpush.msra.mxu0 0.0
        %1619 = vmatpush.msra.mxu0 0.0
        %1620 = vmatpush.msra.mxu0 0.0
        %1621 = vmatpush.msra.mxu0 %v1604
        %1622 = vmatmul.f32.gmra.mxu0 %v1601
        %v1623 = vpop.f32.mrf.mxu0
        %v1624 = vadd.f32 %v1598, %v1623
        %1625 = vdwg.mxu0
        %v1626 = vld [vmem:[%s273 + $0xb] sm:$0x1]
        %v1627 = vld [vmem:[%s273 + $0x1b] sm:$0x1]
        %v1628 = vld [vmem:[%s273 + $0x2b] sm:$0x1]
        %v1629 = vld [vmem:[%s273 + $0x3b] sm:$0x1]
        %v1634 = vrot.slane %v1627, 7
        %v1635 = vsel %vm325, %v1634, %v1626
        %v1636 = vrot.slane %v1628, 6
        %v1637 = vsel %vm328, %v1636, %v1635
        %v1638 = vrot.slane %v1629, 5
        %v1639 = vsel %vm331, %v1638, %v1637
        %v1640 = vsel %vm333, %v1639, 0
        %1642 = vmatpush.msra.mxu0 0.0
        %1643 = vmatpush.msra.mxu0 0.0
        %1644 = vmatpush.msra.mxu0 0.0
        %1645 = vmatpush.msra.mxu0 0.0
        %1646 = vmatpush.msra.mxu0 0.0
        %1647 = vmatpush.msra.mxu0 0.0
        %1648 = vmatpush.msra.mxu0 0.0
        %1649 = vmatpush.msra.mxu0 0.0
        %1650 = vmatpush.msra.mxu0 0.0
        %1651 = vmatpush.msra.mxu0 0.0
        %1652 = vmatpush.msra.mxu0 0.0
        %1653 = vmatpush.msra.mxu0 0.0
        %1654 = vmatpush.msra.mxu0 %v1515
        %1655 = vmatpush.msra.mxu0 %v1514
        %1656 = vmatpush.msra.mxu0 %v1513
        %1657 = vmatpush.msra.mxu0 %v1512
        %1658 = vmatmul.f32.gmra.mxu0 %v1640
        %v1659 = vpop.f32.mrf.mxu0
        %v1660 = vadd.f32 0.0, %v1659
        %1661 = vdwg.mxu0
        %v1662 = vld [vmem:[%s474] sm:$0xff]
        %v1664 = vsel %vm384, %v1662, 0
        %v1667 = vsel %vm388, %v1660, 0
        %1669 = vmatpush.msra.mxu0 0.0
        %1670 = vmatpush.msra.mxu0 0.0
        %1671 = vmatpush.msra.mxu0 0.0
        %1672 = vmatpush.msra.mxu0 0.0
        %1673 = vmatpush.msra.mxu0 0.0
        %1674 = vmatpush.msra.mxu0 0.0
        %1675 = vmatpush.msra.mxu0 0.0
        %1676 = vmatpush.msra.mxu0 0.0
        %1677 = vmatpush.msra.mxu0 0.0
        %1678 = vmatpush.msra.mxu0 0.0
        %1679 = vmatpush.msra.mxu0 0.0
        %1680 = vmatpush.msra.mxu0 0.0
        %1681 = vmatpush.msra.mxu0 0.0
        %1682 = vmatpush.msra.mxu0 0.0
        %1683 = vmatpush.msra.mxu0 0.0
        %1684 = vmatpush.msra.mxu0 %v1667
        %1685 = vmatmul.f32.gmra.mxu0 %v1664
        %v1686 = vpop.f32.mrf.mxu0
        %v1687 = vadd.f32 0.0, %v1686
        %1688 = vdwg.mxu0
        %v1689 = vadd.f32 %v1624, %v1687
        %1690 = vmatpush.msra.mxu0 0.0
        %1691 = vmatpush.msra.mxu0 0.0
        %1692 = vmatpush.msra.mxu0 0.0
        %1693 = vmatpush.msra.mxu0 0.0
        %1694 = vmatpush.msra.mxu0 0.0
        %1695 = vmatpush.msra.mxu0 0.0
        %1696 = vmatpush.msra.mxu0 0.0
        %1697 = vmatpush.msra.mxu0 0.0
        %1698 = vmatpush.msra.mxu0 0.0
        %1699 = vmatpush.msra.mxu0 0.0
        %1700 = vmatpush.msra.mxu0 0.0
        %1701 = vmatpush.msra.mxu0 0.0
        %1702 = vmatpush.msra.mxu0 %v1552
        %1703 = vmatpush.msra.mxu0 %v1551
        %1704 = vmatpush.msra.mxu0 %v1550
        %1705 = vmatpush.msra.mxu0 %v1549
        %1706 = vmatmul.f32.gmra.mxu0 %v1640
        %v1707 = vpop.f32.mrf.mxu0
        %v1708 = vadd.f32 0.0, %v1707
        %1709 = vdwg.mxu0
        %v1710 = vld [vmem:[%s523] sm:$0xff]
        %v1712 = vsel %vm384, %v1710, 0
        %v1715 = vsel %vm388, %v1708, 0
        %1717 = vmatpush.msra.mxu0 0.0
        %1718 = vmatpush.msra.mxu0 0.0
        %1719 = vmatpush.msra.mxu0 0.0
        %1720 = vmatpush.msra.mxu0 0.0
        %1721 = vmatpush.msra.mxu0 0.0
        %1722 = vmatpush.msra.mxu0 0.0
        %1723 = vmatpush.msra.mxu0 0.0
        %1724 = vmatpush.msra.mxu0 0.0
        %1725 = vmatpush.msra.mxu0 0.0
        %1726 = vmatpush.msra.mxu0 0.0
        %1727 = vmatpush.msra.mxu0 0.0
        %1728 = vmatpush.msra.mxu0 0.0
        %1729 = vmatpush.msra.mxu0 0.0
        %1730 = vmatpush.msra.mxu0 0.0
        %1731 = vmatpush.msra.mxu0 0.0
        %1732 = vmatpush.msra.mxu0 %v1715
        %1733 = vmatmul.f32.gmra.mxu0 %v1712
        %v1734 = vpop.f32.mrf.mxu0
        %v1735 = vadd.f32 0.0, %v1734
        %1736 = vdwg.mxu0
        %v1737 = vadd.f32 %v1689, %v1735
        %v1738 = vld [vmem:[#allocation2] sm:$0xff]
        %v1739 = vadd.f32 %v1738, %v1737
        %1740 = vst.msk [vmem:[#allocation2] sm:$0xff] %vm554, %v1739
        %v1741 = vld [vmem:[#allocation3] sm:$0xff]
        %v1742 = vmul.f32 %v1737, %v1737
        %v1743 = vadd.f32 %v1741, %v1742
        %1744 = vst.msk [vmem:[#allocation3] sm:$0xff] %vm554, %v1743
        %v1745 = vld [vmem:[%s273 + $0xc] sm:$0x1]
        %v1746 = vld [vmem:[%s273 + $0x1c] sm:$0x1]
        %v1747 = vld [vmem:[%s273 + $0x2c] sm:$0x1]
        %v1748 = vld [vmem:[%s273 + $0x3c] sm:$0x1]
        %v1749 = vld [vmem:[%s2] sm:$0xff]
        %v1750 = vld [vmem:[%s2 + $0x8] sm:$0xff]
        %v1751 = vld [vmem:[%s2 + $0x10] sm:$0xff]
        %v1752 = vld [vmem:[%s2 + $0x18] sm:$0xff]
        %v1757 = vrot.slane %v1746, 7
        %v1758 = vsel %vm325, %v1757, %v1745
        %v1759 = vrot.slane %v1747, 6
        %v1760 = vsel %vm328, %v1759, %v1758
        %v1761 = vrot.slane %v1748, 5
        %v1762 = vsel %vm331, %v1761, %v1760
        %v1763 = vsel %vm333, %v1762, 0
        %1765 = vmatpush.msra.mxu0 0.0
        %1766 = vmatpush.msra.mxu0 0.0
        %1767 = vmatpush.msra.mxu0 0.0
        %1768 = vmatpush.msra.mxu0 0.0
        %1769 = vmatpush.msra.mxu0 0.0
        %1770 = vmatpush.msra.mxu0 0.0
        %1771 = vmatpush.msra.mxu0 0.0
        %1772 = vmatpush.msra.mxu0 0.0
        %1773 = vmatpush.msra.mxu0 0.0
        %1774 = vmatpush.msra.mxu0 0.0
        %1775 = vmatpush.msra.mxu0 0.0
        %1776 = vmatpush.msra.mxu0 0.0
        %1777 = vmatpush.msra.mxu0 %v1752
        %1778 = vmatpush.msra.mxu0 %v1751
        %1779 = vmatpush.msra.mxu0 %v1750
        %1780 = vmatpush.msra.mxu0 %v1749
        %1781 = vmatmul.f32.gmra.mxu0 %v1763
        %v1782 = vpop.f32.mrf.mxu0
        %v1783 = vadd.f32 0.0, %v1782
        %1784 = vdwg.mxu0
        %v1785 = vld [vmem:[%s1] sm:$0xff]
        %v1786 = vld [vmem:[%s357] sm:$0xff]
        %v1787 = vld [vmem:[%s357 + $0x8] sm:$0xff]
        %v1788 = vld [vmem:[%s357 + $0x10] sm:$0xff]
        %v1789 = vld [vmem:[%s357 + $0x18] sm:$0xff]
        %1790 = vmatpush.msra.mxu0 0.0
        %1791 = vmatpush.msra.mxu0 0.0
        %1792 = vmatpush.msra.mxu0 0.0
        %1793 = vmatpush.msra.mxu0 0.0
        %1794 = vmatpush.msra.mxu0 0.0
        %1795 = vmatpush.msra.mxu0 0.0
        %1796 = vmatpush.msra.mxu0 0.0
        %1797 = vmatpush.msra.mxu0 0.0
        %1798 = vmatpush.msra.mxu0 0.0
        %1799 = vmatpush.msra.mxu0 0.0
        %1800 = vmatpush.msra.mxu0 0.0
        %1801 = vmatpush.msra.mxu0 0.0
        %1802 = vmatpush.msra.mxu0 %v1789
        %1803 = vmatpush.msra.mxu0 %v1788
        %1804 = vmatpush.msra.mxu0 %v1787
        %1805 = vmatpush.msra.mxu0 %v1786
        %1806 = vmatmul.f32.gmra.mxu0 %v1763
        %v1807 = vpop.f32.mrf.mxu0
        %v1808 = vadd.f32 0.0, %v1807
        %1809 = vdwg.mxu0
        %v1810 = vld [vmem:[%s382] sm:$0xff]
        %v1812 = vsel %vm384, %v1810, 0
        %v1815 = vsel %vm388, %v1808, 0
        %1817 = vmatpush.msra.mxu0 0.0
        %1818 = vmatpush.msra.mxu0 0.0
        %1819 = vmatpush.msra.mxu0 0.0
        %1820 = vmatpush.msra.mxu0 0.0
        %1821 = vmatpush.msra.mxu0 0.0
        %1822 = vmatpush.msra.mxu0 0.0
        %1823 = vmatpush.msra.mxu0 0.0
        %1824 = vmatpush.msra.mxu0 0.0
        %1825 = vmatpush.msra.mxu0 0.0
        %1826 = vmatpush.msra.mxu0 0.0
        %1827 = vmatpush.msra.mxu0 0.0
        %1828 = vmatpush.msra.mxu0 0.0
        %1829 = vmatpush.msra.mxu0 0.0
        %1830 = vmatpush.msra.mxu0 0.0
        %1831 = vmatpush.msra.mxu0 0.0
        %1832 = vmatpush.msra.mxu0 %v1815
        %1833 = vmatmul.f32.gmra.mxu0 %v1812
        %v1834 = vpop.f32.mrf.mxu0
        %v1835 = vadd.f32 0.0, %v1834
        %1836 = vdwg.mxu0
        %v1838 = vsel %vm384, %v1785, 0
        %v1841 = vsel %vm388, %v1783, 0
        %1843 = vmatpush.msra.mxu0 0.0
        %1844 = vmatpush.msra.mxu0 0.0
        %1845 = vmatpush.msra.mxu0 0.0
        %1846 = vmatpush.msra.mxu0 0.0
        %1847 = vmatpush.msra.mxu0 0.0
        %1848 = vmatpush.msra.mxu0 0.0
        %1849 = vmatpush.msra.mxu0 0.0
        %1850 = vmatpush.msra.mxu0 0.0
        %1851 = vmatpush.msra.mxu0 0.0
        %1852 = vmatpush.msra.mxu0 0.0
        %1853 = vmatpush.msra.mxu0 0.0
        %1854 = vmatpush.msra.mxu0 0.0
        %1855 = vmatpush.msra.mxu0 0.0
        %1856 = vmatpush.msra.mxu0 0.0
        %1857 = vmatpush.msra.mxu0 0.0
        %1858 = vmatpush.msra.mxu0 %v1841
        %1859 = vmatmul.f32.gmra.mxu0 %v1838
        %v1860 = vpop.f32.mrf.mxu0
        %v1861 = vadd.f32 %v1835, %v1860
        %1862 = vdwg.mxu0
        %v1863 = vld [vmem:[%s273 + $0xd] sm:$0x1]
        %v1864 = vld [vmem:[%s273 + $0x1d] sm:$0x1]
        %v1865 = vld [vmem:[%s273 + $0x2d] sm:$0x1]
        %v1866 = vld [vmem:[%s273 + $0x3d] sm:$0x1]
        %v1871 = vrot.slane %v1864, 7
        %v1872 = vsel %vm325, %v1871, %v1863
        %v1873 = vrot.slane %v1865, 6
        %v1874 = vsel %vm328, %v1873, %v1872
        %v1875 = vrot.slane %v1866, 5
        %v1876 = vsel %vm331, %v1875, %v1874
        %v1877 = vsel %vm333, %v1876, 0
        %1879 = vmatpush.msra.mxu0 0.0
        %1880 = vmatpush.msra.mxu0 0.0
        %1881 = vmatpush.msra.mxu0 0.0
        %1882 = vmatpush.msra.mxu0 0.0
        %1883 = vmatpush.msra.mxu0 0.0
        %1884 = vmatpush.msra.mxu0 0.0
        %1885 = vmatpush.msra.mxu0 0.0
        %1886 = vmatpush.msra.mxu0 0.0
        %1887 = vmatpush.msra.mxu0 0.0
        %1888 = vmatpush.msra.mxu0 0.0
        %1889 = vmatpush.msra.mxu0 0.0
        %1890 = vmatpush.msra.mxu0 0.0
        %1891 = vmatpush.msra.mxu0 %v1752
        %1892 = vmatpush.msra.mxu0 %v1751
        %1893 = vmatpush.msra.mxu0 %v1750
        %1894 = vmatpush.msra.mxu0 %v1749
        %1895 = vmatmul.f32.gmra.mxu0 %v1877
        %v1896 = vpop.f32.mrf.mxu0
        %v1897 = vadd.f32 0.0, %v1896
        %1898 = vdwg.mxu0
        %v1899 = vld [vmem:[%s474] sm:$0xff]
        %v1901 = vsel %vm384, %v1899, 0
        %v1904 = vsel %vm388, %v1897, 0
        %1906 = vmatpush.msra.mxu0 0.0
        %1907 = vmatpush.msra.mxu0 0.0
        %1908 = vmatpush.msra.mxu0 0.0
        %1909 = vmatpush.msra.mxu0 0.0
        %1910 = vmatpush.msra.mxu0 0.0
        %1911 = vmatpush.msra.mxu0 0.0
        %1912 = vmatpush.msra.mxu0 0.0
        %1913 = vmatpush.msra.mxu0 0.0
        %1914 = vmatpush.msra.mxu0 0.0
        %1915 = vmatpush.msra.mxu0 0.0
        %1916 = vmatpush.msra.mxu0 0.0
        %1917 = vmatpush.msra.mxu0 0.0
        %1918 = vmatpush.msra.mxu0 0.0
        %1919 = vmatpush.msra.mxu0 0.0
        %1920 = vmatpush.msra.mxu0 0.0
        %1921 = vmatpush.msra.mxu0 %v1904
        %1922 = vmatmul.f32.gmra.mxu0 %v1901
        %v1923 = vpop.f32.mrf.mxu0
        %v1924 = vadd.f32 0.0, %v1923
        %1925 = vdwg.mxu0
        %v1926 = vadd.f32 %v1861, %v1924
        %1927 = vmatpush.msra.mxu0 0.0
        %1928 = vmatpush.msra.mxu0 0.0
        %1929 = vmatpush.msra.mxu0 0.0
        %1930 = vmatpush.msra.mxu0 0.0
        %1931 = vmatpush.msra.mxu0 0.0
        %1932 = vmatpush.msra.mxu0 0.0
        %1933 = vmatpush.msra.mxu0 0.0
        %1934 = vmatpush.msra.mxu0 0.0
        %1935 = vmatpush.msra.mxu0 0.0
        %1936 = vmatpush.msra.mxu0 0.0
        %1937 = vmatpush.msra.mxu0 0.0
        %1938 = vmatpush.msra.mxu0 0.0
        %1939 = vmatpush.msra.mxu0 %v1789
        %1940 = vmatpush.msra.mxu0 %v1788
        %1941 = vmatpush.msra.mxu0 %v1787
        %1942 = vmatpush.msra.mxu0 %v1786
        %1943 = vmatmul.f32.gmra.mxu0 %v1877
        %v1944 = vpop.f32.mrf.mxu0
        %v1945 = vadd.f32 0.0, %v1944
        %1946 = vdwg.mxu0
        %v1947 = vld [vmem:[%s523] sm:$0xff]
        %v1949 = vsel %vm384, %v1947, 0
        %v1952 = vsel %vm388, %v1945, 0
        %1954 = vmatpush.msra.mxu0 0.0
        %1955 = vmatpush.msra.mxu0 0.0
        %1956 = vmatpush.msra.mxu0 0.0
        %1957 = vmatpush.msra.mxu0 0.0
        %1958 = vmatpush.msra.mxu0 0.0
        %1959 = vmatpush.msra.mxu0 0.0
        %1960 = vmatpush.msra.mxu0 0.0
        %1961 = vmatpush.msra.mxu0 0.0
        %1962 = vmatpush.msra.mxu0 0.0
        %1963 = vmatpush.msra.mxu0 0.0
        %1964 = vmatpush.msra.mxu0 0.0
        %1965 = vmatpush.msra.mxu0 0.0
        %1966 = vmatpush.msra.mxu0 0.0
        %1967 = vmatpush.msra.mxu0 0.0
        %1968 = vmatpush.msra.mxu0 0.0
        %1969 = vmatpush.msra.mxu0 %v1952
        %1970 = vmatmul.f32.gmra.mxu0 %v1949
        %v1971 = vpop.f32.mrf.mxu0
        %v1972 = vadd.f32 0.0, %v1971
        %1973 = vdwg.mxu0
        %v1974 = vadd.f32 %v1926, %v1972
        %v1975 = vld [vmem:[#allocation2] sm:$0xff]
        %v1976 = vadd.f32 %v1975, %v1974
        %1977 = vst.msk [vmem:[#allocation2] sm:$0xff] %vm554, %v1976
        %v1978 = vld [vmem:[#allocation3] sm:$0xff]
        %v1979 = vmul.f32 %v1974, %v1974
        %v1980 = vadd.f32 %v1978, %v1979
        %1981 = vst.msk [vmem:[#allocation3] sm:$0xff] %vm554, %v1980
        %v1982 = vld [vmem:[%s273 + $0xe] sm:$0x1]
        %v1983 = vld [vmem:[%s273 + $0x1e] sm:$0x1]
        %v1984 = vld [vmem:[%s273 + $0x2e] sm:$0x1]
        %v1985 = vld [vmem:[%s273 + $0x3e] sm:$0x1]
        %v1986 = vld [vmem:[%s2] sm:$0xff]
        %v1987 = vld [vmem:[%s2 + $0x8] sm:$0xff]
        %v1988 = vld [vmem:[%s2 + $0x10] sm:$0xff]
        %v1989 = vld [vmem:[%s2 + $0x18] sm:$0xff]
        %v1994 = vrot.slane %v1983, 7
        %v1995 = vsel %vm325, %v1994, %v1982
        %v1996 = vrot.slane %v1984, 6
        %v1997 = vsel %vm328, %v1996, %v1995
        %v1998 = vrot.slane %v1985, 5
        %v1999 = vsel %vm331, %v1998, %v1997
        %v2000 = vsel %vm333, %v1999, 0
        %2002 = vmatpush.msra.mxu0 0.0
        %2003 = vmatpush.msra.mxu0 0.0
        %2004 = vmatpush.msra.mxu0 0.0
        %2005 = vmatpush.msra.mxu0 0.0
        %2006 = vmatpush.msra.mxu0 0.0
        %2007 = vmatpush.msra.mxu0 0.0
        %2008 = vmatpush.msra.mxu0 0.0
        %2009 = vmatpush.msra.mxu0 0.0
        %2010 = vmatpush.msra.mxu0 0.0
        %2011 = vmatpush.msra.mxu0 0.0
        %2012 = vmatpush.msra.mxu0 0.0
        %2013 = vmatpush.msra.mxu0 0.0
        %2014 = vmatpush.msra.mxu0 %v1989
        %2015 = vmatpush.msra.mxu0 %v1988
        %2016 = vmatpush.msra.mxu0 %v1987
        %2017 = vmatpush.msra.mxu0 %v1986
        %2018 = vmatmul.f32.gmra.mxu0 %v2000
        %v2019 = vpop.f32.mrf.mxu0
        %v2020 = vadd.f32 0.0, %v2019
        %2021 = vdwg.mxu0
        %v2022 = vld [vmem:[%s1] sm:$0xff]
        %v2023 = vld [vmem:[%s357] sm:$0xff]
        %v2024 = vld [vmem:[%s357 + $0x8] sm:$0xff]
        %v2025 = vld [vmem:[%s357 + $0x10] sm:$0xff]
        %v2026 = vld [vmem:[%s357 + $0x18] sm:$0xff]
        %2027 = vmatpush.msra.mxu0 0.0
        %2028 = vmatpush.msra.mxu0 0.0
        %2029 = vmatpush.msra.mxu0 0.0
        %2030 = vmatpush.msra.mxu0 0.0
        %2031 = vmatpush.msra.mxu0 0.0
        %2032 = vmatpush.msra.mxu0 0.0
        %2033 = vmatpush.msra.mxu0 0.0
        %2034 = vmatpush.msra.mxu0 0.0
        %2035 = vmatpush.msra.mxu0 0.0
        %2036 = vmatpush.msra.mxu0 0.0
        %2037 = vmatpush.msra.mxu0 0.0
        %2038 = vmatpush.msra.mxu0 0.0
        %2039 = vmatpush.msra.mxu0 %v2026
        %2040 = vmatpush.msra.mxu0 %v2025
        %2041 = vmatpush.msra.mxu0 %v2024
        %2042 = vmatpush.msra.mxu0 %v2023
        %2043 = vmatmul.f32.gmra.mxu0 %v2000
        %v2044 = vpop.f32.mrf.mxu0
        %v2045 = vadd.f32 0.0, %v2044
        %2046 = vdwg.mxu0
        %v2047 = vld [vmem:[%s382] sm:$0xff]
        %v2049 = vsel %vm384, %v2047, 0
        %v2052 = vsel %vm388, %v2045, 0
        %2054 = vmatpush.msra.mxu0 0.0
        %2055 = vmatpush.msra.mxu0 0.0
        %2056 = vmatpush.msra.mxu0 0.0
        %2057 = vmatpush.msra.mxu0 0.0
        %2058 = vmatpush.msra.mxu0 0.0
        %2059 = vmatpush.msra.mxu0 0.0
        %2060 = vmatpush.msra.mxu0 0.0
        %2061 = vmatpush.msra.mxu0 0.0
        %2062 = vmatpush.msra.mxu0 0.0
        %2063 = vmatpush.msra.mxu0 0.0
        %2064 = vmatpush.msra.mxu0 0.0
        %2065 = vmatpush.msra.mxu0 0.0
        %2066 = vmatpush.msra.mxu0 0.0
        %2067 = vmatpush.msra.mxu0 0.0
        %2068 = vmatpush.msra.mxu0 0.0
        %2069 = vmatpush.msra.mxu0 %v2052
        %2070 = vmatmul.f32.gmra.mxu0 %v2049
        %v2071 = vpop.f32.mrf.mxu0
        %v2072 = vadd.f32 0.0, %v2071
        %2073 = vdwg.mxu0
        %v2075 = vsel %vm384, %v2022, 0
        %v2078 = vsel %vm388, %v2020, 0
        %2080 = vmatpush.msra.mxu0 0.0
        %2081 = vmatpush.msra.mxu0 0.0
        %2082 = vmatpush.msra.mxu0 0.0
        %2083 = vmatpush.msra.mxu0 0.0
        %2084 = vmatpush.msra.mxu0 0.0
        %2085 = vmatpush.msra.mxu0 0.0
        %2086 = vmatpush.msra.mxu0 0.0
        %2087 = vmatpush.msra.mxu0 0.0
        %2088 = vmatpush.msra.mxu0 0.0
        %2089 = vmatpush.msra.mxu0 0.0
        %2090 = vmatpush.msra.mxu0 0.0
        %2091 = vmatpush.msra.mxu0 0.0
        %2092 = vmatpush.msra.mxu0 0.0
        %2093 = vmatpush.msra.mxu0 0.0
        %2094 = vmatpush.msra.mxu0 0.0
        %2095 = vmatpush.msra.mxu0 %v2078
        %2096 = vmatmul.f32.gmra.mxu0 %v2075
        %v2097 = vpop.f32.mrf.mxu0
        %v2098 = vadd.f32 %v2072, %v2097
        %2099 = vdwg.mxu0
        %v2100 = vld [vmem:[%s273 + $0xf] sm:$0x1]
        %v2101 = vld [vmem:[%s273 + $0x1f] sm:$0x1]
        %v2102 = vld [vmem:[%s273 + $0x2f] sm:$0x1]
        %v2103 = vld [vmem:[%s273 + $0x3f] sm:$0x1]
        %v2108 = vrot.slane %v2101, 7
        %v2109 = vsel %vm325, %v2108, %v2100
        %v2110 = vrot.slane %v2102, 6
        %v2111 = vsel %vm328, %v2110, %v2109
        %v2112 = vrot.slane %v2103, 5
        %v2113 = vsel %vm331, %v2112, %v2111
        %v2114 = vsel %vm333, %v2113, 0
        %2116 = vmatpush.msra.mxu0 0.0
        %2117 = vmatpush.msra.mxu0 0.0
        %2118 = vmatpush.msra.mxu0 0.0
        %2119 = vmatpush.msra.mxu0 0.0
        %2120 = vmatpush.msra.mxu0 0.0
        %2121 = vmatpush.msra.mxu0 0.0
        %2122 = vmatpush.msra.mxu0 0.0
        %2123 = vmatpush.msra.mxu0 0.0
        %2124 = vmatpush.msra.mxu0 0.0
        %2125 = vmatpush.msra.mxu0 0.0
        %2126 = vmatpush.msra.mxu0 0.0
        %2127 = vmatpush.msra.mxu0 0.0
        %2128 = vmatpush.msra.mxu0 %v1989
        %2129 = vmatpush.msra.mxu0 %v1988
        %2130 = vmatpush.msra.mxu0 %v1987
        %2131 = vmatpush.msra.mxu0 %v1986
        %2132 = vmatmul.f32.gmra.mxu0 %v2114
        %v2133 = vpop.f32.mrf.mxu0
        %v2134 = vadd.f32 0.0, %v2133
        %2135 = vdwg.mxu0
        %v2136 = vld [vmem:[%s474] sm:$0xff]
        %v2138 = vsel %vm384, %v2136, 0
        %v2141 = vsel %vm388, %v2134, 0
        %2143 = vmatpush.msra.mxu0 0.0
        %2144 = vmatpush.msra.mxu0 0.0
        %2145 = vmatpush.msra.mxu0 0.0
        %2146 = vmatpush.msra.mxu0 0.0
        %2147 = vmatpush.msra.mxu0 0.0
        %2148 = vmatpush.msra.mxu0 0.0
        %2149 = vmatpush.msra.mxu0 0.0
        %2150 = vmatpush.msra.mxu0 0.0
        %2151 = vmatpush.msra.mxu0 0.0
        %2152 = vmatpush.msra.mxu0 0.0
        %2153 = vmatpush.msra.mxu0 0.0
        %2154 = vmatpush.msra.mxu0 0.0
        %2155 = vmatpush.msra.mxu0 0.0
        %2156 = vmatpush.msra.mxu0 0.0
        %2157 = vmatpush.msra.mxu0 0.0
        %2158 = vmatpush.msra.mxu0 %v2141
        %2159 = vmatmul.f32.gmra.mxu0 %v2138
        %v2160 = vpop.f32.mrf.mxu0
        %v2161 = vadd.f32 0.0, %v2160
        %2162 = vdwg.mxu0
        %v2163 = vadd.f32 %v2098, %v2161
        %2164 = vmatpush.msra.mxu0 0.0
        %2165 = vmatpush.msra.mxu0 0.0
        %2166 = vmatpush.msra.mxu0 0.0
        %2167 = vmatpush.msra.mxu0 0.0
        %2168 = vmatpush.msra.mxu0 0.0
        %2169 = vmatpush.msra.mxu0 0.0
        %2170 = vmatpush.msra.mxu0 0.0
        %2171 = vmatpush.msra.mxu0 0.0
        %2172 = vmatpush.msra.mxu0 0.0
        %2173 = vmatpush.msra.mxu0 0.0
        %2174 = vmatpush.msra.mxu0 0.0
        %2175 = vmatpush.msra.mxu0 0.0
        %2176 = vmatpush.msra.mxu0 %v2026
        %2177 = vmatpush.msra.mxu0 %v2025
        %2178 = vmatpush.msra.mxu0 %v2024
        %2179 = vmatpush.msra.mxu0 %v2023
        %2180 = vmatmul.f32.gmra.mxu0 %v2114
        %v2181 = vpop.f32.mrf.mxu0
        %v2182 = vadd.f32 0.0, %v2181
        %2183 = vdwg.mxu0
        %v2184 = vld [vmem:[%s523] sm:$0xff]
        %v2186 = vsel %vm384, %v2184, 0
        %v2189 = vsel %vm388, %v2182, 0
        %2191 = vmatpush.msra.mxu0 0.0
        %2192 = vmatpush.msra.mxu0 0.0
        %2193 = vmatpush.msra.mxu0 0.0
        %2194 = vmatpush.msra.mxu0 0.0
        %2195 = vmatpush.msra.mxu0 0.0
        %2196 = vmatpush.msra.mxu0 0.0
        %2197 = vmatpush.msra.mxu0 0.0
        %2198 = vmatpush.msra.mxu0 0.0
        %2199 = vmatpush.msra.mxu0 0.0
        %2200 = vmatpush.msra.mxu0 0.0
        %2201 = vmatpush.msra.mxu0 0.0
        %2202 = vmatpush.msra.mxu0 0.0
        %2203 = vmatpush.msra.mxu0 0.0
        %2204 = vmatpush.msra.mxu0 0.0
        %2205 = vmatpush.msra.mxu0 0.0
        %2206 = vmatpush.msra.mxu0 %v2189
        %2207 = vmatmul.f32.gmra.mxu0 %v2186
        %v2208 = vpop.f32.mrf.mxu0
        %v2209 = vadd.f32 0.0, %v2208
        %2210 = vdwg.mxu0
        %v2211 = vadd.f32 %v2163, %v2209
        %v2212 = vld [vmem:[#allocation2] sm:$0xff]
        %v2213 = vadd.f32 %v2212, %v2211
        %2214 = vst.msk [vmem:[#allocation2] sm:$0xff] %vm554, %v2213
        %v2215 = vld [vmem:[#allocation3] sm:$0xff]
        %v2216 = vmul.f32 %v2211, %v2211
        %v2217 = vadd.f32 %v2215, %v2216
        %2218 = vst.msk [vmem:[#allocation3] sm:$0xff] %vm554, %v2217
        // Predicated region
        $region49: #{tpu_custom_call.1} parent=39 // pred_check
          _
        $region50: #{tpu_custom_call.1} parent=39 // pred_check_branch
          %2220 = sbr.rel (%p305) target = $region52
        $region51: #{tpu_custom_call.1} parent=39 // pred_region
          %v2221 = vld [vmem:[#allocation2] sm:$0xff]
          %v2222 = vsel %vm554, %v2221, 0.0
          %2223 = vadd.xlane.f32.xlu0 %v2222
          %v2224 = vpop.xlane.xlu0 %2223
          %v2225 = vmul.f32 %v2224, 0.001953125
          %v2226 = vld [vmem:[#allocation3] sm:$0xff]
          %v2227 = vsel %vm554, %v2226, 0.0
          %2228 = vadd.xlane.f32.xlu0 %v2227
          %v2229 = vpop.xlane.xlu0 %2228
          %v2230 = vmul.f32 %v2229, 0.001953125
          %v2231 = vmul.f32 %v2225, %v2225
          %v2232 = vsub.f32 %v2230, %v2231
          %v2233 = vmax.f32 %v2232, 0.0
          %v2234 = vld [vmem:[%s3] sm:$0xff]
          %v2235 = vadd.f32 %v2233, 1e-05
          %v2236 = vrsqrt.pop %v2235
          %v2237 = vmul.f32 %v2236, %v2235
          %v2238 = vmul.f32 %v2237, %v2236
          %v2239 = vmul.f32 0.5, %v2238
          %v2240 = vsub.f32 1.5, %v2239
          %v2241 = vmul.f32 %v2236, %v2240
          %vm2242 = vweird.f32 %v2235
          %vm2243 = vweird.f32 %v2236
          %vm2244 = vmor %vm2242, %vm2243
          %v2245 = vsel %vm2244, %v2236, %v2241
          %v2246 = vmul.f32 %v2234, %v2245
          %vm2247 = vcmask 7168
          %2248 = vst.msk [vmem:[%s5] sm:$0xff] %vm2247, %v2246
          %v2249 = vld [vmem:[%s4] sm:$0xff]
          %v2250 = vmul.f32 %v2246, %v2225
          %v2251 = vsub.f32 %v2249, %v2250
          %2252 = vst.msk [vmem:[%s6] sm:$0xff] %vm2247, %v2251
        $region52: #{tpu_custom_call.1} parent=39 // pred_fallthru
          _
        // Predicated region
        $region53: #{tpu_custom_call.1} parent=39 // pred_check
          %p2253 = pneg %p158
        $region54: #{tpu_custom_call.1} parent=39 // pred_check_branch
          %2255 = sbr.rel (%p2253) target = $region56
        $region55: #{tpu_custom_call.1} parent=39 // pred_region
          _
        $region56: #{tpu_custom_call.1} parent=39 // pred_fallthru
          _
        // Predicated region
        $region57: #{tpu_custom_call.1} parent=39 // pred_check
          %p2256 = pneg %p179
        $region58: #{tpu_custom_call.1} parent=39 // pred_check_branch
          %2258 = sbr.rel (%p2256) target = $region60
        $region59: #{tpu_custom_call.1} parent=39 // pred_region
          _
        $region60: #{tpu_custom_call.1} parent=39 // pred_fallthru
          _
        // Predicated region
        $region61: #{tpu_custom_call.1} parent=39 // pred_check
          %p2259 = pneg %p158
        $region62: #{tpu_custom_call.1} parent=39 // pred_check_branch
          %2261 = sbr.rel (%p2259) target = $region64
        $region63: #{tpu_custom_call.1} parent=39 // pred_region
          _
        $region64: #{tpu_custom_call.1} parent=39 // pred_fallthru
          _
        // Predicated region
        $region65: #{tpu_custom_call.1} parent=39 // pred_check
          %p2262 = pneg %p179
        $region66: #{tpu_custom_call.1} parent=39 // pred_check_branch
          %2264 = sbr.rel (%p2262) target = $region68
        $region67: #{tpu_custom_call.1} parent=39 // pred_region
          _
        $region68: #{tpu_custom_call.1} parent=39 // pred_fallthru
          _
      $region40: #{tpu_custom_call.1} parent=5 // pred_fallthru
        _
      %p2265 = scmp.le.s32.totalorder 2, %s16
      // Predicated region
      $region69: #{tpu_custom_call.1} parent=5 // pred_check
        %p2266 = pneg %p2265
      $region70: #{tpu_custom_call.1} parent=5 // pred_check_branch
        %2268 = sbr.rel (%p2266) target = $region72
      $region71: #{tpu_custom_call.1} parent=5 // pred_region
        %s2269 = ssub.s32 %s16, 2
      $region72: #{tpu_custom_call.1} parent=5 // pred_fallthru
        _
    $region6: #{tpu_custom_call.1} parent=1 // loop_footer
      %s20 = sadd.s32 1, %s16
    $region7: #{tpu_custom_call.1} parent=1 // loop_footer_branch
      %15 = sbr.rel target = $region3
    $region8: #{tpu_custom_call.1} parent=1 // loop_exit
      _
    %2270 = vsyncpa [#allocation5], 1
    %s2271 = scalar_lea.sflag [#allocation5], 1
    %2272 = vsyncpa %s2271, 1

</llo_original>
